<compile_context>
chip_gen: v5e
topology: v5e:2x2
jax: 0.10.0
libtpu: 0.0.40
codegen_flags: <defaults>
</compile_context>

<pallas_src>
import functools

import numpy as np
import jax
import jax.numpy as jnp
from jax import lax
from jax.experimental import pallas as pl
from jax.experimental.pallas import tpu as pltpu

LANE = 256  # lane-padded width of every conv/deconv activation row (mult. of 128)


# -----------------------------------------------------------------------------
# The single fused kernel
# -----------------------------------------------------------------------------
def _vae_fused_kernel(x1_ref, eps_ref,
                      m1, b1, m2, b2, w3, b3, w4, b4, w5, b5, w6, b6, w7, b7,
                      w8, b8, n9e, n9o, b9, n10e, n10o, b10,
                      recon_ref, mu_ref, lv_ref, *, bblk, z_dim):
    """One batch block (bblk images) of the whole VAE_CNN forward.

    x1_ref : (1, bblk*14, 84) bf16  conv1 3-tap rows, ordered
             [even output rows (h-major, b-minor) | odd output rows]
    eps_ref: (1, bblk, z)           reparameterization noise
    recon  : (1, 4, bblk*7, 28)     output rows split into 4 phases r = 4k+p
    """
    f32 = jnp.float32
    bf16 = jnp.bfloat16
    m7 = bblk * 7
    zrow = jnp.zeros((bblk, LANE), f32)

    def lin(x, w_ref, b_ref):
        return jnp.dot(x.astype(bf16), w_ref[...],
                       preferred_element_type=f32) + b_ref[...]

    # ---------------- encoder ----------------
    # conv1 (1->16, stride 2): one matmul, K = 3 taps * 28, N = 14*16 (pad 256)
    h1 = jnp.maximum(lin(x1_ref[0], m1, b1), 0.0)            # (2*m7, 256)
    h1_even = h1[:m7, :]                                      # out rows 2h
    h1_odd = h1[m7:, :]                                       # out rows 2h+1
    # conv2 (16->32, stride 2) taps for out row m: P2[2m] | P2[2m+1] | P2[2m+2]
    x0a = jnp.concatenate([zrow, h1_odd[:m7 - bblk, :]], axis=0)   # shifted odd
    x2 = jnp.concatenate([x0a, h1_even, h1_odd], axis=-1)     # (m7, 768)
    h2 = jnp.maximum(lin(x2, m2, b2), 0.0)                    # (m7, 256) rows=(h,b)

    # flatten for fc3: row blocks (per h) -> lane blocks, lanes = h*256 + w*32 + c
    enc = jnp.concatenate([h2[hh * bblk:(hh + 1) * bblk, :] for hh in range(7)],
                          axis=-1)                            # (bblk, 1792)

    # ---------------- fc stack + reparameterization ----------------
    h = jnp.maximum(lin(enc, w3, b3), 0.0)
    h = jnp.maximum(lin(h, w4, b4), 0.0)
    s = lin(h, w5, b5)                                        # [mu | log_var]
    mu = s[:, :z_dim]
    log_var = s[:, z_dim:]
    z = mu + eps_ref[0] * jnp.exp(0.5 * log_var)
    h = jnp.maximum(lin(z, w6, b6), 0.0)
    h = jnp.maximum(lin(h, w7, b7), 0.0)
    dec = jnp.maximum(lin(h, w8, b8), 0.0)                    # (bblk, 1792)

    # ---------------- decoder ----------------
    # lane blocks -> row blocks: deconv input rows (m, b), lanes = w*32 + c
    d9 = jnp.concatenate([dec[:, hh * LANE:(hh + 1) * LANE] for hh in range(7)],
                         axis=0)                              # (m7, 256)
    d9p = jnp.concatenate([d9[bblk:, :], zrow], axis=0)       # rows m+1 (zero pad)
    # tcnn9 sub-pixel decomposition: even rows X[m]@N1 ; odd rows [X[m]|X[m+1]]@[N2;N0]
    ye9 = jnp.maximum(lin(d9, n9e, b9), 0.0)                  # out rows 2m
    yo9 = jnp.maximum(lin(jnp.concatenate([d9, d9p], axis=-1), n9o, b9), 0.0)
    ye9s = jnp.concatenate([ye9[bblk:, :], zrow], axis=0)     # ye9 shifted (m+1)
    # tcnn10: output rows r = 4k + p split into 4 phases, fused sigmoid
    p0 = jax.nn.sigmoid(lin(ye9, n10e, b10))                                  # r=4k
    p1 = jax.nn.sigmoid(lin(jnp.concatenate([ye9, yo9], axis=-1), n10o, b10))  # 4k+1
    p2 = jax.nn.sigmoid(lin(yo9, n10e, b10))                                  # 4k+2
    p3 = jax.nn.sigmoid(lin(jnp.concatenate([yo9, ye9s], axis=-1), n10o, b10))  # 4k+3

    recon_ref[0, 0] = p0
    recon_ref[0, 1] = p1
    recon_ref[0, 2] = p2
    recon_ref[0, 3] = p3
    mu_ref[0] = mu
    lv_ref[0] = log_var


# -----------------------------------------------------------------------------
# XLA-side input prep (raw 28x28 image only — ~5 KB/image, done once per call)
# -----------------------------------------------------------------------------
def _build_conv1_input(x, bblk):
    """(B,1,28,28) -> (nb, bblk*14, 84) bf16 3-tap rows for conv1.

    Row ordering inside a block: first the 7 even output rows (h-major,
    image-minor), then the 7 odd output rows — exactly what the fused kernel's
    conv2 stage consumes without any strided row gathers.
    """
    B = x.shape[0]
    nb = B // bblk
    img = x.reshape(B, 28, 28).astype(jnp.float32)
    P = jnp.pad(img, ((0, 0), (1, 1), (0, 0)))                 # (B, 30, 28)
    a_e = P[:, 0:25:4, :]   # padded rows 4m
    b_e = P[:, 1:26:4, :]   # 4m+1
    c_e = P[:, 2:27:4, :]   # 4m+2
    b_o = P[:, 3:28:4, :]   # 4m+3
    c_o = P[:, 4:29:4, :]   # 4m+4
    even = jnp.concatenate([a_e, b_e, c_e], axis=-1)           # (B, 7, 84)
    odd = jnp.concatenate([c_e, b_o, c_o], axis=-1)            # (B, 7, 84)
    ev = even.reshape(nb, bblk, 7, 84).transpose(0, 2, 1, 3)   # (nb, 7, bblk, 84)
    od = odd.reshape(nb, bblk, 7, 84).transpose(0, 2, 1, 3)
    x1 = jnp.concatenate([ev, od], axis=1).reshape(nb, 14 * bblk, 84)
    return x1.astype(jnp.bfloat16)


# -----------------------------------------------------------------------------
# Forward pass: ONE pallas_call, gridded over batch blocks
# -----------------------------------------------------------------------------
def vae_cnn_forward(q, x, eps, *, bblk=2):
    B = x.shape[0]
    z_dim = eps.shape[1]
    bblk = max(1, min(bblk, B))
    while B % bblk:
        bblk -= 1
    nb = B // bblk
    m7 = bblk * 7

    x1 = _build_conv1_input(x, bblk)                           # (nb, 14*bblk, 84)
    eps_b = eps.astype(jnp.float32).reshape(nb, bblk, z_dim)

    weights = [q["m1"], q["b1"], q["m2"], q["b2"], q["w3"], q["b3"],
               q["w4"], q["b4"], q["w5"], q["b5"], q["w6"], q["b6"],
               q["w7"], q["b7"], q["w8"], q["b8"],
               q["n9e"], q["n9o"], q["b9"], q["n10e"], q["n10o"], q["b10"]]

    in_specs = [
        pl.BlockSpec((1, 14 * bblk, 84), lambda i: (i, 0, 0)),
        pl.BlockSpec((1, bblk, z_dim), lambda i: (i, 0, 0)),
    ] + [pl.BlockSpec(w.shape, lambda i: (0, 0)) for w in weights]
    # NOTE: constant index_map => weight blocks are DMA'd once and stay resident.

    out_shape = (
        jax.ShapeDtypeStruct((nb, 4, m7, 28), jnp.float32),
        jax.ShapeDtypeStruct((nb, bblk, z_dim), jnp.float32),
        jax.ShapeDtypeStruct((nb, bblk, z_dim), jnp.float32),
    )
    out_specs = (
        pl.BlockSpec((1, 4, m7, 28), lambda i: (i, 0, 0, 0)),
        pl.BlockSpec((1, bblk, z_dim), lambda i: (i, 0, 0)),
        pl.BlockSpec((1, bblk, z_dim), lambda i: (i, 0, 0)),
    )

    recon4, mu_b, lv_b = pl.pallas_call(
        functools.partial(_vae_fused_kernel, bblk=bblk, z_dim=z_dim),
        out_shape=out_shape,
        grid=(nb,),
        in_specs=in_specs,
        out_specs=out_specs,
        compiler_params=pltpu.CompilerParams(dimension_semantics=("parallel",)),
    )(x1, eps_b, *weights)

    # phase de-interleave of the tiny final output (row = 4k + p)
    recon = (recon4.reshape(nb, 4, 7, bblk, 28)
             .transpose(0, 3, 2, 1, 4)
             .reshape(B, 1, 28, 28))
    mu = mu_b.reshape(B, z_dim)
    log_var = lv_b.reshape(B, z_dim)
    return recon, mu, log_var


# -----------------------------------------------------------------------------
# One-time parameter preparation (all weight lowering hoisted out of hot path)
# -----------------------------------------------------------------------------
def _lower_conv_taps(w, w_in, w_out, k_pad, n_pad, stride=2, pad=1):
    """Conv2d weight (Cout,Cin,3,3) -> (3, k_pad, n_pad) width-lowered taps."""
    w = np.asarray(w, np.float32)
    cout, cin, kh, kw = w.shape
    taps = np.zeros((kh, k_pad, n_pad), np.float32)
    for ki in range(kh):
        for kj in range(kw):
            for ow in range(w_out):
                wi = stride * ow + kj - pad
                if 0 <= wi < w_in:
                    taps[ki, wi * cin:(wi + 1) * cin,
                         ow * cout:(ow + 1) * cout] = w[:, :, ki, kj].T
    return taps


def _lower_deconv_taps(w, w_in, w_out, k_pad, n_pad, stride=2, pad=1):
    """ConvTranspose2d weight (Cin,Cout,3,3) -> (3, k_pad, n_pad) lowered taps."""
    w = np.asarray(w, np.float32)
    cin, cout, kh, kw = w.shape
    taps = np.zeros((kh, k_pad, n_pad), np.float32)
    for ki in range(kh):
        for kj in range(kw):
            for iw in range(w_in):
                ow = stride * iw - pad + kj
                if 0 <= ow < w_out:
                    taps[ki, iw * cin:(iw + 1) * cin,
                         ow * cout:(ow + 1) * cout] = w[:, :, ki, kj]
    return taps


def prepare_params(p):
    bf16 = jnp.bfloat16

    def brow(v, n=None):
        v = np.asarray(v, np.float32).reshape(-1)
        if n is not None and v.size < n:
            v = np.concatenate([v, np.zeros(n - v.size, np.float32)])
        return jnp.asarray(v[None, :], jnp.float32)

    def t(wk):
        return jnp.asarray(np.asarray(wk, np.float32).T, bf16)

    q = {}
    # conv1: 1->16, 28->14.  K = 3*28 = 84, N = 14*16 = 224 -> pad 256.
    t1 = _lower_conv_taps(p["cnn1_w"], 28, 14, 28, LANE)
    q["m1"] = jnp.asarray(np.concatenate([t1[0], t1[1], t1[2]], axis=0), bf16)
    q["b1"] = brow(np.tile(np.asarray(p["cnn1_b"], np.float32), 14), LANE)
    # conv2: 16->32, 14->7.  per-tap K = 256 (padded), N = 7*32 = 224 -> 256.
    t2 = _lower_conv_taps(p["cnn2_w"], 14, 7, LANE, LANE)
    q["m2"] = jnp.asarray(np.concatenate([t2[0], t2[1], t2[2]], axis=0), bf16)
    q["b2"] = brow(np.tile(np.asarray(p["cnn2_b"], np.float32), 7), LANE)

    # fc3 / fc8: permute between torch NCHW flatten (c*49+h*7+w) and the
    # kernel's (h-block, w*32+c) lane layout with 32 pad lanes per h-block.
    idx = np.arange(1568)
    cc = idx % 32
    ww = (idx // 32) % 7
    hh = idx // 224
    nchw = cc * 49 + hh * 7 + ww
    pos = hh * LANE + ww * 32 + cc

    fc3_w = np.asarray(p["fc3_w"], np.float32)                 # (h1, 1568)
    h1d = fc3_w.shape[0]
    w3 = np.zeros((7 * LANE, h1d), np.float32)
    w3[pos, :] = fc3_w.T[nchw, :]
    q["w3"] = jnp.asarray(w3, bf16)
    q["b3"] = brow(p["fc3_b"])

    q["w4"] = t(p["fc4_w"]); q["b4"] = brow(p["fc4_b"])
    w5 = np.concatenate([np.asarray(p["fc51_w"], np.float32).T,
                         np.asarray(p["fc52_w"], np.float32).T], axis=1)
    b5 = np.concatenate([np.asarray(p["fc51_b"], np.float32),
                         np.asarray(p["fc52_b"], np.float32)])
    q["w5"] = jnp.asarray(w5, bf16); q["b5"] = jnp.asarray(b5[None, :], jnp.float32)
    q["w6"] = t(p["fc6_w"]); q["b6"] = brow(p["fc6_b"])
    q["w7"] = t(p["fc7_w"]); q["b7"] = brow(p["fc7_b"])

    fc8_w = np.asarray(p["fc8_w"], np.float32)                 # (1568, h1)
    fc8_b = np.asarray(p["fc8_b"], np.float32)
    w8 = np.zeros((h1d, 7 * LANE), np.float32)
    b8 = np.zeros(7 * LANE, np.float32)
    w8[:, pos] = fc8_w[nchw, :].T
    b8[pos] = fc8_b[nchw]
    q["w8"] = jnp.asarray(w8, bf16)
    q["b8"] = jnp.asarray(b8[None, :], jnp.float32)

    # tcnn9: 32->16, 7->14.  even rows use tap1; odd rows use [tap2 ; tap0].
    t9 = _lower_deconv_taps(p["tcnn9_w"], 7, 14, LANE, LANE)
    q["n9e"] = jnp.asarray(t9[1], bf16)
    q["n9o"] = jnp.asarray(np.concatenate([t9[2], t9[0]], axis=0), bf16)
    q["b9"] = brow(np.tile(np.asarray(p["tcnn9_b"], np.float32), 14), LANE)
    # tcnn10: 16->1, 14->28.  N = 28 (final image width).
    t10 = _lower_deconv_taps(p["tcnn10_w"], 14, 28, LANE, 28)
    q["n10e"] = jnp.asarray(t10[1], bf16)
    q["n10o"] = jnp.asarray(np.concatenate([t10[2], t10[0]], axis=0), bf16)
    q["b10"] = brow(np.tile(np.asarray(p["tcnn10_b"], np.float32), 28), 28)
    return q


# -----------------------------------------------------------------------------
# PyTorch-layout parameter init + pure-XLA reference (verification only)
# -----------------------------------------------------------------------------
def init_torch_params(key, h_dim1, h_dim2, z_dim):
    keys = jax.random.split(key, 11)

    def uni(k, shape, bound):
        return jax.random.uniform(k, shape, jnp.float32, -bound, bound)

    def linear(k, out_f, in_f):
        kw, kb = jax.random.split(k)
        b = 1.0 / float(np.sqrt(in_f))
        return uni(kw, (out_f, in_f), b), uni(kb, (out_f,), b)

    def conv_like(k, shape, n_bias):
        kw, kb = jax.random.split(k)
        fan_in = shape[1] * shape[2] * shape[3]
        b = 1.0 / float(np.sqrt(fan_in))
        return uni(kw, shape, b), uni(kb, (n_bias,), b)

    p = {}
    p["cnn1_w"], p["cnn1_b"] = conv_like(keys[0], (16, 1, 3, 3), 16)
    p["cnn2_w"], p["cnn2_b"] = conv_like(keys[1], (32, 16, 3, 3), 32)
    p["fc3_w"], p["fc3_b"] = linear(keys[2], h_dim1, 32 * 7 * 7)
    p["fc4_w"], p["fc4_b"] = linear(keys[3], h_dim2, h_dim1)
    p["fc51_w"], p["fc51_b"] = linear(keys[4], z_dim, h_dim2)
    p["fc52_w"], p["fc52_b"] = linear(keys[5], z_dim, h_dim2)
    p["fc6_w"], p["fc6_b"] = linear(keys[6], h_dim2, z_dim)
    p["fc7_w"], p["fc7_b"] = linear(keys[7], h_dim1, h_dim2)
    p["fc8_w"], p["fc8_b"] = linear(keys[8], 32 * 7 * 7, h_dim1)
    p["tcnn9_w"], p["tcnn9_b"] = conv_like(keys[9], (32, 16, 3, 3), 16)
    p["tcnn10_w"], p["tcnn10_b"] = conv_like(keys[10], (16, 1, 3, 3), 1)
    return p


def vae_cnn_reference(p, x, eps):
    dn = ("NCHW", "OIHW", "NCHW")

    def conv(x, w, b, stride, pad):
        y = lax.conv_general_dilated(x, w, (stride, stride),
                                     ((pad, pad), (pad, pad)),
                                     dimension_numbers=dn)
        return y + b.reshape(1, -1, 1, 1)

    def conv_t(x, w, b, stride, pad, out_pad):
        w2 = jnp.flip(w, (2, 3)).transpose(1, 0, 2, 3)
        lo = w.shape[2] - 1 - pad
        hi = lo + out_pad
        y = lax.conv_general_dilated(x, w2, (1, 1), ((lo, hi), (lo, hi)),
                                     lhs_dilation=(stride, stride),
                                     dimension_numbers=dn)
        return y + b.reshape(1, -1, 1, 1)

    B = x.shape[0]
    h = jax.nn.relu(conv(x, p["cnn1_w"], p["cnn1_b"], 2, 1))
    h = jax.nn.relu(conv(h, p["cnn2_w"], p["cnn2_b"], 2, 1))
    h = h.reshape(B, 32 * 7 * 7)
    h = jax.nn.relu(h @ p["fc3_w"].T + p["fc3_b"])
    h = jax.nn.relu(h @ p["fc4_w"].T + p["fc4_b"])
    mu = h @ p["fc51_w"].T + p["fc51_b"]
    log_var = h @ p["fc52_w"].T + p["fc52_b"]
    z = mu + eps * jnp.exp(0.5 * log_var)
    h = jax.nn.relu(z @ p["fc6_w"].T + p["fc6_b"])
    h = jax.nn.relu(h @ p["fc7_w"].T + p["fc7_b"])
    h = jax.nn.relu(h @ p["fc8_w"].T + p["fc8_b"]).reshape(B, 32, 7, 7)
    h = jax.nn.relu(conv_t(h, p["tcnn9_w"], p["tcnn9_b"], 2, 1, 1))
    recon = jax.nn.sigmoid(conv_t(h, p["tcnn10_w"], p["tcnn10_b"], 2, 1, 1))
    return recon, mu, log_var


if __name__ == "__main__":
    # Conv tower implies 28x28 single-channel inputs (28 -> 14 -> 7 -> 14 -> 28).
    B, H_DIM1, H_DIM2, Z_DIM = 4, 64, 32, 8
    BBLK = 2   # 2 batch blocks -> exercises both batching and the parallel grid
    root = jax.random.PRNGKey(0)
    k_params, k_x, k_eps = jax.random.split(root, 3)

    torch_params = init_torch_params(k_params, H_DIM1, H_DIM2, Z_DIM)
    params = prepare_params(torch_params)          # one-time weight lowering

    x = jax.random.normal(k_x, (B, 1, 28, 28), jnp.float32)
    eps = jax.random.normal(k_eps, (B, Z_DIM), jnp.float32)  # eps = randn_like(std)

    fwd = jax.jit(functools.partial(vae_cnn_forward, bblk=BBLK))
    recon, mu, log_var = fwd(params, x, eps)
    jax.block_until_ready((recon, mu, log_var))

    # sanity checks
    assert recon.shape == (B, 1, 28, 28)
    assert mu.shape == (B, Z_DIM) and log_var.shape == (B, Z_DIM)
    assert bool(jnp.all(jnp.isfinite(recon)))
    assert bool(jnp.all((recon >= 0.0) & (recon <= 1.0)))

    # numerical check against a pure-XLA f32 reference of the same module
    r_ref, mu_ref, lv_ref = vae_cnn_reference(torch_params, x, eps)
    assert np.allclose(np.asarray(recon), np.asarray(r_ref), atol=5e-2)
    assert np.allclose(np.asarray(mu), np.asarray(mu_ref), atol=5e-2)
    assert np.allclose(np.asarray(log_var), np.asarray(lv_ref), atol=5e-2)

    print("KERNEL_OK")
</pallas_src>

<mosaic_0001>
module attributes {stable_mosaic.version = 11 : i64} {
  func.func @_vae_fused_kernel(%arg0: i32, %arg1: memref<1x28x84xbf16, #tpu.memory_space<vmem>>, %arg2: memref<1x2x8xf32, #tpu.memory_space<vmem>>, %arg3: memref<84x256xbf16, #tpu.memory_space<vmem>>, %arg4: memref<1x256xf32, #tpu.memory_space<vmem>>, %arg5: memref<768x256xbf16, #tpu.memory_space<vmem>>, %arg6: memref<1x256xf32, #tpu.memory_space<vmem>>, %arg7: memref<1792x64xbf16, #tpu.memory_space<vmem>>, %arg8: memref<1x64xf32, #tpu.memory_space<vmem>>, %arg9: memref<64x32xbf16, #tpu.memory_space<vmem>>, %arg10: memref<1x32xf32, #tpu.memory_space<vmem>>, %arg11: memref<32x16xbf16, #tpu.memory_space<vmem>>, %arg12: memref<1x16xf32, #tpu.memory_space<vmem>>, %arg13: memref<8x32xbf16, #tpu.memory_space<vmem>>, %arg14: memref<1x32xf32, #tpu.memory_space<vmem>>, %arg15: memref<32x64xbf16, #tpu.memory_space<vmem>>, %arg16: memref<1x64xf32, #tpu.memory_space<vmem>>, %arg17: memref<64x1792xbf16, #tpu.memory_space<vmem>>, %arg18: memref<1x1792xf32, #tpu.memory_space<vmem>>, %arg19: memref<256x256xbf16, #tpu.memory_space<vmem>>, %arg20: memref<512x256xbf16, #tpu.memory_space<vmem>>, %arg21: memref<1x256xf32, #tpu.memory_space<vmem>>, %arg22: memref<256x28xbf16, #tpu.memory_space<vmem>>, %arg23: memref<512x28xbf16, #tpu.memory_space<vmem>>, %arg24: memref<1x28xf32, #tpu.memory_space<vmem>>, %arg25: memref<1x4x14x28xf32, #tpu.memory_space<vmem>>, %arg26: memref<1x2x8xf32, #tpu.memory_space<vmem>>, %arg27: memref<1x2x8xf32, #tpu.memory_space<vmem>>) attributes {dimension_semantics = [#tpu.dimension_semantics<parallel>], iteration_bounds = array<i64: 2>, scalar_prefetch = 0 : i64, scratch_operands = 0 : i64, tpu.core_type = #tpu.core_type<tc>, window_params = [{transform_indices = @transform_0, window_bounds = array<i64: 1, 28, 84>}, {transform_indices = @transform_1, window_bounds = array<i64: 1, 2, 8>}, {pipeline_mode = #tpu.pipeline_mode<synchronous>, transform_indices = @transform_2, window_bounds = array<i64: 84, 256>}, {pipeline_mode = #tpu.pipeline_mode<synchronous>, transform_indices = @transform_3, window_bounds = array<i64: 1, 256>}, {pipeline_mode = #tpu.pipeline_mode<synchronous>, transform_indices = @transform_4, window_bounds = array<i64: 768, 256>}, {pipeline_mode = #tpu.pipeline_mode<synchronous>, transform_indices = @transform_5, window_bounds = array<i64: 1, 256>}, {pipeline_mode = #tpu.pipeline_mode<synchronous>, transform_indices = @transform_6, window_bounds = array<i64: 1792, 64>}, {pipeline_mode = #tpu.pipeline_mode<synchronous>, transform_indices = @transform_7, window_bounds = array<i64: 1, 64>}, {pipeline_mode = #tpu.pipeline_mode<synchronous>, transform_indices = @transform_8, window_bounds = array<i64: 64, 32>}, {pipeline_mode = #tpu.pipeline_mode<synchronous>, transform_indices = @transform_9, window_bounds = array<i64: 1, 32>}, {pipeline_mode = #tpu.pipeline_mode<synchronous>, transform_indices = @transform_10, window_bounds = array<i64: 32, 16>}, {pipeline_mode = #tpu.pipeline_mode<synchronous>, transform_indices = @transform_11, window_bounds = array<i64: 1, 16>}, {pipeline_mode = #tpu.pipeline_mode<synchronous>, transform_indices = @transform_12, window_bounds = array<i64: 8, 32>}, {pipeline_mode = #tpu.pipeline_mode<synchronous>, transform_indices = @transform_13, window_bounds = array<i64: 1, 32>}, {pipeline_mode = #tpu.pipeline_mode<synchronous>, transform_indices = @transform_14, window_bounds = array<i64: 32, 64>}, {pipeline_mode = #tpu.pipeline_mode<synchronous>, transform_indices = @transform_15, window_bounds = array<i64: 1, 64>}, {pipeline_mode = #tpu.pipeline_mode<synchronous>, transform_indices = @transform_16, window_bounds = array<i64: 64, 1792>}, {pipeline_mode = #tpu.pipeline_mode<synchronous>, transform_indices = @transform_17, window_bounds = array<i64: 1, 1792>}, {pipeline_mode = #tpu.pipeline_mode<synchronous>, transform_indices = @transform_18, window_bounds = array<i64: 256, 256>}, {pipeline_mode = #tpu.pipeline_mode<synchronous>, transform_indices = @transform_19, window_bounds = array<i64: 512, 256>}, {pipeline_mode = #tpu.pipeline_mode<synchronous>, transform_indices = @transform_20, window_bounds = array<i64: 1, 256>}, {pipeline_mode = #tpu.pipeline_mode<synchronous>, transform_indices = @transform_21, window_bounds = array<i64: 256, 28>}, {pipeline_mode = #tpu.pipeline_mode<synchronous>, transform_indices = @transform_22, window_bounds = array<i64: 512, 28>}, {pipeline_mode = #tpu.pipeline_mode<synchronous>, transform_indices = @transform_23, window_bounds = array<i64: 1, 28>}, {transform_indices = @transform_24, window_bounds = array<i64: 1, 4, 14, 28>}, {transform_indices = @transform_25, window_bounds = array<i64: 1, 2, 8>}, {transform_indices = @transform_26, window_bounds = array<i64: 1, 2, 8>}]} {
    %cst = arith.constant 0.000000e+00 : f32
    %0 = vector.broadcast %cst : f32 to vector<2x256xf32>
    %c0 = arith.constant 0 : index
    %c0_0 = arith.constant 0 : index
    %c0_1 = arith.constant 0 : index
    %1 = vector.load %arg1[%c0, %c0_0, %c0_1] : memref<1x28x84xbf16, #tpu.memory_space<vmem>>, vector<1x28x84xbf16>
    %2 = vector.shape_cast %1 : vector<1x28x84xbf16> to vector<28x84xbf16>
    %c0_2 = arith.constant 0 : index
    %c0_3 = arith.constant 0 : index
    %3 = vector.load %arg3[%c0_2, %c0_3] : memref<84x256xbf16, #tpu.memory_space<vmem>>, vector<84x256xbf16>
    %cst_4 = arith.constant dense<0.000000e+00> : vector<28x256xf32>
    %4 = tpu.matmul %2, %3, %cst_4 {dimension_numbers = #tpu.dot_dimension_numbers<[1], [0], [0], [1], [0, 0, 1, 1], [], []>} : vector<28x84xbf16>, vector<84x256xbf16>, vector<28x256xf32> -> vector<28x256xf32>
    %c0_5 = arith.constant 0 : index
    %c0_6 = arith.constant 0 : index
    %5 = vector.load %arg4[%c0_5, %c0_6] : memref<1x256xf32, #tpu.memory_space<vmem>>, vector<1x256xf32>
    %6 = vector.broadcast %5 : vector<1x256xf32> to vector<28x256xf32>
    %7 = arith.addf %4, %6 : vector<28x256xf32>
    %cst_7 = arith.constant 0.000000e+00 : f32
    %8 = vector.broadcast %cst_7 : f32 to vector<28x256xf32>
    %9 = arith.maximumf %7, %8 : vector<28x256xf32>
    %10 = vector.extract_strided_slice %9 {offsets = [0, 0], sizes = [14, 256], strides = [1, 1]} : vector<28x256xf32> to vector<14x256xf32>
    %11 = vector.extract_strided_slice %9 {offsets = [14, 0], sizes = [14, 256], strides = [1, 1]} : vector<28x256xf32> to vector<14x256xf32>
    %12 = vector.extract_strided_slice %11 {offsets = [0, 0], sizes = [12, 256], strides = [1, 1]} : vector<14x256xf32> to vector<12x256xf32>
    %13 = tpu.concatenate %0, %12 in 0 : vector<2x256xf32>, vector<12x256xf32> -> vector<14x256xf32>
    %14 = tpu.concatenate %13, %10, %11 in 1 : vector<14x256xf32>, vector<14x256xf32>, vector<14x256xf32> -> vector<14x768xf32>
    %15 = arith.truncf %14 : vector<14x768xf32> to vector<14x768xbf16>
    %c0_8 = arith.constant 0 : index
    %c0_9 = arith.constant 0 : index
    %16 = vector.load %arg5[%c0_8, %c0_9] : memref<768x256xbf16, #tpu.memory_space<vmem>>, vector<768x256xbf16>
    %cst_10 = arith.constant dense<0.000000e+00> : vector<14x256xf32>
    %17 = tpu.matmul %15, %16, %cst_10 {dimension_numbers = #tpu.dot_dimension_numbers<[1], [0], [0], [1], [0, 0, 1, 1], [], []>} : vector<14x768xbf16>, vector<768x256xbf16>, vector<14x256xf32> -> vector<14x256xf32>
    %c0_11 = arith.constant 0 : index
    %c0_12 = arith.constant 0 : index
    %18 = vector.load %arg6[%c0_11, %c0_12] : memref<1x256xf32, #tpu.memory_space<vmem>>, vector<1x256xf32>
    %19 = vector.broadcast %18 : vector<1x256xf32> to vector<14x256xf32>
    %20 = arith.addf %17, %19 : vector<14x256xf32>
    %cst_13 = arith.constant 0.000000e+00 : f32
    %21 = vector.broadcast %cst_13 : f32 to vector<14x256xf32>
    %22 = arith.maximumf %20, %21 : vector<14x256xf32>
    %23 = vector.extract_strided_slice %22 {offsets = [0, 0], sizes = [2, 256], strides = [1, 1]} : vector<14x256xf32> to vector<2x256xf32>
    %24 = vector.extract_strided_slice %22 {offsets = [2, 0], sizes = [2, 256], strides = [1, 1]} : vector<14x256xf32> to vector<2x256xf32>
    %25 = vector.extract_strided_slice %22 {offsets = [4, 0], sizes = [2, 256], strides = [1, 1]} : vector<14x256xf32> to vector<2x256xf32>
    %26 = vector.extract_strided_slice %22 {offsets = [6, 0], sizes = [2, 256], strides = [1, 1]} : vector<14x256xf32> to vector<2x256xf32>
    %27 = vector.extract_strided_slice %22 {offsets = [8, 0], sizes = [2, 256], strides = [1, 1]} : vector<14x256xf32> to vector<2x256xf32>
    %28 = vector.extract_strided_slice %22 {offsets = [10, 0], sizes = [2, 256], strides = [1, 1]} : vector<14x256xf32> to vector<2x256xf32>
    %29 = vector.extract_strided_slice %22 {offsets = [12, 0], sizes = [2, 256], strides = [1, 1]} : vector<14x256xf32> to vector<2x256xf32>
    %30 = tpu.concatenate %23, %24, %25, %26, %27, %28, %29 in 1 : vector<2x256xf32>, vector<2x256xf32>, vector<2x256xf32>, vector<2x256xf32>, vector<2x256xf32>, vector<2x256xf32>, vector<2x256xf32> -> vector<2x1792xf32>
    %31 = arith.truncf %30 : vector<2x1792xf32> to vector<2x1792xbf16>
    %c0_14 = arith.constant 0 : index
    %c0_15 = arith.constant 0 : index
    %32 = vector.load %arg7[%c0_14, %c0_15] : memref<1792x64xbf16, #tpu.memory_space<vmem>>, vector<1792x64xbf16>
    %cst_16 = arith.constant dense<0.000000e+00> : vector<2x64xf32>
    %33 = tpu.matmul %31, %32, %cst_16 {dimension_numbers = #tpu.dot_dimension_numbers<[1], [0], [0], [1], [0, 0, 1, 1], [], []>} : vector<2x1792xbf16>, vector<1792x64xbf16>, vector<2x64xf32> -> vector<2x64xf32>
    %c0_17 = arith.constant 0 : index
    %c0_18 = arith.constant 0 : index
    %34 = vector.load %arg8[%c0_17, %c0_18] : memref<1x64xf32, #tpu.memory_space<vmem>>, vector<1x64xf32>
    %35 = vector.broadcast %34 : vector<1x64xf32> to vector<2x64xf32>
    %36 = arith.addf %33, %35 : vector<2x64xf32>
    %cst_19 = arith.constant 0.000000e+00 : f32
    %37 = vector.broadcast %cst_19 : f32 to vector<2x64xf32>
    %38 = arith.maximumf %36, %37 : vector<2x64xf32>
    %39 = arith.truncf %38 : vector<2x64xf32> to vector<2x64xbf16>
    %c0_20 = arith.constant 0 : index
    %c0_21 = arith.constant 0 : index
    %40 = vector.load %arg9[%c0_20, %c0_21] : memref<64x32xbf16, #tpu.memory_space<vmem>>, vector<64x32xbf16>
    %cst_22 = arith.constant dense<0.000000e+00> : vector<2x32xf32>
    %41 = tpu.matmul %39, %40, %cst_22 {dimension_numbers = #tpu.dot_dimension_numbers<[1], [0], [0], [1], [0, 0, 1, 1], [], []>} : vector<2x64xbf16>, vector<64x32xbf16>, vector<2x32xf32> -> vector<2x32xf32>
    %c0_23 = arith.constant 0 : index
    %c0_24 = arith.constant 0 : index
    %42 = vector.load %arg10[%c0_23, %c0_24] : memref<1x32xf32, #tpu.memory_space<vmem>>, vector<1x32xf32>
    %43 = vector.broadcast %42 : vector<1x32xf32> to vector<2x32xf32>
    %44 = arith.addf %41, %43 : vector<2x32xf32>
    %cst_25 = arith.constant 0.000000e+00 : f32
    %45 = vector.broadcast %cst_25 : f32 to vector<2x32xf32>
    %46 = arith.maximumf %44, %45 : vector<2x32xf32>
    %47 = arith.truncf %46 : vector<2x32xf32> to vector<2x32xbf16>
    %c0_26 = arith.constant 0 : index
    %c0_27 = arith.constant 0 : index
    %48 = vector.load %arg11[%c0_26, %c0_27] : memref<32x16xbf16, #tpu.memory_space<vmem>>, vector<32x16xbf16>
    %cst_28 = arith.constant dense<0.000000e+00> : vector<2x16xf32>
    %49 = tpu.matmul %47, %48, %cst_28 {dimension_numbers = #tpu.dot_dimension_numbers<[1], [0], [0], [1], [0, 0, 1, 1], [], []>} : vector<2x32xbf16>, vector<32x16xbf16>, vector<2x16xf32> -> vector<2x16xf32>
    %c0_29 = arith.constant 0 : index
    %c0_30 = arith.constant 0 : index
    %50 = vector.load %arg12[%c0_29, %c0_30] : memref<1x16xf32, #tpu.memory_space<vmem>>, vector<1x16xf32>
    %51 = vector.broadcast %50 : vector<1x16xf32> to vector<2x16xf32>
    %52 = arith.addf %49, %51 : vector<2x16xf32>
    %53 = vector.extract_strided_slice %52 {offsets = [0, 0], sizes = [2, 8], strides = [1, 1]} : vector<2x16xf32> to vector<2x8xf32>
    %54 = vector.extract_strided_slice %52 {offsets = [0, 8], sizes = [2, 8], strides = [1, 1]} : vector<2x16xf32> to vector<2x8xf32>
    %c0_31 = arith.constant 0 : index
    %c0_32 = arith.constant 0 : index
    %c0_33 = arith.constant 0 : index
    %55 = vector.load %arg2[%c0_31, %c0_32, %c0_33] : memref<1x2x8xf32, #tpu.memory_space<vmem>>, vector<1x2x8xf32>
    %56 = vector.shape_cast %55 : vector<1x2x8xf32> to vector<2x8xf32>
    %cst_34 = arith.constant 5.000000e-01 : f32
    %57 = vector.broadcast %cst_34 : f32 to vector<2x8xf32>
    %58 = arith.mulf %57, %54 : vector<2x8xf32>
    %59 = math.exp %58 : vector<2x8xf32>
    %60 = arith.mulf %56, %59 : vector<2x8xf32>
    %61 = arith.addf %53, %60 : vector<2x8xf32>
    %62 = arith.truncf %61 : vector<2x8xf32> to vector<2x8xbf16>
    %c0_35 = arith.constant 0 : index
    %c0_36 = arith.constant 0 : index
    %63 = vector.load %arg13[%c0_35, %c0_36] : memref<8x32xbf16, #tpu.memory_space<vmem>>, vector<8x32xbf16>
    %cst_37 = arith.constant dense<0.000000e+00> : vector<2x32xf32>
    %64 = tpu.matmul %62, %63, %cst_37 {dimension_numbers = #tpu.dot_dimension_numbers<[1], [0], [0], [1], [0, 0, 1, 1], [], []>} : vector<2x8xbf16>, vector<8x32xbf16>, vector<2x32xf32> -> vector<2x32xf32>
    %c0_38 = arith.constant 0 : index
    %c0_39 = arith.constant 0 : index
    %65 = vector.load %arg14[%c0_38, %c0_39] : memref<1x32xf32, #tpu.memory_space<vmem>>, vector<1x32xf32>
    %66 = vector.broadcast %65 : vector<1x32xf32> to vector<2x32xf32>
    %67 = arith.addf %64, %66 : vector<2x32xf32>
    %cst_40 = arith.constant 0.000000e+00 : f32
    %68 = vector.broadcast %cst_40 : f32 to vector<2x32xf32>
    %69 = arith.maximumf %67, %68 : vector<2x32xf32>
    %70 = arith.truncf %69 : vector<2x32xf32> to vector<2x32xbf16>
    %c0_41 = arith.constant 0 : index
    %c0_42 = arith.constant 0 : index
    %71 = vector.load %arg15[%c0_41, %c0_42] : memref<32x64xbf16, #tpu.memory_space<vmem>>, vector<32x64xbf16>
    %cst_43 = arith.constant dense<0.000000e+00> : vector<2x64xf32>
    %72 = tpu.matmul %70, %71, %cst_43 {dimension_numbers = #tpu.dot_dimension_numbers<[1], [0], [0], [1], [0, 0, 1, 1], [], []>} : vector<2x32xbf16>, vector<32x64xbf16>, vector<2x64xf32> -> vector<2x64xf32>
    %c0_44 = arith.constant 0 : index
    %c0_45 = arith.constant 0 : index
    %73 = vector.load %arg16[%c0_44, %c0_45] : memref<1x64xf32, #tpu.memory_space<vmem>>, vector<1x64xf32>
    %74 = vector.broadcast %73 : vector<1x64xf32> to vector<2x64xf32>
    %75 = arith.addf %72, %74 : vector<2x64xf32>
    %cst_46 = arith.constant 0.000000e+00 : f32
    %76 = vector.broadcast %cst_46 : f32 to vector<2x64xf32>
    %77 = arith.maximumf %75, %76 : vector<2x64xf32>
    %78 = arith.truncf %77 : vector<2x64xf32> to vector<2x64xbf16>
    %c0_47 = arith.constant 0 : index
    %c0_48 = arith.constant 0 : index
    %79 = vector.load %arg17[%c0_47, %c0_48] : memref<64x1792xbf16, #tpu.memory_space<vmem>>, vector<64x1792xbf16>
    %cst_49 = arith.constant dense<0.000000e+00> : vector<2x1792xf32>
    %80 = tpu.matmul %78, %79, %cst_49 {dimension_numbers = #tpu.dot_dimension_numbers<[1], [0], [0], [1], [0, 0, 1, 1], [], []>} : vector<2x64xbf16>, vector<64x1792xbf16>, vector<2x1792xf32> -> vector<2x1792xf32>
    %c0_50 = arith.constant 0 : index
    %c0_51 = arith.constant 0 : index
    %81 = vector.load %arg18[%c0_50, %c0_51] : memref<1x1792xf32, #tpu.memory_space<vmem>>, vector<1x1792xf32>
    %82 = vector.broadcast %81 : vector<1x1792xf32> to vector<2x1792xf32>
    %83 = arith.addf %80, %82 : vector<2x1792xf32>
    %cst_52 = arith.constant 0.000000e+00 : f32
    %84 = vector.broadcast %cst_52 : f32 to vector<2x1792xf32>
    %85 = arith.maximumf %83, %84 : vector<2x1792xf32>
    %86 = vector.extract_strided_slice %85 {offsets = [0, 0], sizes = [2, 256], strides = [1, 1]} : vector<2x1792xf32> to vector<2x256xf32>
    %87 = vector.extract_strided_slice %85 {offsets = [0, 256], sizes = [2, 256], strides = [1, 1]} : vector<2x1792xf32> to vector<2x256xf32>
    %88 = vector.extract_strided_slice %85 {offsets = [0, 512], sizes = [2, 256], strides = [1, 1]} : vector<2x1792xf32> to vector<2x256xf32>
    %89 = vector.extract_strided_slice %85 {offsets = [0, 768], sizes = [2, 256], strides = [1, 1]} : vector<2x1792xf32> to vector<2x256xf32>
    %90 = vector.extract_strided_slice %85 {offsets = [0, 1024], sizes = [2, 256], strides = [1, 1]} : vector<2x1792xf32> to vector<2x256xf32>
    %91 = vector.extract_strided_slice %85 {offsets = [0, 1280], sizes = [2, 256], strides = [1, 1]} : vector<2x1792xf32> to vector<2x256xf32>
    %92 = vector.extract_strided_slice %85 {offsets = [0, 1536], sizes = [2, 256], strides = [1, 1]} : vector<2x1792xf32> to vector<2x256xf32>
    %93 = tpu.concatenate %86, %87, %88, %89, %90, %91, %92 in 0 : vector<2x256xf32>, vector<2x256xf32>, vector<2x256xf32>, vector<2x256xf32>, vector<2x256xf32>, vector<2x256xf32>, vector<2x256xf32> -> vector<14x256xf32>
    %94 = vector.extract_strided_slice %93 {offsets = [2, 0], sizes = [12, 256], strides = [1, 1]} : vector<14x256xf32> to vector<12x256xf32>
    %95 = tpu.concatenate %94, %0 in 0 : vector<12x256xf32>, vector<2x256xf32> -> vector<14x256xf32>
    %96 = arith.truncf %93 : vector<14x256xf32> to vector<14x256xbf16>
    %c0_53 = arith.constant 0 : index
    %c0_54 = arith.constant 0 : index
    %97 = vector.load %arg19[%c0_53, %c0_54] : memref<256x256xbf16, #tpu.memory_space<vmem>>, vector<256x256xbf16>
    %cst_55 = arith.constant dense<0.000000e+00> : vector<14x256xf32>
    %98 = tpu.matmul %96, %97, %cst_55 {dimension_numbers = #tpu.dot_dimension_numbers<[1], [0], [0], [1], [0, 0, 1, 1], [], []>} : vector<14x256xbf16>, vector<256x256xbf16>, vector<14x256xf32> -> vector<14x256xf32>
    %c0_56 = arith.constant 0 : index
    %c0_57 = arith.constant 0 : index
    %99 = vector.load %arg21[%c0_56, %c0_57] : memref<1x256xf32, #tpu.memory_space<vmem>>, vector<1x256xf32>
    %100 = vector.broadcast %99 : vector<1x256xf32> to vector<14x256xf32>
    %101 = arith.addf %98, %100 : vector<14x256xf32>
    %cst_58 = arith.constant 0.000000e+00 : f32
    %102 = vector.broadcast %cst_58 : f32 to vector<14x256xf32>
    %103 = arith.maximumf %101, %102 : vector<14x256xf32>
    %104 = tpu.concatenate %93, %95 in 1 : vector<14x256xf32>, vector<14x256xf32> -> vector<14x512xf32>
    %105 = arith.truncf %104 : vector<14x512xf32> to vector<14x512xbf16>
    %c0_59 = arith.constant 0 : index
    %c0_60 = arith.constant 0 : index
    %106 = vector.load %arg20[%c0_59, %c0_60] : memref<512x256xbf16, #tpu.memory_space<vmem>>, vector<512x256xbf16>
    %cst_61 = arith.constant dense<0.000000e+00> : vector<14x256xf32>
    %107 = tpu.matmul %105, %106, %cst_61 {dimension_numbers = #tpu.dot_dimension_numbers<[1], [0], [0], [1], [0, 0, 1, 1], [], []>} : vector<14x512xbf16>, vector<512x256xbf16>, vector<14x256xf32> -> vector<14x256xf32>
    %c0_62 = arith.constant 0 : index
    %c0_63 = arith.constant 0 : index
    %108 = vector.load %arg21[%c0_62, %c0_63] : memref<1x256xf32, #tpu.memory_space<vmem>>, vector<1x256xf32>
    %109 = vector.broadcast %108 : vector<1x256xf32> to vector<14x256xf32>
    %110 = arith.addf %107, %109 : vector<14x256xf32>
    %cst_64 = arith.constant 0.000000e+00 : f32
    %111 = vector.broadcast %cst_64 : f32 to vector<14x256xf32>
    %112 = arith.maximumf %110, %111 : vector<14x256xf32>
    %113 = vector.extract_strided_slice %103 {offsets = [2, 0], sizes = [12, 256], strides = [1, 1]} : vector<14x256xf32> to vector<12x256xf32>
    %114 = tpu.concatenate %113, %0 in 0 : vector<12x256xf32>, vector<2x256xf32> -> vector<14x256xf32>
    %115 = arith.truncf %103 : vector<14x256xf32> to vector<14x256xbf16>
    %c0_65 = arith.constant 0 : index
    %c0_66 = arith.constant 0 : index
    %116 = vector.load %arg22[%c0_65, %c0_66] : memref<256x28xbf16, #tpu.memory_space<vmem>>, vector<256x28xbf16>
    %cst_67 = arith.constant dense<0.000000e+00> : vector<14x28xf32>
    %117 = tpu.matmul %115, %116, %cst_67 {dimension_numbers = #tpu.dot_dimension_numbers<[1], [0], [0], [1], [0, 0, 1, 1], [], []>} : vector<14x256xbf16>, vector<256x28xbf16>, vector<14x28xf32> -> vector<14x28xf32>
    %c0_68 = arith.constant 0 : index
    %c0_69 = arith.constant 0 : index
    %118 = vector.load %arg24[%c0_68, %c0_69] : memref<1x28xf32, #tpu.memory_space<vmem>>, vector<1x28xf32>
    %119 = vector.broadcast %118 : vector<1x28xf32> to vector<14x28xf32>
    %120 = arith.addf %117, %119 : vector<14x28xf32>
    %121 = arith.negf %120 : vector<14x28xf32>
    %122 = math.exp %121 : vector<14x28xf32>
    %cst_70 = arith.constant 1.000000e+00 : f32
    %123 = vector.broadcast %cst_70 : f32 to vector<14x28xf32>
    %124 = arith.addf %123, %122 : vector<14x28xf32>
    %125 = arith.divf %123, %124 : vector<14x28xf32>
    %126 = tpu.concatenate %103, %112 in 1 : vector<14x256xf32>, vector<14x256xf32> -> vector<14x512xf32>
    %127 = arith.truncf %126 : vector<14x512xf32> to vector<14x512xbf16>
    %c0_71 = arith.constant 0 : index
    %c0_72 = arith.constant 0 : index
    %128 = vector.load %arg23[%c0_71, %c0_72] : memref<512x28xbf16, #tpu.memory_space<vmem>>, vector<512x28xbf16>
    %cst_73 = arith.constant dense<0.000000e+00> : vector<14x28xf32>
    %129 = tpu.matmul %127, %128, %cst_73 {dimension_numbers = #tpu.dot_dimension_numbers<[1], [0], [0], [1], [0, 0, 1, 1], [], []>} : vector<14x512xbf16>, vector<512x28xbf16>, vector<14x28xf32> -> vector<14x28xf32>
    %c0_74 = arith.constant 0 : index
    %c0_75 = arith.constant 0 : index
    %130 = vector.load %arg24[%c0_74, %c0_75] : memref<1x28xf32, #tpu.memory_space<vmem>>, vector<1x28xf32>
    %131 = vector.broadcast %130 : vector<1x28xf32> to vector<14x28xf32>
    %132 = arith.addf %129, %131 : vector<14x28xf32>
    %133 = arith.negf %132 : vector<14x28xf32>
    %134 = math.exp %133 : vector<14x28xf32>
    %cst_76 = arith.constant 1.000000e+00 : f32
    %135 = vector.broadcast %cst_76 : f32 to vector<14x28xf32>
    %136 = arith.addf %135, %134 : vector<14x28xf32>
    %137 = arith.divf %135, %136 : vector<14x28xf32>
    %138 = arith.truncf %112 : vector<14x256xf32> to vector<14x256xbf16>
    %c0_77 = arith.constant 0 : index
    %c0_78 = arith.constant 0 : index
    %139 = vector.load %arg22[%c0_77, %c0_78] : memref<256x28xbf16, #tpu.memory_space<vmem>>, vector<256x28xbf16>
    %cst_79 = arith.constant dense<0.000000e+00> : vector<14x28xf32>
    %140 = tpu.matmul %138, %139, %cst_79 {dimension_numbers = #tpu.dot_dimension_numbers<[1], [0], [0], [1], [0, 0, 1, 1], [], []>} : vector<14x256xbf16>, vector<256x28xbf16>, vector<14x28xf32> -> vector<14x28xf32>
    %c0_80 = arith.constant 0 : index
    %c0_81 = arith.constant 0 : index
    %141 = vector.load %arg24[%c0_80, %c0_81] : memref<1x28xf32, #tpu.memory_space<vmem>>, vector<1x28xf32>
    %142 = vector.broadcast %141 : vector<1x28xf32> to vector<14x28xf32>
    %143 = arith.addf %140, %142 : vector<14x28xf32>
    %144 = arith.negf %143 : vector<14x28xf32>
    %145 = math.exp %144 : vector<14x28xf32>
    %cst_82 = arith.constant 1.000000e+00 : f32
    %146 = vector.broadcast %cst_82 : f32 to vector<14x28xf32>
    %147 = arith.addf %146, %145 : vector<14x28xf32>
    %148 = arith.divf %146, %147 : vector<14x28xf32>
    %149 = tpu.concatenate %112, %114 in 1 : vector<14x256xf32>, vector<14x256xf32> -> vector<14x512xf32>
    %150 = arith.truncf %149 : vector<14x512xf32> to vector<14x512xbf16>
    %c0_83 = arith.constant 0 : index
    %c0_84 = arith.constant 0 : index
    %151 = vector.load %arg23[%c0_83, %c0_84] : memref<512x28xbf16, #tpu.memory_space<vmem>>, vector<512x28xbf16>
    %cst_85 = arith.constant dense<0.000000e+00> : vector<14x28xf32>
    %152 = tpu.matmul %150, %151, %cst_85 {dimension_numbers = #tpu.dot_dimension_numbers<[1], [0], [0], [1], [0, 0, 1, 1], [], []>} : vector<14x512xbf16>, vector<512x28xbf16>, vector<14x28xf32> -> vector<14x28xf32>
    %c0_86 = arith.constant 0 : index
    %c0_87 = arith.constant 0 : index
    %153 = vector.load %arg24[%c0_86, %c0_87] : memref<1x28xf32, #tpu.memory_space<vmem>>, vector<1x28xf32>
    %154 = vector.broadcast %153 : vector<1x28xf32> to vector<14x28xf32>
    %155 = arith.addf %152, %154 : vector<14x28xf32>
    %156 = arith.negf %155 : vector<14x28xf32>
    %157 = math.exp %156 : vector<14x28xf32>
    %cst_88 = arith.constant 1.000000e+00 : f32
    %158 = vector.broadcast %cst_88 : f32 to vector<14x28xf32>
    %159 = arith.addf %158, %157 : vector<14x28xf32>
    %160 = arith.divf %158, %159 : vector<14x28xf32>
    %c0_89 = arith.constant 0 : index
    %c0_90 = arith.constant 0 : index
    %c0_91 = arith.constant 0 : index
    %c0_92 = arith.constant 0 : index
    %161 = vector.load %arg25[%c0_89, %c0_90, %c0_91, %c0_92] : memref<1x4x14x28xf32, #tpu.memory_space<vmem>>, vector<1x1x14x28xf32>
    %162 = vector.shape_cast %161 : vector<1x1x14x28xf32> to vector<14x28xf32>
    %163 = vector.shape_cast %125 : vector<14x28xf32> to vector<1x1x14x28xf32>
    tpu.vector_store %arg25[%c0_89, %c0_90, %c0_91, %c0_92], %163 {strides = array<i32>} : memref<1x4x14x28xf32, #tpu.memory_space<vmem>>, vector<1x1x14x28xf32>,
    %c0_93 = arith.constant 0 : index
    %c1 = arith.constant 1 : index
    %c0_94 = arith.constant 0 : index
    %c0_95 = arith.constant 0 : index
    %164 = vector.load %arg25[%c0_93, %c1, %c0_94, %c0_95] : memref<1x4x14x28xf32, #tpu.memory_space<vmem>>, vector<1x1x14x28xf32>
    %165 = vector.shape_cast %164 : vector<1x1x14x28xf32> to vector<14x28xf32>
    %166 = vector.shape_cast %137 : vector<14x28xf32> to vector<1x1x14x28xf32>
    tpu.vector_store %arg25[%c0_93, %c1, %c0_94, %c0_95], %166 {strides = array<i32>} : memref<1x4x14x28xf32, #tpu.memory_space<vmem>>, vector<1x1x14x28xf32>,
    %c0_96 = arith.constant 0 : index
    %c2 = arith.constant 2 : index
    %c0_97 = arith.constant 0 : index
    %c0_98 = arith.constant 0 : index
    %167 = vector.load %arg25[%c0_96, %c2, %c0_97, %c0_98] : memref<1x4x14x28xf32, #tpu.memory_space<vmem>>, vector<1x1x14x28xf32>
    %168 = vector.shape_cast %167 : vector<1x1x14x28xf32> to vector<14x28xf32>
    %169 = vector.shape_cast %148 : vector<14x28xf32> to vector<1x1x14x28xf32>
    tpu.vector_store %arg25[%c0_96, %c2, %c0_97, %c0_98], %169 {strides = array<i32>} : memref<1x4x14x28xf32, #tpu.memory_space<vmem>>, vector<1x1x14x28xf32>,
    %c0_99 = arith.constant 0 : index
    %c3 = arith.constant 3 : index
    %c0_100 = arith.constant 0 : index
    %c0_101 = arith.constant 0 : index
    %170 = vector.load %arg25[%c0_99, %c3, %c0_100, %c0_101] : memref<1x4x14x28xf32, #tpu.memory_space<vmem>>, vector<1x1x14x28xf32>
    %171 = vector.shape_cast %170 : vector<1x1x14x28xf32> to vector<14x28xf32>
    %172 = vector.shape_cast %160 : vector<14x28xf32> to vector<1x1x14x28xf32>
    tpu.vector_store %arg25[%c0_99, %c3, %c0_100, %c0_101], %172 {strides = array<i32>} : memref<1x4x14x28xf32, #tpu.memory_space<vmem>>, vector<1x1x14x28xf32>,
    %c0_102 = arith.constant 0 : index
    %c0_103 = arith.constant 0 : index
    %c0_104 = arith.constant 0 : index
    %173 = vector.load %arg26[%c0_102, %c0_103, %c0_104] : memref<1x2x8xf32, #tpu.memory_space<vmem>>, vector<1x2x8xf32>
    %174 = vector.shape_cast %173 : vector<1x2x8xf32> to vector<2x8xf32>
    %175 = vector.shape_cast %53 : vector<2x8xf32> to vector<1x2x8xf32>
    tpu.vector_store %arg26[%c0_102, %c0_103, %c0_104], %175 {strides = array<i32>} : memref<1x2x8xf32, #tpu.memory_space<vmem>>, vector<1x2x8xf32>,
    %c0_105 = arith.constant 0 : index
    %c0_106 = arith.constant 0 : index
    %c0_107 = arith.constant 0 : index
    %176 = vector.load %arg27[%c0_105, %c0_106, %c0_107] : memref<1x2x8xf32, #tpu.memory_space<vmem>>, vector<1x2x8xf32>
    %177 = vector.shape_cast %176 : vector<1x2x8xf32> to vector<2x8xf32>
    %178 = vector.shape_cast %54 : vector<2x8xf32> to vector<1x2x8xf32>
    tpu.vector_store %arg27[%c0_105, %c0_106, %c0_107], %178 {strides = array<i32>} : memref<1x2x8xf32, #tpu.memory_space<vmem>>, vector<1x2x8xf32>,
    return
  }
  func.func @transform_0(%arg0: i32) -> (i32, i32, i32) {
    %c0_i32 = arith.constant 0 : i32
    %c0_i32_0 = arith.constant 0 : i32
    %c0_i32_1 = arith.constant 0 : i32
    return %arg0, %c0_i32, %c0_i32_0 : i32, i32, i32
  }
  func.func @transform_1(%arg0: i32) -> (i32, i32, i32) {
    %c0_i32 = arith.constant 0 : i32
    %c0_i32_0 = arith.constant 0 : i32
    %c0_i32_1 = arith.constant 0 : i32
    return %arg0, %c0_i32, %c0_i32_0 : i32, i32, i32
  }
  func.func @transform_2(%arg0: i32) -> (i32, i32) {
    %c0_i32 = arith.constant 0 : i32
    %c0_i32_0 = arith.constant 0 : i32
    %c0_i32_1 = arith.constant 0 : i32
    return %c0_i32, %c0_i32_0 : i32, i32
  }
  func.func @transform_3(%arg0: i32) -> (i32, i32) {
    %c0_i32 = arith.constant 0 : i32
    %c0_i32_0 = arith.constant 0 : i32
    %c0_i32_1 = arith.constant 0 : i32
    return %c0_i32, %c0_i32_0 : i32, i32
  }
  func.func @transform_4(%arg0: i32) -> (i32, i32) {
    %c0_i32 = arith.constant 0 : i32
    %c0_i32_0 = arith.constant 0 : i32
    %c0_i32_1 = arith.constant 0 : i32
    return %c0_i32, %c0_i32_0 : i32, i32
  }
  func.func @transform_5(%arg0: i32) -> (i32, i32) {
    %c0_i32 = arith.constant 0 : i32
    %c0_i32_0 = arith.constant 0 : i32
    %c0_i32_1 = arith.constant 0 : i32
    return %c0_i32, %c0_i32_0 : i32, i32
  }
  func.func @transform_6(%arg0: i32) -> (i32, i32) {
    %c0_i32 = arith.constant 0 : i32
    %c0_i32_0 = arith.constant 0 : i32
    %c0_i32_1 = arith.constant 0 : i32
    return %c0_i32, %c0_i32_0 : i32, i32
  }
  func.func @transform_7(%arg0: i32) -> (i32, i32) {
    %c0_i32 = arith.constant 0 : i32
    %c0_i32_0 = arith.constant 0 : i32
    %c0_i32_1 = arith.constant 0 : i32
    return %c0_i32, %c0_i32_0 : i32, i32
  }
  func.func @transform_8(%arg0: i32) -> (i32, i32) {
    %c0_i32 = arith.constant 0 : i32
    %c0_i32_0 = arith.constant 0 : i32
    %c0_i32_1 = arith.constant 0 : i32
    return %c0_i32, %c0_i32_0 : i32, i32
  }
  func.func @transform_9(%arg0: i32) -> (i32, i32) {
    %c0_i32 = arith.constant 0 : i32
    %c0_i32_0 = arith.constant 0 : i32
    %c0_i32_1 = arith.constant 0 : i32
    return %c0_i32, %c0_i32_0 : i32, i32
  }
  func.func @transform_10(%arg0: i32) -> (i32, i32) {
    %c0_i32 = arith.constant 0 : i32
    %c0_i32_0 = arith.constant 0 : i32
    %c0_i32_1 = arith.constant 0 : i32
    return %c0_i32, %c0_i32_0 : i32, i32
  }
  func.func @transform_11(%arg0: i32) -> (i32, i32) {
    %c0_i32 = arith.constant 0 : i32
    %c0_i32_0 = arith.constant 0 : i32
    %c0_i32_1 = arith.constant 0 : i32
    return %c0_i32, %c0_i32_0 : i32, i32
  }
  func.func @transform_12(%arg0: i32) -> (i32, i32) {
    %c0_i32 = arith.constant 0 : i32
    %c0_i32_0 = arith.constant 0 : i32
    %c0_i32_1 = arith.constant 0 : i32
    return %c0_i32, %c0_i32_0 : i32, i32
  }
  func.func @transform_13(%arg0: i32) -> (i32, i32) {
    %c0_i32 = arith.constant 0 : i32
    %c0_i32_0 = arith.constant 0 : i32
    %c0_i32_1 = arith.constant 0 : i32
    return %c0_i32, %c0_i32_0 : i32, i32
  }
  func.func @transform_14(%arg0: i32) -> (i32, i32) {
    %c0_i32 = arith.constant 0 : i32
    %c0_i32_0 = arith.constant 0 : i32
    %c0_i32_1 = arith.constant 0 : i32
    return %c0_i32, %c0_i32_0 : i32, i32
  }
  func.func @transform_15(%arg0: i32) -> (i32, i32) {
    %c0_i32 = arith.constant 0 : i32
    %c0_i32_0 = arith.constant 0 : i32
    %c0_i32_1 = arith.constant 0 : i32
    return %c0_i32, %c0_i32_0 : i32, i32
  }
  func.func @transform_16(%arg0: i32) -> (i32, i32) {
    %c0_i32 = arith.constant 0 : i32
    %c0_i32_0 = arith.constant 0 : i32
    %c0_i32_1 = arith.constant 0 : i32
    return %c0_i32, %c0_i32_0 : i32, i32
  }
  func.func @transform_17(%arg0: i32) -> (i32, i32) {
    %c0_i32 = arith.constant 0 : i32
    %c0_i32_0 = arith.constant 0 : i32
    %c0_i32_1 = arith.constant 0 : i32
    return %c0_i32, %c0_i32_0 : i32, i32
  }
  func.func @transform_18(%arg0: i32) -> (i32, i32) {
    %c0_i32 = arith.constant 0 : i32
    %c0_i32_0 = arith.constant 0 : i32
    %c0_i32_1 = arith.constant 0 : i32
    return %c0_i32, %c0_i32_0 : i32, i32
  }
  func.func @transform_19(%arg0: i32) -> (i32, i32) {
    %c0_i32 = arith.constant 0 : i32
    %c0_i32_0 = arith.constant 0 : i32
    %c0_i32_1 = arith.constant 0 : i32
    return %c0_i32, %c0_i32_0 : i32, i32
  }
  func.func @transform_20(%arg0: i32) -> (i32, i32) {
    %c0_i32 = arith.constant 0 : i32
    %c0_i32_0 = arith.constant 0 : i32
    %c0_i32_1 = arith.constant 0 : i32
    return %c0_i32, %c0_i32_0 : i32, i32
  }
  func.func @transform_21(%arg0: i32) -> (i32, i32) {
    %c0_i32 = arith.constant 0 : i32
    %c0_i32_0 = arith.constant 0 : i32
    %c0_i32_1 = arith.constant 0 : i32
    return %c0_i32, %c0_i32_0 : i32, i32
  }
  func.func @transform_22(%arg0: i32) -> (i32, i32) {
    %c0_i32 = arith.constant 0 : i32
    %c0_i32_0 = arith.constant 0 : i32
    %c0_i32_1 = arith.constant 0 : i32
    return %c0_i32, %c0_i32_0 : i32, i32
  }
  func.func @transform_23(%arg0: i32) -> (i32, i32) {
    %c0_i32 = arith.constant 0 : i32
    %c0_i32_0 = arith.constant 0 : i32
    %c0_i32_1 = arith.constant 0 : i32
    return %c0_i32, %c0_i32_0 : i32, i32
  }
  func.func @transform_24(%arg0: i32) -> (i32, i32, i32, i32) {
    %c0_i32 = arith.constant 0 : i32
    %c0_i32_0 = arith.constant 0 : i32
    %c0_i32_1 = arith.constant 0 : i32
    %c0_i32_2 = arith.constant 0 : i32
    return %arg0, %c0_i32, %c0_i32_0, %c0_i32_1 : i32, i32, i32, i32
  }
  func.func @transform_25(%arg0: i32) -> (i32, i32, i32) {
    %c0_i32 = arith.constant 0 : i32
    %c0_i32_0 = arith.constant 0 : i32
    %c0_i32_1 = arith.constant 0 : i32
    return %arg0, %c0_i32, %c0_i32_0 : i32, i32, i32
  }
  func.func @transform_26(%arg0: i32) -> (i32, i32, i32) {
    %c0_i32 = arith.constant 0 : i32
    %c0_i32_0 = arith.constant 0 : i32
    %c0_i32_1 = arith.constant 0 : i32
    return %arg0, %c0_i32, %c0_i32_0 : i32, i32, i32
  }
}

</mosaic_0001>

<llo_original>
// kernel: vae_cnn_forward.1
$region0: #{vae_cnn_forward.1}
  #allocation0 [shape = 'u32[]', space=smem, size = 0x4, offset = 0x4, fixed_abs, tag = 'smem constant byte address 0x4 - core index']
  #allocation1 [shape = 'u32[72,128]{1,0:T(1,128)}', space=vmem, size = 0x9000, scoped, tag = 'internal scratch']
  %s0 = inlined_call_operand.vmem [shape: bf16[2,28,84], index: 0, kind: input, shape index: {}]
  %s1 = inlined_call_operand.vmem [shape: f32[2,2,8], index: 1, kind: input, shape index: {}]
  %s2 = inlined_call_operand.vmem [shape: bf16[84,256], index: 2, kind: input, shape index: {}]
  %s3 = inlined_call_operand.vmem [shape: f32[1,256], index: 3, kind: input, shape index: {}]
  %s4 = inlined_call_operand.vmem [shape: bf16[768,256], index: 4, kind: input, shape index: {}]
  %s5 = inlined_call_operand.vmem [shape: f32[1,256], index: 5, kind: input, shape index: {}]
  %s6 = inlined_call_operand.vmem [shape: bf16[1792,64], index: 6, kind: input, shape index: {}]
  %s7 = inlined_call_operand.vmem [shape: f32[1,64], index: 7, kind: input, shape index: {}]
  %s8 = inlined_call_operand.vmem [shape: bf16[64,32], index: 8, kind: input, shape index: {}]
  %s9 = inlined_call_operand.vmem [shape: f32[1,32], index: 9, kind: input, shape index: {}]
  %s10 = inlined_call_operand.vmem [shape: bf16[32,16], index: 10, kind: input, shape index: {}]
  %s11 = inlined_call_operand.vmem [shape: f32[1,16], index: 11, kind: input, shape index: {}]
  %s12 = inlined_call_operand.vmem [shape: bf16[8,32], index: 12, kind: input, shape index: {}]
  %s13 = inlined_call_operand.vmem [shape: f32[1,32], index: 13, kind: input, shape index: {}]
  %s14 = inlined_call_operand.vmem [shape: bf16[32,64], index: 14, kind: input, shape index: {}]
  %s15 = inlined_call_operand.vmem [shape: f32[1,64], index: 15, kind: input, shape index: {}]
  %s16 = inlined_call_operand.hbm [shape: bf16[64,1792], index: 16, kind: input, shape index: {}]
  %s17 = inlined_call_operand.vmem [shape: f32[1,1792], index: 17, kind: input, shape index: {}]
  %s18 = inlined_call_operand.vmem [shape: bf16[256,256], index: 18, kind: input, shape index: {}]
  %s19 = inlined_call_operand.vmem [shape: bf16[512,256], index: 19, kind: input, shape index: {}]
  %s20 = inlined_call_operand.vmem [shape: f32[1,256], index: 20, kind: input, shape index: {}]
  %s21 = inlined_call_operand.vmem [shape: bf16[256,28], index: 21, kind: input, shape index: {}]
  %s22 = inlined_call_operand.vmem [shape: bf16[512,28], index: 22, kind: input, shape index: {}]
  %s23 = inlined_call_operand.vmem [shape: f32[1,28], index: 23, kind: input, shape index: {}]
  %s24 = inlined_call_operand.vmem [shape: f32[2,4,14,28], index: 24, kind: output, shape index: {0}]
  %s25 = inlined_call_operand.hbm [shape: f32[2,2,8], index: 25, kind: output, shape index: {1}]
  %s26 = inlined_call_operand.hbm [shape: f32[2,2,8], index: 26, kind: output, shape index: {2}]
  %27 = xla_tuple %s24, %s25, %s26
  %s28 = sld [smem:[#allocation0]]
  $region149: #{vae_cnn_forward.1} parent=0
    _
  %s30 = ssub.s32 1, %s28
  %s31 = scalar_select 0, %s30, %s28
  $region1: #{vae_cnn_forward.1} parent=0
    #allocation2 [shape = 'u8[229376]{0}', space=vmem, size = 0x38000, scoped, tag = 'input window, operand 16, single buffered']
    #allocation3 [shape = 's32[2]{0}', space=sflag, size = 0x8, scoped, tag = 'scoped memory for vae_cnn_forward.1']
    #allocation4 [shape = 's32[2]{0}', space=sflag, size = 0x8, scoped, tag = 'scoped memory for vae_cnn_forward.1']
    #allocation5 [shape = 'u8[2048]{0}', space=vmem, size = 0x800, scoped, tag = 'output window, operand 1']
    #allocation6 [shape = 'u8[2048]{0}', space=vmem, size = 0x800, scoped, tag = 'output window, operand 2']
    #allocation7 [shape = 's32[2]{0}', space=sflag, size = 0x8, scoped, tag = 'scoped memory for vae_cnn_forward.1']
    %32 = vsyncpa [#allocation3], 0
    %33 = vsyncpa [#allocation4], 0
    %s34 = scalar_lea.sflag [#allocation4], 1
    %35 = vsyncpa %s34, 0
    %36 = vsyncpa [#allocation7], 0
    %s37 = scalar_lea.sflag [#allocation7], 1
    %38 = vsyncpa %s37, 0
    loop: start=0, step=1, limit=4
    $region2: #{vae_cnn_forward.1} parent=1 // loop_pre_header
      _
    $region3: #{vae_cnn_forward.1} parent=1 // loop_header
      %s40 = sphi 0, %s44
      %p41 = scmp.ge.s32.totalorder %s40, 4
      %s50 = sphi 0, %s52
      %s53 = sphi 0, %s50
      %s54 = sphi 0, %s53
      %s70 = sphi 0, %s54
      %s76 = sphi 0, %s78
      %s79 = sphi 0, %s76
      %s80 = sphi 0, %s79
      %s96 = sphi 0, %s80
      %s100 = sphi 0, %s100
      %s102 = sphi 0, %s100
      %s103 = sphi 0, %s102
      %s117 = sphi 0, %s103
      %s121 = sphi 0, %s121
      %s123 = sphi 0, %s121
      %s124 = sphi 0, %s123
      %s138 = sphi 0, %s124
      %s142 = sphi 0, %s142
      %s144 = sphi 0, %s142
      %s145 = sphi 0, %s144
      %s159 = sphi 0, %s145
      %s163 = sphi 0, %s163
      %s165 = sphi 0, %s163
      %s166 = sphi 0, %s165
      %s180 = sphi 0, %s166
      %s184 = sphi 0, %s184
      %s186 = sphi 0, %s184
      %s187 = sphi 0, %s186
      %s201 = sphi 0, %s187
      %s205 = sphi 0, %s205
      %s207 = sphi 0, %s205
      %s208 = sphi 0, %s207
      %s222 = sphi 0, %s208
      %s226 = sphi 0, %s226
      %s228 = sphi 0, %s226
      %s229 = sphi 0, %s228
      %s243 = sphi 0, %s229
      %s247 = sphi 0, %s247
      %s249 = sphi 0, %s247
      %s250 = sphi 0, %s249
      %s264 = sphi 0, %s250
      %s268 = sphi 0, %s268
      %s270 = sphi 0, %s268
      %s271 = sphi 0, %s270
      %s285 = sphi 0, %s271
      %s289 = sphi 0, %s289
      %s291 = sphi 0, %s289
      %s292 = sphi 0, %s291
      %s306 = sphi 0, %s292
      %s310 = sphi 0, %s310
      %s312 = sphi 0, %s310
      %s313 = sphi 0, %s312
      %s327 = sphi 0, %s313
      %s331 = sphi 0, %s331
      %s333 = sphi 0, %s331
      %s334 = sphi 0, %s333
      %s348 = sphi 0, %s334
      %s352 = sphi 0, %s352
      %s354 = sphi 0, %s352
      %s355 = sphi 0, %s354
      %s369 = sphi 0, %s355
      %s373 = sphi 0, %s373
      %s375 = sphi 0, %s373
      %s376 = sphi 0, %s375
      %s390 = sphi 0, %s376
      %s394 = sphi 0, %s394
      %s396 = sphi 0, %s394
      %s397 = sphi 0, %s396
      %s411 = sphi 0, %s397
      %s415 = sphi 0, %s415
      %s417 = sphi 0, %s415
      %s418 = sphi 0, %s417
      %s432 = sphi 0, %s418
      %s436 = sphi 0, %s436
      %s438 = sphi 0, %s436
      %s439 = sphi 0, %s438
      %s453 = sphi 0, %s439
      %s457 = sphi 0, %s457
      %s459 = sphi 0, %s457
      %s460 = sphi 0, %s459
      %s474 = sphi 0, %s460
      %s478 = sphi 0, %s478
      %s480 = sphi 0, %s478
      %s481 = sphi 0, %s480
      %s495 = sphi 0, %s481
      %s499 = sphi 0, %s499
      %s501 = sphi 0, %s499
      %s502 = sphi 0, %s501
      %s516 = sphi 0, %s502
      %s520 = sphi 0, %s520
      %s522 = sphi 0, %s520
      %s523 = sphi 0, %s522
      %s537 = sphi 0, %s523
      %s541 = sphi 0, %s541
      %s543 = sphi 0, %s541
      %s544 = sphi 0, %s543
      %s558 = sphi 0, %s544
      %s564 = sphi 0, %s566
      %s567 = sphi 0, %s564
      %s568 = sphi 0, %s567
      %s584 = sphi 0, %s568
      %s590 = sphi 0, %s592
      %s593 = sphi 0, %s590
      %s594 = sphi 0, %s593
      %s610 = sphi 0, %s594
      %s616 = sphi 0, %s618
      %s619 = sphi 0, %s616
      %s620 = sphi 0, %s619
      %s636 = sphi 0, %s620
    $region4: #{vae_cnn_forward.1} parent=1 // loop_header_branch
      %43 = sbr.rel (%p41) target = $region8
    $region5: #{vae_cnn_forward.1} parent=1 // loop_body
      %s45 = ssub.s32 %s40, 1
      %s46 = ssub.s32 %s40, 2
      %s47 = sadd.s32 %s40, 1
      %s48 = ssub.s32 %s40, %s47
      %p49 = scmp.eq.s32.totalorder %s48, 0
      %s51 = sadd.s32 %s50, 1
      %s52 = scalar_select %p49, %s50, %s51
      %p55 = pneg %p49
      %p56 = scmp.eq.s32.totalorder %s40, 1
      %p57 = por %p55, %p56
      %p58 = scmp.ne.s32.totalorder %s50, %s53
      %p59 = scmp.eq.s32.totalorder %s40, 0
      %p60 = por %p58, %p59
      %p61 = scmp.ne.s32.totalorder %s50, %s53
      %p62 = scmp.eq.s32.totalorder %s45, 1
      %p63 = por %p61, %p62
      %p64 = scmp.ne.s32.totalorder %s53, %s54
      %p65 = scmp.eq.s32.totalorder %s45, 0
      %p66 = por %p64, %p65
      %p67 = scmp.ne.s32.totalorder %s53, %s54
      %p68 = scmp.eq.s32.totalorder %s46, 1
      %p69 = por %p67, %p68
      %p71 = scmp.ne.s32.totalorder %s54, %s70
      %p72 = scmp.eq.s32.totalorder %s46, 0
      %p73 = por %p71, %p72
      %s74 = ssub.s32 %s40, %s47
      %p75 = scmp.eq.s32.totalorder %s74, 0
      %s77 = sadd.s32 %s76, 1
      %s78 = scalar_select %p75, %s76, %s77
      %p81 = pneg %p75
      %p82 = scmp.eq.s32.totalorder %s40, 1
      %p83 = por %p81, %p82
      %p84 = scmp.ne.s32.totalorder %s76, %s79
      %p85 = scmp.eq.s32.totalorder %s40, 0
      %p86 = por %p84, %p85
      %p87 = scmp.ne.s32.totalorder %s76, %s79
      %p88 = scmp.eq.s32.totalorder %s45, 1
      %p89 = por %p87, %p88
      %p90 = scmp.ne.s32.totalorder %s79, %s80
      %p91 = scmp.eq.s32.totalorder %s45, 0
      %p92 = por %p90, %p91
      %p93 = scmp.ne.s32.totalorder %s79, %s80
      %p94 = scmp.eq.s32.totalorder %s46, 1
      %p95 = por %p93, %p94
      %p97 = scmp.ne.s32.totalorder %s80, %s96
      %p98 = scmp.eq.s32.totalorder %s46, 0
      %p99 = por %p97, %p98
      %s101 = sadd.s32 %s100, 1
      %p104 = scmp.eq.s32.totalorder %s40, 1
      %p105 = scmp.ne.s32.totalorder %s100, %s102
      %p106 = scmp.eq.s32.totalorder %s40, 0
      %p107 = por %p105, %p106
      %p108 = scmp.ne.s32.totalorder %s100, %s102
      %p109 = scmp.eq.s32.totalorder %s45, 1
      %p110 = por %p108, %p109
      %p111 = scmp.ne.s32.totalorder %s102, %s103
      %p112 = scmp.eq.s32.totalorder %s45, 0
      %p113 = por %p111, %p112
      %p114 = scmp.ne.s32.totalorder %s102, %s103
      %p115 = scmp.eq.s32.totalorder %s46, 1
      %p116 = por %p114, %p115
      %p118 = scmp.ne.s32.totalorder %s103, %s117
      %p119 = scmp.eq.s32.totalorder %s46, 0
      %p120 = por %p118, %p119
      %s122 = sadd.s32 %s121, 1
      %p125 = scmp.eq.s32.totalorder %s40, 1
      %p126 = scmp.ne.s32.totalorder %s121, %s123
      %p127 = scmp.eq.s32.totalorder %s40, 0
      %p128 = por %p126, %p127
      %p129 = scmp.ne.s32.totalorder %s121, %s123
      %p130 = scmp.eq.s32.totalorder %s45, 1
      %p131 = por %p129, %p130
      %p132 = scmp.ne.s32.totalorder %s123, %s124
      %p133 = scmp.eq.s32.totalorder %s45, 0
      %p134 = por %p132, %p133
      %p135 = scmp.ne.s32.totalorder %s123, %s124
      %p136 = scmp.eq.s32.totalorder %s46, 1
      %p137 = por %p135, %p136
      %p139 = scmp.ne.s32.totalorder %s124, %s138
      %p140 = scmp.eq.s32.totalorder %s46, 0
      %p141 = por %p139, %p140
      %s143 = sadd.s32 %s142, 1
      %p146 = scmp.eq.s32.totalorder %s40, 1
      %p147 = scmp.ne.s32.totalorder %s142, %s144
      %p148 = scmp.eq.s32.totalorder %s40, 0
      %p149 = por %p147, %p148
      %p150 = scmp.ne.s32.totalorder %s142, %s144
      %p151 = scmp.eq.s32.totalorder %s45, 1
      %p152 = por %p150, %p151
      %p153 = scmp.ne.s32.totalorder %s144, %s145
      %p154 = scmp.eq.s32.totalorder %s45, 0
      %p155 = por %p153, %p154
      %p156 = scmp.ne.s32.totalorder %s144, %s145
      %p157 = scmp.eq.s32.totalorder %s46, 1
      %p158 = por %p156, %p157
      %p160 = scmp.ne.s32.totalorder %s145, %s159
      %p161 = scmp.eq.s32.totalorder %s46, 0
      %p162 = por %p160, %p161
      %s164 = sadd.s32 %s163, 1
      %p167 = scmp.eq.s32.totalorder %s40, 1
      %p168 = scmp.ne.s32.totalorder %s163, %s165
      %p169 = scmp.eq.s32.totalorder %s40, 0
      %p170 = por %p168, %p169
      %p171 = scmp.ne.s32.totalorder %s163, %s165
      %p172 = scmp.eq.s32.totalorder %s45, 1
      %p173 = por %p171, %p172
      %p174 = scmp.ne.s32.totalorder %s165, %s166
      %p175 = scmp.eq.s32.totalorder %s45, 0
      %p176 = por %p174, %p175
      %p177 = scmp.ne.s32.totalorder %s165, %s166
      %p178 = scmp.eq.s32.totalorder %s46, 1
      %p179 = por %p177, %p178
      %p181 = scmp.ne.s32.totalorder %s166, %s180
      %p182 = scmp.eq.s32.totalorder %s46, 0
      %p183 = por %p181, %p182
      %s185 = sadd.s32 %s184, 1
      %p188 = scmp.eq.s32.totalorder %s40, 1
      %p189 = scmp.ne.s32.totalorder %s184, %s186
      %p190 = scmp.eq.s32.totalorder %s40, 0
      %p191 = por %p189, %p190
      %p192 = scmp.ne.s32.totalorder %s184, %s186
      %p193 = scmp.eq.s32.totalorder %s45, 1
      %p194 = por %p192, %p193
      %p195 = scmp.ne.s32.totalorder %s186, %s187
      %p196 = scmp.eq.s32.totalorder %s45, 0
      %p197 = por %p195, %p196
      %p198 = scmp.ne.s32.totalorder %s186, %s187
      %p199 = scmp.eq.s32.totalorder %s46, 1
      %p200 = por %p198, %p199
      %p202 = scmp.ne.s32.totalorder %s187, %s201
      %p203 = scmp.eq.s32.totalorder %s46, 0
      %p204 = por %p202, %p203
      %s206 = sadd.s32 %s205, 1
      %p209 = scmp.eq.s32.totalorder %s40, 1
      %p210 = scmp.ne.s32.totalorder %s205, %s207
      %p211 = scmp.eq.s32.totalorder %s40, 0
      %p212 = por %p210, %p211
      %p213 = scmp.ne.s32.totalorder %s205, %s207
      %p214 = scmp.eq.s32.totalorder %s45, 1
      %p215 = por %p213, %p214
      %p216 = scmp.ne.s32.totalorder %s207, %s208
      %p217 = scmp.eq.s32.totalorder %s45, 0
      %p218 = por %p216, %p217
      %p219 = scmp.ne.s32.totalorder %s207, %s208
      %p220 = scmp.eq.s32.totalorder %s46, 1
      %p221 = por %p219, %p220
      %p223 = scmp.ne.s32.totalorder %s208, %s222
      %p224 = scmp.eq.s32.totalorder %s46, 0
      %p225 = por %p223, %p224
      %s227 = sadd.s32 %s226, 1
      %p230 = scmp.eq.s32.totalorder %s40, 1
      %p231 = scmp.ne.s32.totalorder %s226, %s228
      %p232 = scmp.eq.s32.totalorder %s40, 0
      %p233 = por %p231, %p232
      %p234 = scmp.ne.s32.totalorder %s226, %s228
      %p235 = scmp.eq.s32.totalorder %s45, 1
      %p236 = por %p234, %p235
      %p237 = scmp.ne.s32.totalorder %s228, %s229
      %p238 = scmp.eq.s32.totalorder %s45, 0
      %p239 = por %p237, %p238
      %p240 = scmp.ne.s32.totalorder %s228, %s229
      %p241 = scmp.eq.s32.totalorder %s46, 1
      %p242 = por %p240, %p241
      %p244 = scmp.ne.s32.totalorder %s229, %s243
      %p245 = scmp.eq.s32.totalorder %s46, 0
      %p246 = por %p244, %p245
      %s248 = sadd.s32 %s247, 1
      %p251 = scmp.eq.s32.totalorder %s40, 1
      %p252 = scmp.ne.s32.totalorder %s247, %s249
      %p253 = scmp.eq.s32.totalorder %s40, 0
      %p254 = por %p252, %p253
      %p255 = scmp.ne.s32.totalorder %s247, %s249
      %p256 = scmp.eq.s32.totalorder %s45, 1
      %p257 = por %p255, %p256
      %p258 = scmp.ne.s32.totalorder %s249, %s250
      %p259 = scmp.eq.s32.totalorder %s45, 0
      %p260 = por %p258, %p259
      %p261 = scmp.ne.s32.totalorder %s249, %s250
      %p262 = scmp.eq.s32.totalorder %s46, 1
      %p263 = por %p261, %p262
      %p265 = scmp.ne.s32.totalorder %s250, %s264
      %p266 = scmp.eq.s32.totalorder %s46, 0
      %p267 = por %p265, %p266
      %s269 = sadd.s32 %s268, 1
      %p272 = scmp.eq.s32.totalorder %s40, 1
      %p273 = scmp.ne.s32.totalorder %s268, %s270
      %p274 = scmp.eq.s32.totalorder %s40, 0
      %p275 = por %p273, %p274
      %p276 = scmp.ne.s32.totalorder %s268, %s270
      %p277 = scmp.eq.s32.totalorder %s45, 1
      %p278 = por %p276, %p277
      %p279 = scmp.ne.s32.totalorder %s270, %s271
      %p280 = scmp.eq.s32.totalorder %s45, 0
      %p281 = por %p279, %p280
      %p282 = scmp.ne.s32.totalorder %s270, %s271
      %p283 = scmp.eq.s32.totalorder %s46, 1
      %p284 = por %p282, %p283
      %p286 = scmp.ne.s32.totalorder %s271, %s285
      %p287 = scmp.eq.s32.totalorder %s46, 0
      %p288 = por %p286, %p287
      %s290 = sadd.s32 %s289, 1
      %p293 = scmp.eq.s32.totalorder %s40, 1
      %p294 = scmp.ne.s32.totalorder %s289, %s291
      %p295 = scmp.eq.s32.totalorder %s40, 0
      %p296 = por %p294, %p295
      %p297 = scmp.ne.s32.totalorder %s289, %s291
      %p298 = scmp.eq.s32.totalorder %s45, 1
      %p299 = por %p297, %p298
      %p300 = scmp.ne.s32.totalorder %s291, %s292
      %p301 = scmp.eq.s32.totalorder %s45, 0
      %p302 = por %p300, %p301
      %p303 = scmp.ne.s32.totalorder %s291, %s292
      %p304 = scmp.eq.s32.totalorder %s46, 1
      %p305 = por %p303, %p304
      %p307 = scmp.ne.s32.totalorder %s292, %s306
      %p308 = scmp.eq.s32.totalorder %s46, 0
      %p309 = por %p307, %p308
      %s311 = sadd.s32 %s310, 1
      %p314 = scmp.eq.s32.totalorder %s40, 1
      %p315 = scmp.ne.s32.totalorder %s310, %s312
      %p316 = scmp.eq.s32.totalorder %s40, 0
      %p317 = por %p315, %p316
      %p318 = scmp.ne.s32.totalorder %s310, %s312
      %p319 = scmp.eq.s32.totalorder %s45, 1
      %p320 = por %p318, %p319
      %p321 = scmp.ne.s32.totalorder %s312, %s313
      %p322 = scmp.eq.s32.totalorder %s45, 0
      %p323 = por %p321, %p322
      %p324 = scmp.ne.s32.totalorder %s312, %s313
      %p325 = scmp.eq.s32.totalorder %s46, 1
      %p326 = por %p324, %p325
      %p328 = scmp.ne.s32.totalorder %s313, %s327
      %p329 = scmp.eq.s32.totalorder %s46, 0
      %p330 = por %p328, %p329
      %s332 = sadd.s32 %s331, 1
      %p335 = scmp.eq.s32.totalorder %s40, 1
      %p336 = scmp.ne.s32.totalorder %s331, %s333
      %p337 = scmp.eq.s32.totalorder %s40, 0
      %p338 = por %p336, %p337
      %p339 = scmp.ne.s32.totalorder %s331, %s333
      %p340 = scmp.eq.s32.totalorder %s45, 1
      %p341 = por %p339, %p340
      %p342 = scmp.ne.s32.totalorder %s333, %s334
      %p343 = scmp.eq.s32.totalorder %s45, 0
      %p344 = por %p342, %p343
      %p345 = scmp.ne.s32.totalorder %s333, %s334
      %p346 = scmp.eq.s32.totalorder %s46, 1
      %p347 = por %p345, %p346
      %p349 = scmp.ne.s32.totalorder %s334, %s348
      %p350 = scmp.eq.s32.totalorder %s46, 0
      %p351 = por %p349, %p350
      %s353 = sadd.s32 %s352, 1
      %p356 = scmp.eq.s32.totalorder %s40, 1
      %p357 = scmp.ne.s32.totalorder %s352, %s354
      %p358 = scmp.eq.s32.totalorder %s40, 0
      %p359 = por %p357, %p358
      %p360 = scmp.ne.s32.totalorder %s352, %s354
      %p361 = scmp.eq.s32.totalorder %s45, 1
      %p362 = por %p360, %p361
      %p363 = scmp.ne.s32.totalorder %s354, %s355
      %p364 = scmp.eq.s32.totalorder %s45, 0
      %p365 = por %p363, %p364
      %p366 = scmp.ne.s32.totalorder %s354, %s355
      %p367 = scmp.eq.s32.totalorder %s46, 1
      %p368 = por %p366, %p367
      %p370 = scmp.ne.s32.totalorder %s355, %s369
      %p371 = scmp.eq.s32.totalorder %s46, 0
      %p372 = por %p370, %p371
      %s374 = sadd.s32 %s373, 1
      %p377 = scmp.eq.s32.totalorder %s40, 1
      %p378 = scmp.ne.s32.totalorder %s373, %s375
      %p379 = scmp.eq.s32.totalorder %s40, 0
      %p380 = por %p378, %p379
      %p381 = scmp.ne.s32.totalorder %s373, %s375
      %p382 = scmp.eq.s32.totalorder %s45, 1
      %p383 = por %p381, %p382
      %p384 = scmp.ne.s32.totalorder %s375, %s376
      %p385 = scmp.eq.s32.totalorder %s45, 0
      %p386 = por %p384, %p385
      %p387 = scmp.ne.s32.totalorder %s375, %s376
      %p388 = scmp.eq.s32.totalorder %s46, 1
      %p389 = por %p387, %p388
      %p391 = scmp.ne.s32.totalorder %s376, %s390
      %p392 = scmp.eq.s32.totalorder %s46, 0
      %p393 = por %p391, %p392
      %s395 = sadd.s32 %s394, 1
      %p398 = scmp.eq.s32.totalorder %s40, 1
      %p399 = scmp.ne.s32.totalorder %s394, %s396
      %p400 = scmp.eq.s32.totalorder %s40, 0
      %p401 = por %p399, %p400
      %p402 = scmp.ne.s32.totalorder %s394, %s396
      %p403 = scmp.eq.s32.totalorder %s45, 1
      %p404 = por %p402, %p403
      %p405 = scmp.ne.s32.totalorder %s396, %s397
      %p406 = scmp.eq.s32.totalorder %s45, 0
      %p407 = por %p405, %p406
      %p408 = scmp.ne.s32.totalorder %s396, %s397
      %p409 = scmp.eq.s32.totalorder %s46, 1
      %p410 = por %p408, %p409
      %p412 = scmp.ne.s32.totalorder %s397, %s411
      %p413 = scmp.eq.s32.totalorder %s46, 0
      %p414 = por %p412, %p413
      %s416 = sadd.s32 %s415, 1
      %p419 = scmp.eq.s32.totalorder %s40, 1
      %p420 = scmp.ne.s32.totalorder %s415, %s417
      %p421 = scmp.eq.s32.totalorder %s40, 0
      %p422 = por %p420, %p421
      %p423 = scmp.ne.s32.totalorder %s415, %s417
      %p424 = scmp.eq.s32.totalorder %s45, 1
      %p425 = por %p423, %p424
      %p426 = scmp.ne.s32.totalorder %s417, %s418
      %p427 = scmp.eq.s32.totalorder %s45, 0
      %p428 = por %p426, %p427
      %p429 = scmp.ne.s32.totalorder %s417, %s418
      %p430 = scmp.eq.s32.totalorder %s46, 1
      %p431 = por %p429, %p430
      %p433 = scmp.ne.s32.totalorder %s418, %s432
      %p434 = scmp.eq.s32.totalorder %s46, 0
      %p435 = por %p433, %p434
      %s437 = sadd.s32 %s436, 1
      %p440 = scmp.eq.s32.totalorder %s40, 1
      %p441 = scmp.ne.s32.totalorder %s436, %s438
      %p442 = scmp.eq.s32.totalorder %s40, 0
      %p443 = por %p441, %p442
      %p444 = scmp.ne.s32.totalorder %s436, %s438
      %p445 = scmp.eq.s32.totalorder %s45, 1
      %p446 = por %p444, %p445
      %p447 = scmp.ne.s32.totalorder %s438, %s439
      %p448 = scmp.eq.s32.totalorder %s45, 0
      %p449 = por %p447, %p448
      %p450 = scmp.ne.s32.totalorder %s438, %s439
      %p451 = scmp.eq.s32.totalorder %s46, 1
      %p452 = por %p450, %p451
      %p454 = scmp.ne.s32.totalorder %s439, %s453
      %p455 = scmp.eq.s32.totalorder %s46, 0
      %p456 = por %p454, %p455
      %s458 = sadd.s32 %s457, 1
      %p461 = scmp.eq.s32.totalorder %s40, 1
      %p462 = scmp.ne.s32.totalorder %s457, %s459
      %p463 = scmp.eq.s32.totalorder %s40, 0
      %p464 = por %p462, %p463
      %p465 = scmp.ne.s32.totalorder %s457, %s459
      %p466 = scmp.eq.s32.totalorder %s45, 1
      %p467 = por %p465, %p466
      %p468 = scmp.ne.s32.totalorder %s459, %s460
      %p469 = scmp.eq.s32.totalorder %s45, 0
      %p470 = por %p468, %p469
      %p471 = scmp.ne.s32.totalorder %s459, %s460
      %p472 = scmp.eq.s32.totalorder %s46, 1
      %p473 = por %p471, %p472
      %p475 = scmp.ne.s32.totalorder %s460, %s474
      %p476 = scmp.eq.s32.totalorder %s46, 0
      %p477 = por %p475, %p476
      %s479 = sadd.s32 %s478, 1
      %p482 = scmp.eq.s32.totalorder %s40, 1
      %p483 = scmp.ne.s32.totalorder %s478, %s480
      %p484 = scmp.eq.s32.totalorder %s40, 0
      %p485 = por %p483, %p484
      %p486 = scmp.ne.s32.totalorder %s478, %s480
      %p487 = scmp.eq.s32.totalorder %s45, 1
      %p488 = por %p486, %p487
      %p489 = scmp.ne.s32.totalorder %s480, %s481
      %p490 = scmp.eq.s32.totalorder %s45, 0
      %p491 = por %p489, %p490
      %p492 = scmp.ne.s32.totalorder %s480, %s481
      %p493 = scmp.eq.s32.totalorder %s46, 1
      %p494 = por %p492, %p493
      %p496 = scmp.ne.s32.totalorder %s481, %s495
      %p497 = scmp.eq.s32.totalorder %s46, 0
      %p498 = por %p496, %p497
      %s500 = sadd.s32 %s499, 1
      %p503 = scmp.eq.s32.totalorder %s40, 1
      %p504 = scmp.ne.s32.totalorder %s499, %s501
      %p505 = scmp.eq.s32.totalorder %s40, 0
      %p506 = por %p504, %p505
      %p507 = scmp.ne.s32.totalorder %s499, %s501
      %p508 = scmp.eq.s32.totalorder %s45, 1
      %p509 = por %p507, %p508
      %p510 = scmp.ne.s32.totalorder %s501, %s502
      %p511 = scmp.eq.s32.totalorder %s45, 0
      %p512 = por %p510, %p511
      %p513 = scmp.ne.s32.totalorder %s501, %s502
      %p514 = scmp.eq.s32.totalorder %s46, 1
      %p515 = por %p513, %p514
      %p517 = scmp.ne.s32.totalorder %s502, %s516
      %p518 = scmp.eq.s32.totalorder %s46, 0
      %p519 = por %p517, %p518
      %s521 = sadd.s32 %s520, 1
      %p524 = scmp.eq.s32.totalorder %s40, 1
      %p525 = scmp.ne.s32.totalorder %s520, %s522
      %p526 = scmp.eq.s32.totalorder %s40, 0
      %p527 = por %p525, %p526
      %p528 = scmp.ne.s32.totalorder %s520, %s522
      %p529 = scmp.eq.s32.totalorder %s45, 1
      %p530 = por %p528, %p529
      %p531 = scmp.ne.s32.totalorder %s522, %s523
      %p532 = scmp.eq.s32.totalorder %s45, 0
      %p533 = por %p531, %p532
      %p534 = scmp.ne.s32.totalorder %s522, %s523
      %p535 = scmp.eq.s32.totalorder %s46, 1
      %p536 = por %p534, %p535
      %p538 = scmp.ne.s32.totalorder %s523, %s537
      %p539 = scmp.eq.s32.totalorder %s46, 0
      %p540 = por %p538, %p539
      %s542 = sadd.s32 %s541, 1
      %p545 = scmp.eq.s32.totalorder %s40, 1
      %p546 = scmp.ne.s32.totalorder %s541, %s543
      %p547 = scmp.eq.s32.totalorder %s40, 0
      %p548 = por %p546, %p547
      %p549 = scmp.ne.s32.totalorder %s541, %s543
      %p550 = scmp.eq.s32.totalorder %s45, 1
      %p551 = por %p549, %p550
      %p552 = scmp.ne.s32.totalorder %s543, %s544
      %p553 = scmp.eq.s32.totalorder %s45, 0
      %p554 = por %p552, %p553
      %p555 = scmp.ne.s32.totalorder %s543, %s544
      %p556 = scmp.eq.s32.totalorder %s46, 1
      %p557 = por %p555, %p556
      %p559 = scmp.ne.s32.totalorder %s544, %s558
      %p560 = scmp.eq.s32.totalorder %s46, 0
      %p561 = por %p559, %p560
      %s562 = ssub.s32 %s40, %s47
      %p563 = scmp.eq.s32.totalorder %s562, 0
      %s565 = sadd.s32 %s564, 1
      %s566 = scalar_select %p563, %s564, %s565
      %p569 = pneg %p563
      %p570 = scmp.eq.s32.totalorder %s40, 1
      %p571 = por %p569, %p570
      %p572 = scmp.ne.s32.totalorder %s564, %s567
      %p573 = scmp.eq.s32.totalorder %s40, 0
      %p574 = por %p572, %p573
      %p575 = scmp.ne.s32.totalorder %s564, %s567
      %p576 = scmp.eq.s32.totalorder %s45, 1
      %p577 = por %p575, %p576
      %p578 = scmp.ne.s32.totalorder %s567, %s568
      %p579 = scmp.eq.s32.totalorder %s45, 0
      %p580 = por %p578, %p579
      %p581 = scmp.ne.s32.totalorder %s567, %s568
      %p582 = scmp.eq.s32.totalorder %s46, 1
      %p583 = por %p581, %p582
      %p585 = scmp.ne.s32.totalorder %s568, %s584
      %p586 = scmp.eq.s32.totalorder %s46, 0
      %p587 = por %p585, %p586
      %s588 = ssub.s32 %s40, %s47
      %p589 = scmp.eq.s32.totalorder %s588, 0
      %s591 = sadd.s32 %s590, 1
      %s592 = scalar_select %p589, %s590, %s591
      %p595 = pneg %p589
      %p596 = scmp.eq.s32.totalorder %s40, 1
      %p597 = por %p595, %p596
      %p598 = scmp.ne.s32.totalorder %s590, %s593
      %p599 = scmp.eq.s32.totalorder %s40, 0
      %p600 = por %p598, %p599
      %p601 = scmp.ne.s32.totalorder %s590, %s593
      %p602 = scmp.eq.s32.totalorder %s45, 1
      %p603 = por %p601, %p602
      %p604 = scmp.ne.s32.totalorder %s593, %s594
      %p605 = scmp.eq.s32.totalorder %s45, 0
      %p606 = por %p604, %p605
      %p607 = scmp.ne.s32.totalorder %s593, %s594
      %p608 = scmp.eq.s32.totalorder %s46, 1
      %p609 = por %p607, %p608
      %p611 = scmp.ne.s32.totalorder %s594, %s610
      %p612 = scmp.eq.s32.totalorder %s46, 0
      %p613 = por %p611, %p612
      %s614 = ssub.s32 %s40, %s47
      %p615 = scmp.eq.s32.totalorder %s614, 0
      %s617 = sadd.s32 %s616, 1
      %s618 = scalar_select %p615, %s616, %s617
      %p621 = pneg %p615
      %p622 = scmp.eq.s32.totalorder %s40, 1
      %p623 = por %p621, %p622
      %p624 = scmp.ne.s32.totalorder %s616, %s619
      %p625 = scmp.eq.s32.totalorder %s40, 0
      %p626 = por %p624, %p625
      %p627 = scmp.ne.s32.totalorder %s616, %s619
      %p628 = scmp.eq.s32.totalorder %s45, 1
      %p629 = por %p627, %p628
      %p630 = scmp.ne.s32.totalorder %s619, %s620
      %p631 = scmp.eq.s32.totalorder %s45, 0
      %p632 = por %p630, %p631
      %p633 = scmp.ne.s32.totalorder %s619, %s620
      %p634 = scmp.eq.s32.totalorder %s46, 1
      %p635 = por %p633, %p634
      %p637 = scmp.ne.s32.totalorder %s620, %s636
      %p638 = scmp.eq.s32.totalorder %s46, 0
      %p639 = por %p637, %p638
      %p640 = scmp.le.s32.totalorder 1, %s40
      %p641 = scmp.lt.s32.totalorder %s40, 3
      %p642 = pnand %p640, %p641
      %p643 = pneg %p642
      // Predicated region
      $region9: #{vae_cnn_forward.1} parent=5 // pred_check
        _
      $region10: #{vae_cnn_forward.1} parent=5 // pred_check_branch
        %645 = sbr.rel (%p642) target = $region12
      $region11: #{vae_cnn_forward.1} parent=5 // pred_region
        %s646 = ssub.s32 %s40, 1
        // Predicated region
        $region13: #{vae_cnn_forward.1} parent=11 // pred_check
          %p647 = pneg %p113
        $region14: #{vae_cnn_forward.1} parent=11 // pred_check_branch
          %649 = sbr.rel (%p647) target = $region16
        $region15: #{vae_cnn_forward.1} parent=11 // pred_region
          _
        $region16: #{vae_cnn_forward.1} parent=11 // pred_fallthru
          _
        // Predicated region
        $region17: #{vae_cnn_forward.1} parent=11 // pred_check
          %p650 = pneg %p134
        $region18: #{vae_cnn_forward.1} parent=11 // pred_check_branch
          %652 = sbr.rel (%p650) target = $region20
        $region19: #{vae_cnn_forward.1} parent=11 // pred_region
          _
        $region20: #{vae_cnn_forward.1} parent=11 // pred_fallthru
          _
        // Predicated region
        $region21: #{vae_cnn_forward.1} parent=11 // pred_check
          %p653 = pneg %p155
        $region22: #{vae_cnn_forward.1} parent=11 // pred_check_branch
          %655 = sbr.rel (%p653) target = $region24
        $region23: #{vae_cnn_forward.1} parent=11 // pred_region
          _
        $region24: #{vae_cnn_forward.1} parent=11 // pred_fallthru
          _
        // Predicated region
        $region25: #{vae_cnn_forward.1} parent=11 // pred_check
          %p656 = pneg %p176
        $region26: #{vae_cnn_forward.1} parent=11 // pred_check_branch
          %658 = sbr.rel (%p656) target = $region28
        $region27: #{vae_cnn_forward.1} parent=11 // pred_region
          _
        $region28: #{vae_cnn_forward.1} parent=11 // pred_fallthru
          _
        // Predicated region
        $region29: #{vae_cnn_forward.1} parent=11 // pred_check
          %p659 = pneg %p197
        $region30: #{vae_cnn_forward.1} parent=11 // pred_check_branch
          %661 = sbr.rel (%p659) target = $region32
        $region31: #{vae_cnn_forward.1} parent=11 // pred_region
          _
        $region32: #{vae_cnn_forward.1} parent=11 // pred_fallthru
          _
        // Predicated region
        $region33: #{vae_cnn_forward.1} parent=11 // pred_check
          %p662 = pneg %p218
        $region34: #{vae_cnn_forward.1} parent=11 // pred_check_branch
          %664 = sbr.rel (%p662) target = $region36
        $region35: #{vae_cnn_forward.1} parent=11 // pred_region
          _
        $region36: #{vae_cnn_forward.1} parent=11 // pred_fallthru
          _
        // Predicated region
        $region37: #{vae_cnn_forward.1} parent=11 // pred_check
          %p665 = pneg %p239
        $region38: #{vae_cnn_forward.1} parent=11 // pred_check_branch
          %667 = sbr.rel (%p665) target = $region40
        $region39: #{vae_cnn_forward.1} parent=11 // pred_region
          _
        $region40: #{vae_cnn_forward.1} parent=11 // pred_fallthru
          _
        // Predicated region
        $region41: #{vae_cnn_forward.1} parent=11 // pred_check
          %p668 = pneg %p260
        $region42: #{vae_cnn_forward.1} parent=11 // pred_check_branch
          %670 = sbr.rel (%p668) target = $region44
        $region43: #{vae_cnn_forward.1} parent=11 // pred_region
          _
        $region44: #{vae_cnn_forward.1} parent=11 // pred_fallthru
          _
        // Predicated region
        $region45: #{vae_cnn_forward.1} parent=11 // pred_check
          %p671 = pneg %p281
        $region46: #{vae_cnn_forward.1} parent=11 // pred_check_branch
          %673 = sbr.rel (%p671) target = $region48
        $region47: #{vae_cnn_forward.1} parent=11 // pred_region
          _
        $region48: #{vae_cnn_forward.1} parent=11 // pred_fallthru
          _
        // Predicated region
        $region49: #{vae_cnn_forward.1} parent=11 // pred_check
          %p674 = pneg %p302
        $region50: #{vae_cnn_forward.1} parent=11 // pred_check_branch
          %676 = sbr.rel (%p674) target = $region52
        $region51: #{vae_cnn_forward.1} parent=11 // pred_region
          _
        $region52: #{vae_cnn_forward.1} parent=11 // pred_fallthru
          _
        // Predicated region
        $region53: #{vae_cnn_forward.1} parent=11 // pred_check
          %p677 = pneg %p323
        $region54: #{vae_cnn_forward.1} parent=11 // pred_check_branch
          %679 = sbr.rel (%p677) target = $region56
        $region55: #{vae_cnn_forward.1} parent=11 // pred_region
          _
        $region56: #{vae_cnn_forward.1} parent=11 // pred_fallthru
          _
        // Predicated region
        $region57: #{vae_cnn_forward.1} parent=11 // pred_check
          %p680 = pneg %p344
        $region58: #{vae_cnn_forward.1} parent=11 // pred_check_branch
          %682 = sbr.rel (%p680) target = $region60
        $region59: #{vae_cnn_forward.1} parent=11 // pred_region
          _
        $region60: #{vae_cnn_forward.1} parent=11 // pred_fallthru
          _
        // Predicated region
        $region61: #{vae_cnn_forward.1} parent=11 // pred_check
          %p683 = pneg %p365
        $region62: #{vae_cnn_forward.1} parent=11 // pred_check_branch
          %685 = sbr.rel (%p683) target = $region64
        $region63: #{vae_cnn_forward.1} parent=11 // pred_region
          _
        $region64: #{vae_cnn_forward.1} parent=11 // pred_fallthru
          _
        // Predicated region
        $region65: #{vae_cnn_forward.1} parent=11 // pred_check
          %p686 = pneg %p386
        $region66: #{vae_cnn_forward.1} parent=11 // pred_check_branch
          %688 = sbr.rel (%p686) target = $region68
        $region67: #{vae_cnn_forward.1} parent=11 // pred_region
          _
        $region68: #{vae_cnn_forward.1} parent=11 // pred_fallthru
          _
        // Predicated region
        $region69: #{vae_cnn_forward.1} parent=11 // pred_check
          %p689 = pneg %p407
        $region70: #{vae_cnn_forward.1} parent=11 // pred_check_branch
          %691 = sbr.rel (%p689) target = $region72
        $region71: #{vae_cnn_forward.1} parent=11 // pred_region
          %693 = vsyncadd [#allocation3], 0
          %s694 = sshll.u32 %s16, 4
          %s695 = int_to_ptr.hbm [resolvable:$true] %s694
          %s696 = sshll.u32 [#allocation2], 4
          %s697 = int_to_ptr.vmem [resolvable:$true] %s696
          %702 = dma.hbm_to_vmem [thread:$0]  %s695, 7168, %s697, [#allocation3], 896, 896, 56
        $region72: #{vae_cnn_forward.1} parent=11 // pred_fallthru
          _
        // Predicated region
        $region73: #{vae_cnn_forward.1} parent=11 // pred_check
          %p703 = pneg %p428
        $region74: #{vae_cnn_forward.1} parent=11 // pred_check_branch
          %705 = sbr.rel (%p703) target = $region76
        $region75: #{vae_cnn_forward.1} parent=11 // pred_region
          _
        $region76: #{vae_cnn_forward.1} parent=11 // pred_fallthru
          _
        // Predicated region
        $region77: #{vae_cnn_forward.1} parent=11 // pred_check
          %p706 = pneg %p449
        $region78: #{vae_cnn_forward.1} parent=11 // pred_check_branch
          %708 = sbr.rel (%p706) target = $region80
        $region79: #{vae_cnn_forward.1} parent=11 // pred_region
          _
        $region80: #{vae_cnn_forward.1} parent=11 // pred_fallthru
          _
        // Predicated region
        $region81: #{vae_cnn_forward.1} parent=11 // pred_check
          %p709 = pneg %p470
        $region82: #{vae_cnn_forward.1} parent=11 // pred_check_branch
          %711 = sbr.rel (%p709) target = $region84
        $region83: #{vae_cnn_forward.1} parent=11 // pred_region
          _
        $region84: #{vae_cnn_forward.1} parent=11 // pred_fallthru
          _
        // Predicated region
        $region85: #{vae_cnn_forward.1} parent=11 // pred_check
          %p712 = pneg %p491
        $region86: #{vae_cnn_forward.1} parent=11 // pred_check_branch
          %714 = sbr.rel (%p712) target = $region88
        $region87: #{vae_cnn_forward.1} parent=11 // pred_region
          _
        $region88: #{vae_cnn_forward.1} parent=11 // pred_fallthru
          _
        // Predicated region
        $region89: #{vae_cnn_forward.1} parent=11 // pred_check
          %p715 = pneg %p512
        $region90: #{vae_cnn_forward.1} parent=11 // pred_check_branch
          %717 = sbr.rel (%p715) target = $region92
        $region91: #{vae_cnn_forward.1} parent=11 // pred_region
          _
        $region92: #{vae_cnn_forward.1} parent=11 // pred_fallthru
          _
        // Predicated region
        $region93: #{vae_cnn_forward.1} parent=11 // pred_check
          %p718 = pneg %p533
        $region94: #{vae_cnn_forward.1} parent=11 // pred_check_branch
          %720 = sbr.rel (%p718) target = $region96
        $region95: #{vae_cnn_forward.1} parent=11 // pred_region
          _
        $region96: #{vae_cnn_forward.1} parent=11 // pred_fallthru
          _
        // Predicated region
        $region97: #{vae_cnn_forward.1} parent=11 // pred_check
          %p721 = pneg %p554
        $region98: #{vae_cnn_forward.1} parent=11 // pred_check_branch
          %723 = sbr.rel (%p721) target = $region100
        $region99: #{vae_cnn_forward.1} parent=11 // pred_region
          _
        $region100: #{vae_cnn_forward.1} parent=11 // pred_fallthru
          _
      $region12: #{vae_cnn_forward.1} parent=5 // pred_fallthru
        _
      %p724 = scmp.lt.s32.totalorder %s40, 2
      // Predicated region
      $region101: #{vae_cnn_forward.1} parent=5 // pred_check
        %p725 = pneg %p724
      $region102: #{vae_cnn_forward.1} parent=5 // pred_check_branch
        %727 = sbr.rel (%p725) target = $region104
      $region103: #{vae_cnn_forward.1} parent=5 // pred_region
        // Predicated region
        $region105: #{vae_cnn_forward.1} parent=103 // pred_check
          %p728 = pneg %p60
        $region106: #{vae_cnn_forward.1} parent=103 // pred_check_branch
          %730 = sbr.rel (%p728) target = $region108
        $region107: #{vae_cnn_forward.1} parent=103 // pred_region
          %p731 = scmp.lt.s32.totalorder %s40, 1
          %s732 = scalar_select %p731, %s40, 1
          %s733 = smul.addr %s732, 4
          %s734 = smul.addr %s733, 4
          %s735 = scalar_lea.vmem %s0, %s734
        $region108: #{vae_cnn_forward.1} parent=103 // pred_fallthru
          _
        // Predicated region
        $region109: #{vae_cnn_forward.1} parent=103 // pred_check
          %p736 = pneg %p86
        $region110: #{vae_cnn_forward.1} parent=103 // pred_check_branch
          %738 = sbr.rel (%p736) target = $region112
        $region111: #{vae_cnn_forward.1} parent=103 // pred_region
          %p739 = scmp.lt.s32.totalorder %s40, 1
          %s740 = scalar_select %p739, %s40, 1
          %s741 = smul.addr %s740, 2
          %s742 = scalar_lea.vmem %s1, %s741
        $region112: #{vae_cnn_forward.1} parent=103 // pred_fallthru
          _
      $region104: #{vae_cnn_forward.1} parent=5 // pred_fallthru
        _
      %p743 = scmp.le.s32.totalorder 1, %s40
      %p744 = scmp.lt.s32.totalorder %s40, 3
      %p745 = pnand %p743, %p744
      %p746 = pneg %p745
      // Predicated region
      $region113: #{vae_cnn_forward.1} parent=5 // pred_check
        _
      $region114: #{vae_cnn_forward.1} parent=5 // pred_check_branch
        %748 = sbr.rel (%p745) target = $region116
      $region115: #{vae_cnn_forward.1} parent=5 // pred_region
        %s749 = ssub.s32 %s40, 1
        // Predicated region
        $region117: #{vae_cnn_forward.1} parent=115 // pred_check
          %p750 = pneg %p407
        $region118: #{vae_cnn_forward.1} parent=115 // pred_check_branch
          %752 = sbr.rel (%p750) target = $region120
        $region119: #{vae_cnn_forward.1} parent=115 // pred_region
          %754 = dma.done [#allocation3], 7168
        $region120: #{vae_cnn_forward.1} parent=115 // pred_fallthru
          _
        %p755 = scmp.lt.s32.totalorder %s45, 1
        %s756 = scalar_select %p755, %s45, 1
        %s757 = smul.addr %s756, 4
        %s758 = smul.addr %s757, 4
        %s759 = scalar_lea.vmem %s0, %s758
        %p760 = pneg %p66
        %p761 = pneg %p63
        %p762 = scmp.lt.s32.totalorder %s45, 1
        %s763 = scalar_select %p762, %s45, 1
        %s764 = smul.addr %s763, 2
        %s765 = scalar_lea.vmem %s1, %s764
        %p766 = pneg %p92
        %p767 = pneg %p89
        %p768 = pneg %p113
        %p769 = pneg %p110
        %p770 = pneg %p134
        %p771 = pneg %p131
        %p772 = pneg %p155
        %p773 = pneg %p152
        %p774 = pneg %p176
        %p775 = pneg %p173
        %p776 = pneg %p197
        %p777 = pneg %p194
        %p778 = pneg %p218
        %p779 = pneg %p215
        %p780 = pneg %p239
        %p781 = pneg %p236
        %p782 = pneg %p260
        %p783 = pneg %p257
        %p784 = pneg %p281
        %p785 = pneg %p278
        %p786 = pneg %p302
        %p787 = pneg %p299
        %p788 = pneg %p323
        %p789 = pneg %p320
        %p790 = pneg %p344
        %p791 = pneg %p341
        %p792 = pneg %p365
        %p793 = pneg %p362
        %p794 = pneg %p386
        %p795 = pneg %p383
        %p796 = pneg %p407
        %p797 = pneg %p404
        %p798 = pneg %p428
        %p799 = pneg %p425
        %p800 = pneg %p449
        %p801 = pneg %p446
        %p802 = pneg %p470
        %p803 = pneg %p467
        %p804 = pneg %p491
        %p805 = pneg %p488
        %p806 = pneg %p512
        %p807 = pneg %p509
        %p808 = pneg %p533
        %p809 = pneg %p530
        %p810 = pneg %p554
        %p811 = pneg %p551
        %p812 = pneg %p580
        %p813 = pneg %p577
        %p814 = scmp.lt.s32.totalorder %s45, 1
        %s815 = scalar_select %p814, %s45, 1
        %s816 = smul.addr %s815, 8
        %s817 = smul.addr %s816, 8
        %s818 = scalar_lea.vmem %s24, %s817
        %p819 = pneg %p606
        %p820 = pneg %p603
        %s821 = sand.u32 %s593, 1
        %s822 = scalar_lea.sflag [#allocation4], %s821
        %s823 = sand.u32 %s593, 1
        %s824 = smul.addr %s823, 2
        %s825 = scalar_lea.vmem [#allocation5], %s824
        %p826 = pneg %p632
        %p827 = pneg %p629
        %s828 = sand.u32 %s619, 1
        %s829 = scalar_lea.sflag [#allocation7], %s828
        %s830 = sand.u32 %s619, 1
        %s831 = smul.addr %s830, 2
        %s832 = scalar_lea.vmem [#allocation6], %s831
        %p833 = scmp.lt.s32.totalorder %s45, 1
        %s834 = scalar_select %p833, %s45, 1
        %s835 = smul.addr %s834, 4
        %s836 = smul.addr %s835, 4
        %s837 = scalar_lea.vmem %s0, %s836
        %p838 = scmp.lt.s32.totalorder %s45, 1
        %s839 = scalar_select %p838, %s45, 1
        %s840 = smul.addr %s839, 2
        %s841 = scalar_lea.vmem %s1, %s840
        %p842 = scmp.lt.s32.totalorder %s45, 1
        %s843 = scalar_select %p842, %s45, 1
        %s844 = smul.addr %s843, 8
        %s845 = smul.addr %s844, 8
        %s846 = scalar_lea.vmem %s24, %s845
        %v848 = vld [vmem:[%s837] sm:$0xf]
        %v849 = vld [vmem:[%s837 + $0x4] sm:$0xf]
        %v850 = vld [vmem:[%s837 + $0x8] sm:$0xf]
        %v851 = vld [vmem:[%s837 + $0xc] sm:$0x3]
        %v852 = vld [vmem:[%s2] sm:$0xff]
        %v853 = vld [vmem:[%s2 + $0x8] sm:$0xff]
        %v854 = vld [vmem:[%s2 + $0x10] sm:$0xff]
        %v855 = vld [vmem:[%s2 + $0x18] sm:$0xff]
        %v856 = vld [vmem:[%s2 + $0x20] sm:$0xff]
        %v857 = vld [vmem:[%s2 + $0x28] sm:$0xff]
        %v858 = vld [vmem:[%s2 + $0x30] sm:$0xff]
        %v859 = vld [vmem:[%s2 + $0x38] sm:$0xff]
        %v860 = vld [vmem:[%s2 + $0x40] sm:$0xff]
        %v861 = vld [vmem:[%s2 + $0x48] sm:$0xff]
        %v862 = vld [vmem:[%s2 + $0x50] sm:$0x33]
        %v863 = vld [vmem:[%s3] sm:$0x3]
        %v865 = vperm.slane %v863, 0
        %v866 = vperm.slane %v863, 1
        %v873 = vunpack.c.l.b16 %v848
        %v874 = vunpack.c.l.b16 %v849
        %v875 = vunpack.c.l.b16 %v850
        %v876 = vunpack.c.l.b16 %v851
        %v877 = vpack.c.b16 %v874, %v873
        %v878 = vpack.c.b16 %v876, %v875
        %v890 = vunpack.c.l.b16 %v852
        %v891 = vunpack.c.h.b16 %v852
        %v892 = vunpack.c.l.b16 %v853
        %v893 = vunpack.c.h.b16 %v853
        %v894 = vunpack.c.l.b16 %v854
        %v895 = vunpack.c.h.b16 %v854
        %v896 = vunpack.c.l.b16 %v855
        %v897 = vunpack.c.h.b16 %v855
        %v898 = vunpack.c.l.b16 %v856
        %v899 = vunpack.c.h.b16 %v856
        %v900 = vunpack.c.l.b16 %v857
        %v901 = vunpack.c.h.b16 %v857
        %v902 = vunpack.c.l.b16 %v858
        %v903 = vunpack.c.h.b16 %v858
        %v904 = vunpack.c.l.b16 %v859
        %v905 = vunpack.c.h.b16 %v859
        %v906 = vunpack.c.l.b16 %v860
        %v907 = vunpack.c.h.b16 %v860
        %v908 = vunpack.c.l.b16 %v861
        %v909 = vunpack.c.h.b16 %v861
        %v910 = vunpack.c.l.b16 %v862
        %v911 = vunpack.c.h.b16 %v862
        %v912 = vpack.c.b16 %v892, %v890
        %v913 = vpack.c.b16 %v893, %v891
        %v914 = vpack.c.b16 %v896, %v894
        %v915 = vpack.c.b16 %v897, %v895
        %v916 = vpack.c.b16 %v900, %v898
        %v917 = vpack.c.b16 %v901, %v899
        %v918 = vpack.c.b16 %v904, %v902
        %v919 = vpack.c.b16 %v905, %v903
        %v920 = vpack.c.b16 %v908, %v906
        %v921 = vpack.c.b16 %v909, %v907
        %v922 = vpack.c.b16 %v910, %v910
        %v923 = vpack.c.b16 %v911, %v911
        %vm934 = vcmask 687104
        %v936 = vsel %vm934, %v877, 0
        %v939 = vsel %vm934, %v878, 0
        %vm941 = vcmask 1041408
        %v943 = vsel %vm941, %v922, 0
        %v946 = vsel %vm941, %v923, 0
        %948 = vmatpush.bf16.msra.mxu0 0
        %949 = vmatpush.bf16.msra.mxu0 0
        %950 = vmatpush.bf16.msra.mxu0 %v943
        %951 = vmatpush.bf16.msra.mxu0 %v920
        %952 = vmatpush.bf16.msra.mxu0 %v918
        %953 = vmatpush.bf16.msra.mxu0 %v916
        %954 = vmatpush.bf16.msra.mxu0 %v914
        %955 = vmatpush.bf16.msra.mxu0 %v912
        %956 = vmatmul.bf16.gmra.mxu0 %v936
        %v957 = vpop.f32.mrf.mxu0
        %v958 = vadd.f32 %v865, %v957
        %v959 = vpop.f32.mrf.mxu0
        %v960 = vadd.f32 %v865, %v959
        %961 = vmatmul.bf16.gmra.mxu0 %v939
        %v962 = vpop.f32.mrf.mxu0
        %v963 = vadd.f32 %v865, %v962
        %v964 = vpop.f32.mrf.mxu0
        %v965 = vadd.f32 %v865, %v964
        %966 = vdwg.mxu0
        %967 = vmatpush.bf16.msra.mxu0 0
        %968 = vmatpush.bf16.msra.mxu0 0
        %969 = vmatpush.bf16.msra.mxu0 %v946
        %970 = vmatpush.bf16.msra.mxu0 %v921
        %971 = vmatpush.bf16.msra.mxu0 %v919
        %972 = vmatpush.bf16.msra.mxu0 %v917
        %973 = vmatpush.bf16.msra.mxu0 %v915
        %974 = vmatpush.bf16.msra.mxu0 %v913
        %975 = vmatmul.bf16.gmra.mxu0 %v936
        %v976 = vpop.f32.mrf.mxu0
        %v977 = vadd.f32 %v866, %v976
        %v978 = vpop.f32.mrf.mxu0
        %v979 = vadd.f32 %v866, %v978
        %980 = vmatmul.bf16.gmra.mxu0 %v939
        %v981 = vpop.f32.mrf.mxu0
        %v982 = vadd.f32 %v866, %v981
        %v983 = vpop.f32.mrf.mxu0
        %v984 = vadd.f32 %v866, %v983
        %985 = vdwg.mxu0
        %v986 = vmax.f32 %v958, 0.0
        %v987 = vmax.f32 %v977, 0.0
        %v988 = vmax.f32 %v960, 0.0
        %v989 = vmax.f32 %v979, 0.0
        %v990 = vmax.f32 %v963, 0.0
        %v991 = vmax.f32 %v982, 0.0
        %v992 = vmax.f32 %v965, 0.0
        %v993 = vmax.f32 %v984, 0.0
        %vm1000 = vcmask 1043456
        %v1001 = vrot.slane %v988, 4
        %v1002 = vrot.slane %v990, 4
        %v1003 = vsel %vm1000, %v1001, %v1002
        %v1004 = vrot.slane %v989, 4
        %v1005 = vrot.slane %v991, 4
        %v1006 = vsel %vm1000, %v1004, %v1005
        %v1007 = vrot.slane %v992, 4
        %v1008 = vsel %vm1000, %v1002, %v1007
        %v1009 = vrot.slane %v993, 4
        %v1010 = vsel %vm1000, %v1005, %v1009
        %v1015 = vsel %vm941, 0.0, %v1003
        %v1016 = vsel %vm941, 0.0, %v1006
        %v1017 = vrot.slane %v988, 6
        %v1018 = vrot.slane %v990, 6
        %v1019 = vsel %vm941, %v1017, %v1018
        %v1020 = vrot.slane %v989, 6
        %v1021 = vrot.slane %v991, 6
        %v1022 = vsel %vm941, %v1020, %v1021
        %v1023 = vrot.slane %v992, 6
        %v1024 = vsel %vm941, %v1018, %v1023
        %v1025 = vrot.slane %v993, 6
        %v1026 = vsel %vm941, %v1021, %v1025
        %v1031 = vpack.c.bf16 %v1008, %v1015
        %v1032 = vpack.c.bf16 %v1010, %v1016
        %v1033 = vpack.c.bf16 %v988, %v986
        %v1034 = vpack.c.bf16 %v989, %v987
        %v1035 = vpack.c.bf16 %v1024, %v1019
        %v1036 = vpack.c.bf16 %v1026, %v1022
        %v1037 = vld [vmem:[%s4] sm:$0xff]
        %v1038 = vld [vmem:[%s4 + $0x8] sm:$0xff]
        %v1039 = vld [vmem:[%s4 + $0x10] sm:$0xff]
        %v1040 = vld [vmem:[%s4 + $0x18] sm:$0xff]
        %v1041 = vld [vmem:[%s4 + $0x20] sm:$0xff]
        %v1042 = vld [vmem:[%s4 + $0x28] sm:$0xff]
        %v1043 = vld [vmem:[%s4 + $0x30] sm:$0xff]
        %v1044 = vld [vmem:[%s4 + $0x38] sm:$0xff]
        %v1045 = vld [vmem:[%s4 + $0x40] sm:$0xff]
        %v1046 = vld [vmem:[%s4 + $0x48] sm:$0xff]
        %v1047 = vld [vmem:[%s4 + $0x50] sm:$0xff]
        %v1048 = vld [vmem:[%s4 + $0x58] sm:$0xff]
        %v1049 = vld [vmem:[%s4 + $0x60] sm:$0xff]
        %v1050 = vld [vmem:[%s4 + $0x68] sm:$0xff]
        %v1051 = vld [vmem:[%s4 + $0x70] sm:$0xff]
        %v1052 = vld [vmem:[%s4 + $0x78] sm:$0xff]
        %v1053 = vld [vmem:[%s4 + $0x80] sm:$0xff]
        %v1054 = vld [vmem:[%s4 + $0x88] sm:$0xff]
        %v1055 = vld [vmem:[%s4 + $0x90] sm:$0xff]
        %v1056 = vld [vmem:[%s4 + $0x98] sm:$0xff]
        %v1057 = vld [vmem:[%s4 + $0xa0] sm:$0xff]
        %v1058 = vld [vmem:[%s4 + $0xa8] sm:$0xff]
        %v1059 = vld [vmem:[%s4 + $0xb0] sm:$0xff]
        %v1060 = vld [vmem:[%s4 + $0xb8] sm:$0xff]
        %v1061 = vld [vmem:[%s4 + $0xc0] sm:$0xff]
        %v1062 = vld [vmem:[%s4 + $0xc8] sm:$0xff]
        %v1063 = vld [vmem:[%s4 + $0xd0] sm:$0xff]
        %v1064 = vld [vmem:[%s4 + $0xd8] sm:$0xff]
        %v1065 = vld [vmem:[%s4 + $0xe0] sm:$0xff]
        %v1066 = vld [vmem:[%s4 + $0xe8] sm:$0xff]
        %v1067 = vld [vmem:[%s4 + $0xf0] sm:$0xff]
        %v1068 = vld [vmem:[%s4 + $0xf8] sm:$0xff]
        %v1069 = vld [vmem:[%s4 + $0x100] sm:$0xff]
        %v1070 = vld [vmem:[%s4 + $0x108] sm:$0xff]
        %v1071 = vld [vmem:[%s4 + $0x110] sm:$0xff]
        %v1072 = vld [vmem:[%s4 + $0x118] sm:$0xff]
        %v1073 = vld [vmem:[%s4 + $0x120] sm:$0xff]
        %v1074 = vld [vmem:[%s4 + $0x128] sm:$0xff]
        %v1075 = vld [vmem:[%s4 + $0x130] sm:$0xff]
        %v1076 = vld [vmem:[%s4 + $0x138] sm:$0xff]
        %v1077 = vld [vmem:[%s4 + $0x140] sm:$0xff]
        %v1078 = vld [vmem:[%s4 + $0x148] sm:$0xff]
        %v1079 = vld [vmem:[%s4 + $0x150] sm:$0xff]
        %v1080 = vld [vmem:[%s4 + $0x158] sm:$0xff]
        %v1081 = vld [vmem:[%s4 + $0x160] sm:$0xff]
        %v1082 = vld [vmem:[%s4 + $0x168] sm:$0xff]
        %v1083 = vld [vmem:[%s4 + $0x170] sm:$0xff]
        %v1084 = vld [vmem:[%s4 + $0x178] sm:$0xff]
        %v1085 = vld [vmem:[%s4 + $0x180] sm:$0xff]
        %v1086 = vld [vmem:[%s4 + $0x188] sm:$0xff]
        %v1087 = vld [vmem:[%s4 + $0x190] sm:$0xff]
        %v1088 = vld [vmem:[%s4 + $0x198] sm:$0xff]
        %v1089 = vld [vmem:[%s4 + $0x1a0] sm:$0xff]
        %v1090 = vld [vmem:[%s4 + $0x1a8] sm:$0xff]
        %v1091 = vld [vmem:[%s4 + $0x1b0] sm:$0xff]
        %v1092 = vld [vmem:[%s4 + $0x1b8] sm:$0xff]
        %v1093 = vld [vmem:[%s4 + $0x1c0] sm:$0xff]
        %v1094 = vld [vmem:[%s4 + $0x1c8] sm:$0xff]
        %v1095 = vld [vmem:[%s4 + $0x1d0] sm:$0xff]
        %v1096 = vld [vmem:[%s4 + $0x1d8] sm:$0xff]
        %v1097 = vld [vmem:[%s4 + $0x1e0] sm:$0xff]
        %v1098 = vld [vmem:[%s4 + $0x1e8] sm:$0xff]
        %v1099 = vld [vmem:[%s4 + $0x1f0] sm:$0xff]
        %v1100 = vld [vmem:[%s4 + $0x1f8] sm:$0xff]
        %v1101 = vld [vmem:[%s4 + $0x200] sm:$0xff]
        %v1102 = vld [vmem:[%s4 + $0x208] sm:$0xff]
        %v1103 = vld [vmem:[%s4 + $0x210] sm:$0xff]
        %v1104 = vld [vmem:[%s4 + $0x218] sm:$0xff]
        %v1105 = vld [vmem:[%s4 + $0x220] sm:$0xff]
        %v1106 = vld [vmem:[%s4 + $0x228] sm:$0xff]
        %v1107 = vld [vmem:[%s4 + $0x230] sm:$0xff]
        %v1108 = vld [vmem:[%s4 + $0x238] sm:$0xff]
        %v1109 = vld [vmem:[%s4 + $0x240] sm:$0xff]
        %v1110 = vld [vmem:[%s4 + $0x248] sm:$0xff]
        %v1111 = vld [vmem:[%s4 + $0x250] sm:$0xff]
        %v1112 = vld [vmem:[%s4 + $0x258] sm:$0xff]
        %v1113 = vld [vmem:[%s4 + $0x260] sm:$0xff]
        %v1114 = vld [vmem:[%s4 + $0x268] sm:$0xff]
        %v1115 = vld [vmem:[%s4 + $0x270] sm:$0xff]
        %v1116 = vld [vmem:[%s4 + $0x278] sm:$0xff]
        %v1117 = vld [vmem:[%s4 + $0x280] sm:$0xff]
        %v1118 = vld [vmem:[%s4 + $0x288] sm:$0xff]
        %v1119 = vld [vmem:[%s4 + $0x290] sm:$0xff]
        %v1120 = vld [vmem:[%s4 + $0x298] sm:$0xff]
        %v1121 = vld [vmem:[%s4 + $0x2a0] sm:$0xff]
        %v1122 = vld [vmem:[%s4 + $0x2a8] sm:$0xff]
        %v1123 = vld [vmem:[%s4 + $0x2b0] sm:$0xff]
        %v1124 = vld [vmem:[%s4 + $0x2b8] sm:$0xff]
        %v1125 = vld [vmem:[%s4 + $0x2c0] sm:$0xff]
        %v1126 = vld [vmem:[%s4 + $0x2c8] sm:$0xff]
        %v1127 = vld [vmem:[%s4 + $0x2d0] sm:$0xff]
        %v1128 = vld [vmem:[%s4 + $0x2d8] sm:$0xff]
        %v1129 = vld [vmem:[%s4 + $0x2e0] sm:$0xff]
        %v1130 = vld [vmem:[%s4 + $0x2e8] sm:$0xff]
        %v1131 = vld [vmem:[%s4 + $0x2f0] sm:$0xff]
        %v1132 = vld [vmem:[%s4 + $0x2f8] sm:$0xff]
        %v1133 = vld [vmem:[%s5] sm:$0x3]
        %v1135 = vperm.slane %v1133, 0
        %v1136 = vperm.slane %v1133, 1
        %v1235 = vunpack.c.l.b16 %v1037
        %v1236 = vunpack.c.h.b16 %v1037
        %v1237 = vunpack.c.l.b16 %v1038
        %v1238 = vunpack.c.h.b16 %v1038
        %v1239 = vunpack.c.l.b16 %v1039
        %v1240 = vunpack.c.h.b16 %v1039
        %v1241 = vunpack.c.l.b16 %v1040
        %v1242 = vunpack.c.h.b16 %v1040
        %v1243 = vunpack.c.l.b16 %v1041
        %v1244 = vunpack.c.h.b16 %v1041
        %v1245 = vunpack.c.l.b16 %v1042
        %v1246 = vunpack.c.h.b16 %v1042
        %v1247 = vunpack.c.l.b16 %v1043
        %v1248 = vunpack.c.h.b16 %v1043
        %v1249 = vunpack.c.l.b16 %v1044
        %v1250 = vunpack.c.h.b16 %v1044
        %v1251 = vunpack.c.l.b16 %v1045
        %v1252 = vunpack.c.h.b16 %v1045
        %v1253 = vunpack.c.l.b16 %v1046
        %v1254 = vunpack.c.h.b16 %v1046
        %v1255 = vunpack.c.l.b16 %v1047
        %v1256 = vunpack.c.h.b16 %v1047
        %v1257 = vunpack.c.l.b16 %v1048
        %v1258 = vunpack.c.h.b16 %v1048
        %v1259 = vunpack.c.l.b16 %v1049
        %v1260 = vunpack.c.h.b16 %v1049
        %v1261 = vunpack.c.l.b16 %v1050
        %v1262 = vunpack.c.h.b16 %v1050
        %v1263 = vunpack.c.l.b16 %v1051
        %v1264 = vunpack.c.h.b16 %v1051
        %v1265 = vunpack.c.l.b16 %v1052
        %v1266 = vunpack.c.h.b16 %v1052
        %v1267 = vunpack.c.l.b16 %v1053
        %v1268 = vunpack.c.h.b16 %v1053
        %v1269 = vunpack.c.l.b16 %v1054
        %v1270 = vunpack.c.h.b16 %v1054
        %v1271 = vunpack.c.l.b16 %v1055
        %v1272 = vunpack.c.h.b16 %v1055
        %v1273 = vunpack.c.l.b16 %v1056
        %v1274 = vunpack.c.h.b16 %v1056
        %v1275 = vunpack.c.l.b16 %v1057
        %v1276 = vunpack.c.h.b16 %v1057
        %v1277 = vunpack.c.l.b16 %v1058
        %v1278 = vunpack.c.h.b16 %v1058
        %v1279 = vunpack.c.l.b16 %v1059
        %v1280 = vunpack.c.h.b16 %v1059
        %v1281 = vunpack.c.l.b16 %v1060
        %v1282 = vunpack.c.h.b16 %v1060
        %v1283 = vunpack.c.l.b16 %v1061
        %v1284 = vunpack.c.h.b16 %v1061
        %v1285 = vunpack.c.l.b16 %v1062
        %v1286 = vunpack.c.h.b16 %v1062
        %v1287 = vunpack.c.l.b16 %v1063
        %v1288 = vunpack.c.h.b16 %v1063
        %v1289 = vunpack.c.l.b16 %v1064
        %v1290 = vunpack.c.h.b16 %v1064
        %v1291 = vunpack.c.l.b16 %v1065
        %v1292 = vunpack.c.h.b16 %v1065
        %v1293 = vunpack.c.l.b16 %v1066
        %v1294 = vunpack.c.h.b16 %v1066
        %v1295 = vunpack.c.l.b16 %v1067
        %v1296 = vunpack.c.h.b16 %v1067
        %v1297 = vunpack.c.l.b16 %v1068
        %v1298 = vunpack.c.h.b16 %v1068
        %v1299 = vunpack.c.l.b16 %v1069
        %v1300 = vunpack.c.h.b16 %v1069
        %v1301 = vunpack.c.l.b16 %v1070
        %v1302 = vunpack.c.h.b16 %v1070
        %v1303 = vunpack.c.l.b16 %v1071
        %v1304 = vunpack.c.h.b16 %v1071
        %v1305 = vunpack.c.l.b16 %v1072
        %v1306 = vunpack.c.h.b16 %v1072
        %v1307 = vunpack.c.l.b16 %v1073
        %v1308 = vunpack.c.h.b16 %v1073
        %v1309 = vunpack.c.l.b16 %v1074
        %v1310 = vunpack.c.h.b16 %v1074
        %v1311 = vunpack.c.l.b16 %v1075
        %v1312 = vunpack.c.h.b16 %v1075
        %v1313 = vunpack.c.l.b16 %v1076
        %v1314 = vunpack.c.h.b16 %v1076
        %v1315 = vunpack.c.l.b16 %v1077
        %v1316 = vunpack.c.h.b16 %v1077
        %v1317 = vunpack.c.l.b16 %v1078
        %v1318 = vunpack.c.h.b16 %v1078
        %v1319 = vunpack.c.l.b16 %v1079
        %v1320 = vunpack.c.h.b16 %v1079
        %v1321 = vunpack.c.l.b16 %v1080
        %v1322 = vunpack.c.h.b16 %v1080
        %v1323 = vunpack.c.l.b16 %v1081
        %v1324 = vunpack.c.h.b16 %v1081
        %v1325 = vunpack.c.l.b16 %v1082
        %v1326 = vunpack.c.h.b16 %v1082
        %v1327 = vunpack.c.l.b16 %v1083
        %v1328 = vunpack.c.h.b16 %v1083
        %v1329 = vunpack.c.l.b16 %v1084
        %v1330 = vunpack.c.h.b16 %v1084
        %v1331 = vunpack.c.l.b16 %v1085
        %v1332 = vunpack.c.h.b16 %v1085
        %v1333 = vunpack.c.l.b16 %v1086
        %v1334 = vunpack.c.h.b16 %v1086
        %v1335 = vunpack.c.l.b16 %v1087
        %v1336 = vunpack.c.h.b16 %v1087
        %v1337 = vunpack.c.l.b16 %v1088
        %v1338 = vunpack.c.h.b16 %v1088
        %v1339 = vunpack.c.l.b16 %v1089
        %v1340 = vunpack.c.h.b16 %v1089
        %v1341 = vunpack.c.l.b16 %v1090
        %v1342 = vunpack.c.h.b16 %v1090
        %v1343 = vunpack.c.l.b16 %v1091
        %v1344 = vunpack.c.h.b16 %v1091
        %v1345 = vunpack.c.l.b16 %v1092
        %v1346 = vunpack.c.h.b16 %v1092
        %v1347 = vunpack.c.l.b16 %v1093
        %v1348 = vunpack.c.h.b16 %v1093
        %v1349 = vunpack.c.l.b16 %v1094
        %v1350 = vunpack.c.h.b16 %v1094
        %v1351 = vunpack.c.l.b16 %v1095
        %v1352 = vunpack.c.h.b16 %v1095
        %v1353 = vunpack.c.l.b16 %v1096
        %v1354 = vunpack.c.h.b16 %v1096
        %v1355 = vunpack.c.l.b16 %v1097
        %v1356 = vunpack.c.h.b16 %v1097
        %v1357 = vunpack.c.l.b16 %v1098
        %v1358 = vunpack.c.h.b16 %v1098
        %v1359 = vunpack.c.l.b16 %v1099
        %v1360 = vunpack.c.h.b16 %v1099
        %v1361 = vunpack.c.l.b16 %v1100
        %v1362 = vunpack.c.h.b16 %v1100
        %v1363 = vunpack.c.l.b16 %v1101
        %v1364 = vunpack.c.h.b16 %v1101
        %v1365 = vunpack.c.l.b16 %v1102
        %v1366 = vunpack.c.h.b16 %v1102
        %v1367 = vunpack.c.l.b16 %v1103
        %v1368 = vunpack.c.h.b16 %v1103
        %v1369 = vunpack.c.l.b16 %v1104
        %v1370 = vunpack.c.h.b16 %v1104
        %v1371 = vunpack.c.l.b16 %v1105
        %v1372 = vunpack.c.h.b16 %v1105
        %v1373 = vunpack.c.l.b16 %v1106
        %v1374 = vunpack.c.h.b16 %v1106
        %v1375 = vunpack.c.l.b16 %v1107
        %v1376 = vunpack.c.h.b16 %v1107
        %v1377 = vunpack.c.l.b16 %v1108
        %v1378 = vunpack.c.h.b16 %v1108
        %v1379 = vunpack.c.l.b16 %v1109
        %v1380 = vunpack.c.h.b16 %v1109
        %v1381 = vunpack.c.l.b16 %v1110
        %v1382 = vunpack.c.h.b16 %v1110
        %v1383 = vunpack.c.l.b16 %v1111
        %v1384 = vunpack.c.h.b16 %v1111
        %v1385 = vunpack.c.l.b16 %v1112
        %v1386 = vunpack.c.h.b16 %v1112
        %v1387 = vunpack.c.l.b16 %v1113
        %v1388 = vunpack.c.h.b16 %v1113
        %v1389 = vunpack.c.l.b16 %v1114
        %v1390 = vunpack.c.h.b16 %v1114
        %v1391 = vunpack.c.l.b16 %v1115
        %v1392 = vunpack.c.h.b16 %v1115
        %v1393 = vunpack.c.l.b16 %v1116
        %v1394 = vunpack.c.h.b16 %v1116
        %v1395 = vunpack.c.l.b16 %v1117
        %v1396 = vunpack.c.h.b16 %v1117
        %v1397 = vunpack.c.l.b16 %v1118
        %v1398 = vunpack.c.h.b16 %v1118
        %v1399 = vunpack.c.l.b16 %v1119
        %v1400 = vunpack.c.h.b16 %v1119
        %v1401 = vunpack.c.l.b16 %v1120
        %v1402 = vunpack.c.h.b16 %v1120
        %v1403 = vunpack.c.l.b16 %v1121
        %v1404 = vunpack.c.h.b16 %v1121
        %v1405 = vunpack.c.l.b16 %v1122
        %v1406 = vunpack.c.h.b16 %v1122
        %v1407 = vunpack.c.l.b16 %v1123
        %v1408 = vunpack.c.h.b16 %v1123
        %v1409 = vunpack.c.l.b16 %v1124
        %v1410 = vunpack.c.h.b16 %v1124
        %v1411 = vunpack.c.l.b16 %v1125
        %v1412 = vunpack.c.h.b16 %v1125
        %v1413 = vunpack.c.l.b16 %v1126
        %v1414 = vunpack.c.h.b16 %v1126
        %v1415 = vunpack.c.l.b16 %v1127
        %v1416 = vunpack.c.h.b16 %v1127
        %v1417 = vunpack.c.l.b16 %v1128
        %v1418 = vunpack.c.h.b16 %v1128
        %v1419 = vunpack.c.l.b16 %v1129
        %v1420 = vunpack.c.h.b16 %v1129
        %v1421 = vunpack.c.l.b16 %v1130
        %v1422 = vunpack.c.h.b16 %v1130
        %v1423 = vunpack.c.l.b16 %v1131
        %v1424 = vunpack.c.h.b16 %v1131
        %v1425 = vunpack.c.l.b16 %v1132
        %v1426 = vunpack.c.h.b16 %v1132
        %v1427 = vpack.c.b16 %v1237, %v1235
        %v1428 = vpack.c.b16 %v1238, %v1236
        %v1429 = vpack.c.b16 %v1241, %v1239
        %v1430 = vpack.c.b16 %v1242, %v1240
        %v1431 = vpack.c.b16 %v1245, %v1243
        %v1432 = vpack.c.b16 %v1246, %v1244
        %v1433 = vpack.c.b16 %v1249, %v1247
        %v1434 = vpack.c.b16 %v1250, %v1248
        %v1435 = vpack.c.b16 %v1253, %v1251
        %v1436 = vpack.c.b16 %v1254, %v1252
        %v1437 = vpack.c.b16 %v1257, %v1255
        %v1438 = vpack.c.b16 %v1258, %v1256
        %v1439 = vpack.c.b16 %v1261, %v1259
        %v1440 = vpack.c.b16 %v1262, %v1260
        %v1441 = vpack.c.b16 %v1265, %v1263
        %v1442 = vpack.c.b16 %v1266, %v1264
        %v1443 = vpack.c.b16 %v1269, %v1267
        %v1444 = vpack.c.b16 %v1270, %v1268
        %v1445 = vpack.c.b16 %v1273, %v1271
        %v1446 = vpack.c.b16 %v1274, %v1272
        %v1447 = vpack.c.b16 %v1277, %v1275
        %v1448 = vpack.c.b16 %v1278, %v1276
        %v1449 = vpack.c.b16 %v1281, %v1279
        %v1450 = vpack.c.b16 %v1282, %v1280
        %v1451 = vpack.c.b16 %v1285, %v1283
        %v1452 = vpack.c.b16 %v1286, %v1284
        %v1453 = vpack.c.b16 %v1289, %v1287
        %v1454 = vpack.c.b16 %v1290, %v1288
        %v1455 = vpack.c.b16 %v1293, %v1291
        %v1456 = vpack.c.b16 %v1294, %v1292
        %v1457 = vpack.c.b16 %v1297, %v1295
        %v1458 = vpack.c.b16 %v1298, %v1296
        %v1459 = vpack.c.b16 %v1301, %v1299
        %v1460 = vpack.c.b16 %v1302, %v1300
        %v1461 = vpack.c.b16 %v1305, %v1303
        %v1462 = vpack.c.b16 %v1306, %v1304
        %v1463 = vpack.c.b16 %v1309, %v1307
        %v1464 = vpack.c.b16 %v1310, %v1308
        %v1465 = vpack.c.b16 %v1313, %v1311
        %v1466 = vpack.c.b16 %v1314, %v1312
        %v1467 = vpack.c.b16 %v1317, %v1315
        %v1468 = vpack.c.b16 %v1318, %v1316
        %v1469 = vpack.c.b16 %v1321, %v1319
        %v1470 = vpack.c.b16 %v1322, %v1320
        %v1471 = vpack.c.b16 %v1325, %v1323
        %v1472 = vpack.c.b16 %v1326, %v1324
        %v1473 = vpack.c.b16 %v1329, %v1327
        %v1474 = vpack.c.b16 %v1330, %v1328
        %v1475 = vpack.c.b16 %v1333, %v1331
        %v1476 = vpack.c.b16 %v1334, %v1332
        %v1477 = vpack.c.b16 %v1337, %v1335
        %v1478 = vpack.c.b16 %v1338, %v1336
        %v1479 = vpack.c.b16 %v1341, %v1339
        %v1480 = vpack.c.b16 %v1342, %v1340
        %v1481 = vpack.c.b16 %v1345, %v1343
        %v1482 = vpack.c.b16 %v1346, %v1344
        %v1483 = vpack.c.b16 %v1349, %v1347
        %v1484 = vpack.c.b16 %v1350, %v1348
        %v1485 = vpack.c.b16 %v1353, %v1351
        %v1486 = vpack.c.b16 %v1354, %v1352
        %v1487 = vpack.c.b16 %v1357, %v1355
        %v1488 = vpack.c.b16 %v1358, %v1356
        %v1489 = vpack.c.b16 %v1361, %v1359
        %v1490 = vpack.c.b16 %v1362, %v1360
        %v1491 = vpack.c.b16 %v1365, %v1363
        %v1492 = vpack.c.b16 %v1366, %v1364
        %v1493 = vpack.c.b16 %v1369, %v1367
        %v1494 = vpack.c.b16 %v1370, %v1368
        %v1495 = vpack.c.b16 %v1373, %v1371
        %v1496 = vpack.c.b16 %v1374, %v1372
        %v1497 = vpack.c.b16 %v1377, %v1375
        %v1498 = vpack.c.b16 %v1378, %v1376
        %v1499 = vpack.c.b16 %v1381, %v1379
        %v1500 = vpack.c.b16 %v1382, %v1380
        %v1501 = vpack.c.b16 %v1385, %v1383
        %v1502 = vpack.c.b16 %v1386, %v1384
        %v1503 = vpack.c.b16 %v1389, %v1387
        %v1504 = vpack.c.b16 %v1390, %v1388
        %v1505 = vpack.c.b16 %v1393, %v1391
        %v1506 = vpack.c.b16 %v1394, %v1392
        %v1507 = vpack.c.b16 %v1397, %v1395
        %v1508 = vpack.c.b16 %v1398, %v1396
        %v1509 = vpack.c.b16 %v1401, %v1399
        %v1510 = vpack.c.b16 %v1402, %v1400
        %v1511 = vpack.c.b16 %v1405, %v1403
        %v1512 = vpack.c.b16 %v1406, %v1404
        %v1513 = vpack.c.b16 %v1409, %v1407
        %v1514 = vpack.c.b16 %v1410, %v1408
        %v1515 = vpack.c.b16 %v1413, %v1411
        %v1516 = vpack.c.b16 %v1414, %v1412
        %v1517 = vpack.c.b16 %v1417, %v1415
        %v1518 = vpack.c.b16 %v1418, %v1416
        %v1519 = vpack.c.b16 %v1421, %v1419
        %v1520 = vpack.c.b16 %v1422, %v1420
        %v1521 = vpack.c.b16 %v1425, %v1423
        %v1522 = vpack.c.b16 %v1426, %v1424
        %1619 = vmatpush.bf16.msra.mxu0 %v1441
        %1620 = vmatpush.bf16.msra.mxu0 %v1439
        %1621 = vmatpush.bf16.msra.mxu0 %v1437
        %1622 = vmatpush.bf16.msra.mxu0 %v1435
        %1623 = vmatpush.bf16.msra.mxu0 %v1433
        %1624 = vmatpush.bf16.msra.mxu0 %v1431
        %1625 = vmatpush.bf16.msra.mxu0 %v1429
        %1626 = vmatpush.bf16.msra.mxu0 %v1427
        %1627 = vmatmul.bf16.gmra.mxu0 %v1031
        %v1628 = vpop.f32.mrf.mxu0
        %v1629 = vadd.f32 %v1135, %v1628
        %v1630 = vpop.f32.mrf.mxu0
        %v1631 = vadd.f32 %v1135, %v1630
        %1632 = vdwg.mxu0
        %1633 = vmatpush.bf16.msra.mxu0 %v1457
        %1634 = vmatpush.bf16.msra.mxu0 %v1455
        %1635 = vmatpush.bf16.msra.mxu0 %v1453
        %1636 = vmatpush.bf16.msra.mxu0 %v1451
        %1637 = vmatpush.bf16.msra.mxu0 %v1449
        %1638 = vmatpush.bf16.msra.mxu0 %v1447
        %1639 = vmatpush.bf16.msra.mxu0 %v1445
        %1640 = vmatpush.bf16.msra.mxu0 %v1443
        %1641 = vmatmul.bf16.gmra.mxu0 %v1032
        %v1642 = vpop.f32.mrf.mxu0
        %v1643 = vadd.f32 %v1629, %v1642
        %v1644 = vpop.f32.mrf.mxu0
        %v1645 = vadd.f32 %v1631, %v1644
        %1646 = vdwg.mxu0
        %1647 = vmatpush.bf16.msra.mxu0 %v1473
        %1648 = vmatpush.bf16.msra.mxu0 %v1471
        %1649 = vmatpush.bf16.msra.mxu0 %v1469
        %1650 = vmatpush.bf16.msra.mxu0 %v1467
        %1651 = vmatpush.bf16.msra.mxu0 %v1465
        %1652 = vmatpush.bf16.msra.mxu0 %v1463
        %1653 = vmatpush.bf16.msra.mxu0 %v1461
        %1654 = vmatpush.bf16.msra.mxu0 %v1459
        %1655 = vmatmul.bf16.gmra.mxu0 %v1033
        %v1656 = vpop.f32.mrf.mxu0
        %v1657 = vadd.f32 %v1643, %v1656
        %v1658 = vpop.f32.mrf.mxu0
        %v1659 = vadd.f32 %v1645, %v1658
        %1660 = vdwg.mxu0
        %1661 = vmatpush.bf16.msra.mxu0 %v1489
        %1662 = vmatpush.bf16.msra.mxu0 %v1487
        %1663 = vmatpush.bf16.msra.mxu0 %v1485
        %1664 = vmatpush.bf16.msra.mxu0 %v1483
        %1665 = vmatpush.bf16.msra.mxu0 %v1481
        %1666 = vmatpush.bf16.msra.mxu0 %v1479
        %1667 = vmatpush.bf16.msra.mxu0 %v1477
        %1668 = vmatpush.bf16.msra.mxu0 %v1475
        %1669 = vmatmul.bf16.gmra.mxu0 %v1034
        %v1670 = vpop.f32.mrf.mxu0
        %v1671 = vadd.f32 %v1657, %v1670
        %v1672 = vpop.f32.mrf.mxu0
        %v1673 = vadd.f32 %v1659, %v1672
        %1674 = vdwg.mxu0
        %1675 = vmatpush.bf16.msra.mxu0 %v1505
        %1676 = vmatpush.bf16.msra.mxu0 %v1503
        %1677 = vmatpush.bf16.msra.mxu0 %v1501
        %1678 = vmatpush.bf16.msra.mxu0 %v1499
        %1679 = vmatpush.bf16.msra.mxu0 %v1497
        %1680 = vmatpush.bf16.msra.mxu0 %v1495
        %1681 = vmatpush.bf16.msra.mxu0 %v1493
        %1682 = vmatpush.bf16.msra.mxu0 %v1491
        %1683 = vmatmul.bf16.gmra.mxu0 %v1035
        %v1684 = vpop.f32.mrf.mxu0
        %v1685 = vadd.f32 %v1671, %v1684
        %v1686 = vpop.f32.mrf.mxu0
        %v1687 = vadd.f32 %v1673, %v1686
        %1688 = vdwg.mxu0
        %1689 = vmatpush.bf16.msra.mxu0 %v1521
        %1690 = vmatpush.bf16.msra.mxu0 %v1519
        %1691 = vmatpush.bf16.msra.mxu0 %v1517
        %1692 = vmatpush.bf16.msra.mxu0 %v1515
        %1693 = vmatpush.bf16.msra.mxu0 %v1513
        %1694 = vmatpush.bf16.msra.mxu0 %v1511
        %1695 = vmatpush.bf16.msra.mxu0 %v1509
        %1696 = vmatpush.bf16.msra.mxu0 %v1507
        %1697 = vmatmul.bf16.gmra.mxu0 %v1036
        %v1698 = vpop.f32.mrf.mxu0
        %v1699 = vadd.f32 %v1685, %v1698
        %v1700 = vpop.f32.mrf.mxu0
        %v1701 = vadd.f32 %v1687, %v1700
        %1702 = vdwg.mxu0
        %1703 = vmatpush.bf16.msra.mxu0 %v1442
        %1704 = vmatpush.bf16.msra.mxu0 %v1440
        %1705 = vmatpush.bf16.msra.mxu0 %v1438
        %1706 = vmatpush.bf16.msra.mxu0 %v1436
        %1707 = vmatpush.bf16.msra.mxu0 %v1434
        %1708 = vmatpush.bf16.msra.mxu0 %v1432
        %1709 = vmatpush.bf16.msra.mxu0 %v1430
        %1710 = vmatpush.bf16.msra.mxu0 %v1428
        %1711 = vmatmul.bf16.gmra.mxu0 %v1031
        %v1712 = vpop.f32.mrf.mxu0
        %v1713 = vadd.f32 %v1136, %v1712
        %v1714 = vpop.f32.mrf.mxu0
        %v1715 = vadd.f32 %v1136, %v1714
        %1716 = vdwg.mxu0
        %1717 = vmatpush.bf16.msra.mxu0 %v1458
        %1718 = vmatpush.bf16.msra.mxu0 %v1456
        %1719 = vmatpush.bf16.msra.mxu0 %v1454
        %1720 = vmatpush.bf16.msra.mxu0 %v1452
        %1721 = vmatpush.bf16.msra.mxu0 %v1450
        %1722 = vmatpush.bf16.msra.mxu0 %v1448
        %1723 = vmatpush.bf16.msra.mxu0 %v1446
        %1724 = vmatpush.bf16.msra.mxu0 %v1444
        %1725 = vmatmul.bf16.gmra.mxu0 %v1032
        %v1726 = vpop.f32.mrf.mxu0
        %v1727 = vadd.f32 %v1713, %v1726
        %v1728 = vpop.f32.mrf.mxu0
        %v1729 = vadd.f32 %v1715, %v1728
        %1730 = vdwg.mxu0
        %1731 = vmatpush.bf16.msra.mxu0 %v1474
        %1732 = vmatpush.bf16.msra.mxu0 %v1472
        %1733 = vmatpush.bf16.msra.mxu0 %v1470
        %1734 = vmatpush.bf16.msra.mxu0 %v1468
        %1735 = vmatpush.bf16.msra.mxu0 %v1466
        %1736 = vmatpush.bf16.msra.mxu0 %v1464
        %1737 = vmatpush.bf16.msra.mxu0 %v1462
        %1738 = vmatpush.bf16.msra.mxu0 %v1460
        %1739 = vmatmul.bf16.gmra.mxu0 %v1033
        %v1740 = vpop.f32.mrf.mxu0
        %v1741 = vadd.f32 %v1727, %v1740
        %v1742 = vpop.f32.mrf.mxu0
        %v1743 = vadd.f32 %v1729, %v1742
        %1744 = vdwg.mxu0
        %1745 = vmatpush.bf16.msra.mxu0 %v1490
        %1746 = vmatpush.bf16.msra.mxu0 %v1488
        %1747 = vmatpush.bf16.msra.mxu0 %v1486
        %1748 = vmatpush.bf16.msra.mxu0 %v1484
        %1749 = vmatpush.bf16.msra.mxu0 %v1482
        %1750 = vmatpush.bf16.msra.mxu0 %v1480
        %1751 = vmatpush.bf16.msra.mxu0 %v1478
        %1752 = vmatpush.bf16.msra.mxu0 %v1476
        %1753 = vmatmul.bf16.gmra.mxu0 %v1034
        %v1754 = vpop.f32.mrf.mxu0
        %v1755 = vadd.f32 %v1741, %v1754
        %v1756 = vpop.f32.mrf.mxu0
        %v1757 = vadd.f32 %v1743, %v1756
        %1758 = vdwg.mxu0
        %1759 = vmatpush.bf16.msra.mxu0 %v1506
        %1760 = vmatpush.bf16.msra.mxu0 %v1504
        %1761 = vmatpush.bf16.msra.mxu0 %v1502
        %1762 = vmatpush.bf16.msra.mxu0 %v1500
        %1763 = vmatpush.bf16.msra.mxu0 %v1498
        %1764 = vmatpush.bf16.msra.mxu0 %v1496
        %1765 = vmatpush.bf16.msra.mxu0 %v1494
        %1766 = vmatpush.bf16.msra.mxu0 %v1492
        %1767 = vmatmul.bf16.gmra.mxu0 %v1035
        %v1768 = vpop.f32.mrf.mxu0
        %v1769 = vadd.f32 %v1755, %v1768
        %v1770 = vpop.f32.mrf.mxu0
        %v1771 = vadd.f32 %v1757, %v1770
        %1772 = vdwg.mxu0
        %1773 = vmatpush.bf16.msra.mxu0 %v1522
        %1774 = vmatpush.bf16.msra.mxu0 %v1520
        %1775 = vmatpush.bf16.msra.mxu0 %v1518
        %1776 = vmatpush.bf16.msra.mxu0 %v1516
        %1777 = vmatpush.bf16.msra.mxu0 %v1514
        %1778 = vmatpush.bf16.msra.mxu0 %v1512
        %1779 = vmatpush.bf16.msra.mxu0 %v1510
        %1780 = vmatpush.bf16.msra.mxu0 %v1508
        %1781 = vmatmul.bf16.gmra.mxu0 %v1036
        %v1782 = vpop.f32.mrf.mxu0
        %v1783 = vadd.f32 %v1769, %v1782
        %v1784 = vpop.f32.mrf.mxu0
        %v1785 = vadd.f32 %v1771, %v1784
        %1786 = vdwg.mxu0
        %v1787 = vmax.f32 %v1699, 0.0
        %v1788 = vmax.f32 %v1783, 0.0
        %v1789 = vmax.f32 %v1701, 0.0
        %v1790 = vmax.f32 %v1785, 0.0
        %v1793 = vrot.slane %v1787, 2
        %v1794 = vrot.slane %v1788, 2
        %v1797 = vrot.slane %v1787, 4
        %v1798 = vrot.slane %v1788, 4
        %v1801 = vrot.slane %v1787, 6
        %v1802 = vrot.slane %v1788, 6
        %v1807 = vrot.slane %v1789, 2
        %v1808 = vrot.slane %v1790, 2
        %v1811 = vrot.slane %v1789, 4
        %v1812 = vrot.slane %v1790, 4
        %v1815 = vpack.c.bf16 %v1787, %v1787
        %v1816 = vpack.c.bf16 %v1788, %v1788
        %v1817 = vpack.c.bf16 %v1793, %v1793
        %v1818 = vpack.c.bf16 %v1794, %v1794
        %v1819 = vpack.c.bf16 %v1797, %v1797
        %v1820 = vpack.c.bf16 %v1798, %v1798
        %v1821 = vpack.c.bf16 %v1801, %v1801
        %v1822 = vpack.c.bf16 %v1802, %v1802
        %v1823 = vpack.c.bf16 %v1789, %v1789
        %v1824 = vpack.c.bf16 %v1790, %v1790
        %v1825 = vpack.c.bf16 %v1807, %v1807
        %v1826 = vpack.c.bf16 %v1808, %v1808
        %v1827 = vpack.c.bf16 %v1811, %v1811
        %v1828 = vpack.c.bf16 %v1812, %v1812
        %v1829 = vld [vmem:[%s6] sm:$0xf]
        %v1830 = vld [vmem:[%s6 + $0x4] sm:$0xf]
        %v1831 = vld [vmem:[%s6 + $0x8] sm:$0xf]
        %v1832 = vld [vmem:[%s6 + $0xc] sm:$0xf]
        %v1833 = vld [vmem:[%s6 + $0x10] sm:$0xf]
        %v1834 = vld [vmem:[%s6 + $0x14] sm:$0xf]
        %v1835 = vld [vmem:[%s6 + $0x18] sm:$0xf]
        %v1836 = vld [vmem:[%s6 + $0x1c] sm:$0xf]
        %v1837 = vld [vmem:[%s6 + $0x20] sm:$0xf]
        %v1838 = vld [vmem:[%s6 + $0x24] sm:$0xf]
        %v1839 = vld [vmem:[%s6 + $0x28] sm:$0xf]
        %v1840 = vld [vmem:[%s6 + $0x2c] sm:$0xf]
        %v1841 = vld [vmem:[%s6 + $0x30] sm:$0xf]
        %v1842 = vld [vmem:[%s6 + $0x34] sm:$0xf]
        %v1843 = vld [vmem:[%s6 + $0x38] sm:$0xf]
        %v1844 = vld [vmem:[%s6 + $0x3c] sm:$0xf]
        %v1845 = vld [vmem:[%s6 + $0x40] sm:$0xf]
        %v1846 = vld [vmem:[%s6 + $0x44] sm:$0xf]
        %v1847 = vld [vmem:[%s6 + $0x48] sm:$0xf]
        %v1848 = vld [vmem:[%s6 + $0x4c] sm:$0xf]
        %v1849 = vld [vmem:[%s6 + $0x50] sm:$0xf]
        %v1850 = vld [vmem:[%s6 + $0x54] sm:$0xf]
        %v1851 = vld [vmem:[%s6 + $0x58] sm:$0xf]
        %v1852 = vld [vmem:[%s6 + $0x5c] sm:$0xf]
        %v1853 = vld [vmem:[%s6 + $0x60] sm:$0xf]
        %v1854 = vld [vmem:[%s6 + $0x64] sm:$0xf]
        %v1855 = vld [vmem:[%s6 + $0x68] sm:$0xf]
        %v1856 = vld [vmem:[%s6 + $0x6c] sm:$0xf]
        %v1857 = vld [vmem:[%s6 + $0x70] sm:$0xf]
        %v1858 = vld [vmem:[%s6 + $0x74] sm:$0xf]
        %v1859 = vld [vmem:[%s6 + $0x78] sm:$0xf]
        %v1860 = vld [vmem:[%s6 + $0x7c] sm:$0xf]
        %v1861 = vld [vmem:[%s6 + $0x80] sm:$0xf]
        %v1862 = vld [vmem:[%s6 + $0x84] sm:$0xf]
        %v1863 = vld [vmem:[%s6 + $0x88] sm:$0xf]
        %v1864 = vld [vmem:[%s6 + $0x8c] sm:$0xf]
        %v1865 = vld [vmem:[%s6 + $0x90] sm:$0xf]
        %v1866 = vld [vmem:[%s6 + $0x94] sm:$0xf]
        %v1867 = vld [vmem:[%s6 + $0x98] sm:$0xf]
        %v1868 = vld [vmem:[%s6 + $0x9c] sm:$0xf]
        %v1869 = vld [vmem:[%s6 + $0xa0] sm:$0xf]
        %v1870 = vld [vmem:[%s6 + $0xa4] sm:$0xf]
        %v1871 = vld [vmem:[%s6 + $0xa8] sm:$0xf]
        %v1872 = vld [vmem:[%s6 + $0xac] sm:$0xf]
        %v1873 = vld [vmem:[%s6 + $0xb0] sm:$0xf]
        %v1874 = vld [vmem:[%s6 + $0xb4] sm:$0xf]
        %v1875 = vld [vmem:[%s6 + $0xb8] sm:$0xf]
        %v1876 = vld [vmem:[%s6 + $0xbc] sm:$0xf]
        %v1877 = vld [vmem:[%s6 + $0xc0] sm:$0xf]
        %v1878 = vld [vmem:[%s6 + $0xc4] sm:$0xf]
        %v1879 = vld [vmem:[%s6 + $0xc8] sm:$0xf]
        %v1880 = vld [vmem:[%s6 + $0xcc] sm:$0xf]
        %v1881 = vld [vmem:[%s6 + $0xd0] sm:$0xf]
        %v1882 = vld [vmem:[%s6 + $0xd4] sm:$0xf]
        %v1883 = vld [vmem:[%s6 + $0xd8] sm:$0xf]
        %v1884 = vld [vmem:[%s6 + $0xdc] sm:$0xf]
        %v1885 = vld [vmem:[%s6 + $0xe0] sm:$0xf]
        %v1886 = vld [vmem:[%s6 + $0xe4] sm:$0xf]
        %v1887 = vld [vmem:[%s6 + $0xe8] sm:$0xf]
        %v1888 = vld [vmem:[%s6 + $0xec] sm:$0xf]
        %v1889 = vld [vmem:[%s6 + $0xf0] sm:$0xf]
        %v1890 = vld [vmem:[%s6 + $0xf4] sm:$0xf]
        %v1891 = vld [vmem:[%s6 + $0xf8] sm:$0xf]
        %v1892 = vld [vmem:[%s6 + $0xfc] sm:$0xf]
        %v1893 = vld [vmem:[%s6 + $0x100] sm:$0xf]
        %v1894 = vld [vmem:[%s6 + $0x104] sm:$0xf]
        %v1895 = vld [vmem:[%s6 + $0x108] sm:$0xf]
        %v1896 = vld [vmem:[%s6 + $0x10c] sm:$0xf]
        %v1897 = vld [vmem:[%s6 + $0x110] sm:$0xf]
        %v1898 = vld [vmem:[%s6 + $0x114] sm:$0xf]
        %v1899 = vld [vmem:[%s6 + $0x118] sm:$0xf]
        %v1900 = vld [vmem:[%s6 + $0x11c] sm:$0xf]
        %v1901 = vld [vmem:[%s6 + $0x120] sm:$0xf]
        %v1902 = vld [vmem:[%s6 + $0x124] sm:$0xf]
        %v1903 = vld [vmem:[%s6 + $0x128] sm:$0xf]
        %v1904 = vld [vmem:[%s6 + $0x12c] sm:$0xf]
        %v1905 = vld [vmem:[%s6 + $0x130] sm:$0xf]
        %v1906 = vld [vmem:[%s6 + $0x134] sm:$0xf]
        %v1907 = vld [vmem:[%s6 + $0x138] sm:$0xf]
        %v1908 = vld [vmem:[%s6 + $0x13c] sm:$0xf]
        %v1909 = vld [vmem:[%s6 + $0x140] sm:$0xf]
        %v1910 = vld [vmem:[%s6 + $0x144] sm:$0xf]
        %v1911 = vld [vmem:[%s6 + $0x148] sm:$0xf]
        %v1912 = vld [vmem:[%s6 + $0x14c] sm:$0xf]
        %v1913 = vld [vmem:[%s6 + $0x150] sm:$0xf]
        %v1914 = vld [vmem:[%s6 + $0x154] sm:$0xf]
        %v1915 = vld [vmem:[%s6 + $0x158] sm:$0xf]
        %v1916 = vld [vmem:[%s6 + $0x15c] sm:$0xf]
        %v1917 = vld [vmem:[%s6 + $0x160] sm:$0xf]
        %v1918 = vld [vmem:[%s6 + $0x164] sm:$0xf]
        %v1919 = vld [vmem:[%s6 + $0x168] sm:$0xf]
        %v1920 = vld [vmem:[%s6 + $0x16c] sm:$0xf]
        %v1921 = vld [vmem:[%s6 + $0x170] sm:$0xf]
        %v1922 = vld [vmem:[%s6 + $0x174] sm:$0xf]
        %v1923 = vld [vmem:[%s6 + $0x178] sm:$0xf]
        %v1924 = vld [vmem:[%s6 + $0x17c] sm:$0xf]
        %v1925 = vld [vmem:[%s6 + $0x180] sm:$0xf]
        %v1926 = vld [vmem:[%s6 + $0x184] sm:$0xf]
        %v1927 = vld [vmem:[%s6 + $0x188] sm:$0xf]
        %v1928 = vld [vmem:[%s6 + $0x18c] sm:$0xf]
        %v1929 = vld [vmem:[%s6 + $0x190] sm:$0xf]
        %v1930 = vld [vmem:[%s6 + $0x194] sm:$0xf]
        %v1931 = vld [vmem:[%s6 + $0x198] sm:$0xf]
        %v1932 = vld [vmem:[%s6 + $0x19c] sm:$0xf]
        %v1933 = vld [vmem:[%s6 + $0x1a0] sm:$0xf]
        %v1934 = vld [vmem:[%s6 + $0x1a4] sm:$0xf]
        %v1935 = vld [vmem:[%s6 + $0x1a8] sm:$0xf]
        %v1936 = vld [vmem:[%s6 + $0x1ac] sm:$0xf]
        %v1937 = vld [vmem:[%s6 + $0x1b0] sm:$0xf]
        %v1938 = vld [vmem:[%s6 + $0x1b4] sm:$0xf]
        %v1939 = vld [vmem:[%s6 + $0x1b8] sm:$0xf]
        %v1940 = vld [vmem:[%s6 + $0x1bc] sm:$0xf]
        %v1941 = vld [vmem:[%s6 + $0x1c0] sm:$0xf]
        %v1942 = vld [vmem:[%s6 + $0x1c4] sm:$0xf]
        %v1943 = vld [vmem:[%s6 + $0x1c8] sm:$0xf]
        %v1944 = vld [vmem:[%s6 + $0x1cc] sm:$0xf]
        %v1945 = vld [vmem:[%s6 + $0x1d0] sm:$0xf]
        %v1946 = vld [vmem:[%s6 + $0x1d4] sm:$0xf]
        %v1947 = vld [vmem:[%s6 + $0x1d8] sm:$0xf]
        %v1948 = vld [vmem:[%s6 + $0x1dc] sm:$0xf]
        %v1949 = vld [vmem:[%s6 + $0x1e0] sm:$0xf]
        %v1950 = vld [vmem:[%s6 + $0x1e4] sm:$0xf]
        %v1951 = vld [vmem:[%s6 + $0x1e8] sm:$0xf]
        %v1952 = vld [vmem:[%s6 + $0x1ec] sm:$0xf]
        %v1953 = vld [vmem:[%s6 + $0x1f0] sm:$0xf]
        %v1954 = vld [vmem:[%s6 + $0x1f4] sm:$0xf]
        %v1955 = vld [vmem:[%s6 + $0x1f8] sm:$0xf]
        %v1956 = vld [vmem:[%s6 + $0x1fc] sm:$0xf]
        %v1957 = vld [vmem:[%s6 + $0x200] sm:$0xf]
        %v1958 = vld [vmem:[%s6 + $0x204] sm:$0xf]
        %v1959 = vld [vmem:[%s6 + $0x208] sm:$0xf]
        %v1960 = vld [vmem:[%s6 + $0x20c] sm:$0xf]
        %v1961 = vld [vmem:[%s6 + $0x210] sm:$0xf]
        %v1962 = vld [vmem:[%s6 + $0x214] sm:$0xf]
        %v1963 = vld [vmem:[%s6 + $0x218] sm:$0xf]
        %v1964 = vld [vmem:[%s6 + $0x21c] sm:$0xf]
        %v1965 = vld [vmem:[%s6 + $0x220] sm:$0xf]
        %v1966 = vld [vmem:[%s6 + $0x224] sm:$0xf]
        %v1967 = vld [vmem:[%s6 + $0x228] sm:$0xf]
        %v1968 = vld [vmem:[%s6 + $0x22c] sm:$0xf]
        %v1969 = vld [vmem:[%s6 + $0x230] sm:$0xf]
        %v1970 = vld [vmem:[%s6 + $0x234] sm:$0xf]
        %v1971 = vld [vmem:[%s6 + $0x238] sm:$0xf]
        %v1972 = vld [vmem:[%s6 + $0x23c] sm:$0xf]
        %v1973 = vld [vmem:[%s6 + $0x240] sm:$0xf]
        %v1974 = vld [vmem:[%s6 + $0x244] sm:$0xf]
        %v1975 = vld [vmem:[%s6 + $0x248] sm:$0xf]
        %v1976 = vld [vmem:[%s6 + $0x24c] sm:$0xf]
        %v1977 = vld [vmem:[%s6 + $0x250] sm:$0xf]
        %v1978 = vld [vmem:[%s6 + $0x254] sm:$0xf]
        %v1979 = vld [vmem:[%s6 + $0x258] sm:$0xf]
        %v1980 = vld [vmem:[%s6 + $0x25c] sm:$0xf]
        %v1981 = vld [vmem:[%s6 + $0x260] sm:$0xf]
        %v1982 = vld [vmem:[%s6 + $0x264] sm:$0xf]
        %v1983 = vld [vmem:[%s6 + $0x268] sm:$0xf]
        %v1984 = vld [vmem:[%s6 + $0x26c] sm:$0xf]
        %v1985 = vld [vmem:[%s6 + $0x270] sm:$0xf]
        %v1986 = vld [vmem:[%s6 + $0x274] sm:$0xf]
        %v1987 = vld [vmem:[%s6 + $0x278] sm:$0xf]
        %v1988 = vld [vmem:[%s6 + $0x27c] sm:$0xf]
        %v1989 = vld [vmem:[%s6 + $0x280] sm:$0xf]
        %v1990 = vld [vmem:[%s6 + $0x284] sm:$0xf]
        %v1991 = vld [vmem:[%s6 + $0x288] sm:$0xf]
        %v1992 = vld [vmem:[%s6 + $0x28c] sm:$0xf]
        %v1993 = vld [vmem:[%s6 + $0x290] sm:$0xf]
        %v1994 = vld [vmem:[%s6 + $0x294] sm:$0xf]
        %v1995 = vld [vmem:[%s6 + $0x298] sm:$0xf]
        %v1996 = vld [vmem:[%s6 + $0x29c] sm:$0xf]
        %v1997 = vld [vmem:[%s6 + $0x2a0] sm:$0xf]
        %v1998 = vld [vmem:[%s6 + $0x2a4] sm:$0xf]
        %v1999 = vld [vmem:[%s6 + $0x2a8] sm:$0xf]
        %v2000 = vld [vmem:[%s6 + $0x2ac] sm:$0xf]
        %v2001 = vld [vmem:[%s6 + $0x2b0] sm:$0xf]
        %v2002 = vld [vmem:[%s6 + $0x2b4] sm:$0xf]
        %v2003 = vld [vmem:[%s6 + $0x2b8] sm:$0xf]
        %v2004 = vld [vmem:[%s6 + $0x2bc] sm:$0xf]
        %v2005 = vld [vmem:[%s6 + $0x2c0] sm:$0xf]
        %v2006 = vld [vmem:[%s6 + $0x2c4] sm:$0xf]
        %v2007 = vld [vmem:[%s6 + $0x2c8] sm:$0xf]
        %v2008 = vld [vmem:[%s6 + $0x2cc] sm:$0xf]
        %v2009 = vld [vmem:[%s6 + $0x2d0] sm:$0xf]
        %v2010 = vld [vmem:[%s6 + $0x2d4] sm:$0xf]
        %v2011 = vld [vmem:[%s6 + $0x2d8] sm:$0xf]
        %v2012 = vld [vmem:[%s6 + $0x2dc] sm:$0xf]
        %v2013 = vld [vmem:[%s6 + $0x2e0] sm:$0xf]
        %v2014 = vld [vmem:[%s6 + $0x2e4] sm:$0xf]
        %v2015 = vld [vmem:[%s6 + $0x2e8] sm:$0xf]
        %v2016 = vld [vmem:[%s6 + $0x2ec] sm:$0xf]
        %v2017 = vld [vmem:[%s6 + $0x2f0] sm:$0xf]
        %v2018 = vld [vmem:[%s6 + $0x2f4] sm:$0xf]
        %v2019 = vld [vmem:[%s6 + $0x2f8] sm:$0xf]
        %v2020 = vld [vmem:[%s6 + $0x2fc] sm:$0xf]
        %v2021 = vld [vmem:[%s6 + $0x300] sm:$0xf]
        %v2022 = vld [vmem:[%s6 + $0x304] sm:$0xf]
        %v2023 = vld [vmem:[%s6 + $0x308] sm:$0xf]
        %v2024 = vld [vmem:[%s6 + $0x30c] sm:$0xf]
        %v2025 = vld [vmem:[%s6 + $0x310] sm:$0xf]
        %v2026 = vld [vmem:[%s6 + $0x314] sm:$0xf]
        %v2027 = vld [vmem:[%s6 + $0x318] sm:$0xf]
        %v2028 = vld [vmem:[%s6 + $0x31c] sm:$0xf]
        %v2029 = vld [vmem:[%s6 + $0x320] sm:$0xf]
        %v2030 = vld [vmem:[%s6 + $0x324] sm:$0xf]
        %v2031 = vld [vmem:[%s6 + $0x328] sm:$0xf]
        %v2032 = vld [vmem:[%s6 + $0x32c] sm:$0xf]
        %v2033 = vld [vmem:[%s6 + $0x330] sm:$0xf]
        %v2034 = vld [vmem:[%s6 + $0x334] sm:$0xf]
        %v2035 = vld [vmem:[%s6 + $0x338] sm:$0xf]
        %v2036 = vld [vmem:[%s6 + $0x33c] sm:$0xf]
        %v2037 = vld [vmem:[%s6 + $0x340] sm:$0xf]
        %v2038 = vld [vmem:[%s6 + $0x344] sm:$0xf]
        %v2039 = vld [vmem:[%s6 + $0x348] sm:$0xf]
        %v2040 = vld [vmem:[%s6 + $0x34c] sm:$0xf]
        %v2041 = vld [vmem:[%s6 + $0x350] sm:$0xf]
        %v2042 = vld [vmem:[%s6 + $0x354] sm:$0xf]
        %v2043 = vld [vmem:[%s6 + $0x358] sm:$0xf]
        %v2044 = vld [vmem:[%s6 + $0x35c] sm:$0xf]
        %v2045 = vld [vmem:[%s6 + $0x360] sm:$0xf]
        %v2046 = vld [vmem:[%s6 + $0x364] sm:$0xf]
        %v2047 = vld [vmem:[%s6 + $0x368] sm:$0xf]
        %v2048 = vld [vmem:[%s6 + $0x36c] sm:$0xf]
        %v2049 = vld [vmem:[%s6 + $0x370] sm:$0xf]
        %v2050 = vld [vmem:[%s6 + $0x374] sm:$0xf]
        %v2051 = vld [vmem:[%s6 + $0x378] sm:$0xf]
        %v2052 = vld [vmem:[%s6 + $0x37c] sm:$0xf]
        %v2053 = vld [vmem:[%s7] sm:$0x1]
        %v2055 = vperm.slane %v2053, 0
        %v2281 = vunpack.c.l.b16 %v1829
        %v2282 = vunpack.c.l.b16 %v1830
        %v2283 = vunpack.c.l.b16 %v1831
        %v2284 = vunpack.c.l.b16 %v1832
        %v2285 = vunpack.c.l.b16 %v1833
        %v2286 = vunpack.c.l.b16 %v1834
        %v2287 = vunpack.c.l.b16 %v1835
        %v2288 = vunpack.c.l.b16 %v1836
        %v2289 = vunpack.c.l.b16 %v1837
        %v2290 = vunpack.c.l.b16 %v1838
        %v2291 = vunpack.c.l.b16 %v1839
        %v2292 = vunpack.c.l.b16 %v1840
        %v2293 = vunpack.c.l.b16 %v1841
        %v2294 = vunpack.c.l.b16 %v1842
        %v2295 = vunpack.c.l.b16 %v1843
        %v2296 = vunpack.c.l.b16 %v1844
        %v2297 = vunpack.c.l.b16 %v1845
        %v2298 = vunpack.c.l.b16 %v1846
        %v2299 = vunpack.c.l.b16 %v1847
        %v2300 = vunpack.c.l.b16 %v1848
        %v2301 = vunpack.c.l.b16 %v1849
        %v2302 = vunpack.c.l.b16 %v1850
        %v2303 = vunpack.c.l.b16 %v1851
        %v2304 = vunpack.c.l.b16 %v1852
        %v2305 = vunpack.c.l.b16 %v1853
        %v2306 = vunpack.c.l.b16 %v1854
        %v2307 = vunpack.c.l.b16 %v1855
        %v2308 = vunpack.c.l.b16 %v1856
        %v2309 = vunpack.c.l.b16 %v1857
        %v2310 = vunpack.c.l.b16 %v1858
        %v2311 = vunpack.c.l.b16 %v1859
        %v2312 = vunpack.c.l.b16 %v1860
        %v2313 = vunpack.c.l.b16 %v1861
        %v2314 = vunpack.c.l.b16 %v1862
        %v2315 = vunpack.c.l.b16 %v1863
        %v2316 = vunpack.c.l.b16 %v1864
        %v2317 = vunpack.c.l.b16 %v1865
        %v2318 = vunpack.c.l.b16 %v1866
        %v2319 = vunpack.c.l.b16 %v1867
        %v2320 = vunpack.c.l.b16 %v1868
        %v2321 = vunpack.c.l.b16 %v1869
        %v2322 = vunpack.c.l.b16 %v1870
        %v2323 = vunpack.c.l.b16 %v1871
        %v2324 = vunpack.c.l.b16 %v1872
        %v2325 = vunpack.c.l.b16 %v1873
        %v2326 = vunpack.c.l.b16 %v1874
        %v2327 = vunpack.c.l.b16 %v1875
        %v2328 = vunpack.c.l.b16 %v1876
        %v2329 = vunpack.c.l.b16 %v1877
        %v2330 = vunpack.c.l.b16 %v1878
        %v2331 = vunpack.c.l.b16 %v1879
        %v2332 = vunpack.c.l.b16 %v1880
        %v2333 = vunpack.c.l.b16 %v1881
        %v2334 = vunpack.c.l.b16 %v1882
        %v2335 = vunpack.c.l.b16 %v1883
        %v2336 = vunpack.c.l.b16 %v1884
        %v2337 = vunpack.c.l.b16 %v1885
        %v2338 = vunpack.c.l.b16 %v1886
        %v2339 = vunpack.c.l.b16 %v1887
        %v2340 = vunpack.c.l.b16 %v1888
        %v2341 = vunpack.c.l.b16 %v1889
        %v2342 = vunpack.c.l.b16 %v1890
        %v2343 = vunpack.c.l.b16 %v1891
        %v2344 = vunpack.c.l.b16 %v1892
        %v2345 = vunpack.c.l.b16 %v1893
        %v2346 = vunpack.c.l.b16 %v1894
        %v2347 = vunpack.c.l.b16 %v1895
        %v2348 = vunpack.c.l.b16 %v1896
        %v2349 = vunpack.c.l.b16 %v1897
        %v2350 = vunpack.c.l.b16 %v1898
        %v2351 = vunpack.c.l.b16 %v1899
        %v2352 = vunpack.c.l.b16 %v1900
        %v2353 = vunpack.c.l.b16 %v1901
        %v2354 = vunpack.c.l.b16 %v1902
        %v2355 = vunpack.c.l.b16 %v1903
        %v2356 = vunpack.c.l.b16 %v1904
        %v2357 = vunpack.c.l.b16 %v1905
        %v2358 = vunpack.c.l.b16 %v1906
        %v2359 = vunpack.c.l.b16 %v1907
        %v2360 = vunpack.c.l.b16 %v1908
        %v2361 = vunpack.c.l.b16 %v1909
        %v2362 = vunpack.c.l.b16 %v1910
        %v2363 = vunpack.c.l.b16 %v1911
        %v2364 = vunpack.c.l.b16 %v1912
        %v2365 = vunpack.c.l.b16 %v1913
        %v2366 = vunpack.c.l.b16 %v1914
        %v2367 = vunpack.c.l.b16 %v1915
        %v2368 = vunpack.c.l.b16 %v1916
        %v2369 = vunpack.c.l.b16 %v1917
        %v2370 = vunpack.c.l.b16 %v1918
        %v2371 = vunpack.c.l.b16 %v1919
        %v2372 = vunpack.c.l.b16 %v1920
        %v2373 = vunpack.c.l.b16 %v1921
        %v2374 = vunpack.c.l.b16 %v1922
        %v2375 = vunpack.c.l.b16 %v1923
        %v2376 = vunpack.c.l.b16 %v1924
        %v2377 = vunpack.c.l.b16 %v1925
        %v2378 = vunpack.c.l.b16 %v1926
        %v2379 = vunpack.c.l.b16 %v1927
        %v2380 = vunpack.c.l.b16 %v1928
        %v2381 = vunpack.c.l.b16 %v1929
        %v2382 = vunpack.c.l.b16 %v1930
        %v2383 = vunpack.c.l.b16 %v1931
        %v2384 = vunpack.c.l.b16 %v1932
        %v2385 = vunpack.c.l.b16 %v1933
        %v2386 = vunpack.c.l.b16 %v1934
        %v2387 = vunpack.c.l.b16 %v1935
        %v2388 = vunpack.c.l.b16 %v1936
        %v2389 = vunpack.c.l.b16 %v1937
        %v2390 = vunpack.c.l.b16 %v1938
        %v2391 = vunpack.c.l.b16 %v1939
        %v2392 = vunpack.c.l.b16 %v1940
        %v2393 = vunpack.c.l.b16 %v1941
        %v2394 = vunpack.c.l.b16 %v1942
        %v2395 = vunpack.c.l.b16 %v1943
        %v2396 = vunpack.c.l.b16 %v1944
        %v2397 = vunpack.c.l.b16 %v1945
        %v2398 = vunpack.c.l.b16 %v1946
        %v2399 = vunpack.c.l.b16 %v1947
        %v2400 = vunpack.c.l.b16 %v1948
        %v2401 = vunpack.c.l.b16 %v1949
        %v2402 = vunpack.c.l.b16 %v1950
        %v2403 = vunpack.c.l.b16 %v1951
        %v2404 = vunpack.c.l.b16 %v1952
        %v2405 = vunpack.c.l.b16 %v1953
        %v2406 = vunpack.c.l.b16 %v1954
        %v2407 = vunpack.c.l.b16 %v1955
        %v2408 = vunpack.c.l.b16 %v1956
        %v2409 = vunpack.c.l.b16 %v1957
        %v2410 = vunpack.c.l.b16 %v1958
        %v2411 = vunpack.c.l.b16 %v1959
        %v2412 = vunpack.c.l.b16 %v1960
        %v2413 = vunpack.c.l.b16 %v1961
        %v2414 = vunpack.c.l.b16 %v1962
        %v2415 = vunpack.c.l.b16 %v1963
        %v2416 = vunpack.c.l.b16 %v1964
        %v2417 = vunpack.c.l.b16 %v1965
        %v2418 = vunpack.c.l.b16 %v1966
        %v2419 = vunpack.c.l.b16 %v1967
        %v2420 = vunpack.c.l.b16 %v1968
        %v2421 = vunpack.c.l.b16 %v1969
        %v2422 = vunpack.c.l.b16 %v1970
        %v2423 = vunpack.c.l.b16 %v1971
        %v2424 = vunpack.c.l.b16 %v1972
        %v2425 = vunpack.c.l.b16 %v1973
        %v2426 = vunpack.c.l.b16 %v1974
        %v2427 = vunpack.c.l.b16 %v1975
        %v2428 = vunpack.c.l.b16 %v1976
        %v2429 = vunpack.c.l.b16 %v1977
        %v2430 = vunpack.c.l.b16 %v1978
        %v2431 = vunpack.c.l.b16 %v1979
        %v2432 = vunpack.c.l.b16 %v1980
        %v2433 = vunpack.c.l.b16 %v1981
        %v2434 = vunpack.c.l.b16 %v1982
        %v2435 = vunpack.c.l.b16 %v1983
        %v2436 = vunpack.c.l.b16 %v1984
        %v2437 = vunpack.c.l.b16 %v1985
        %v2438 = vunpack.c.l.b16 %v1986
        %v2439 = vunpack.c.l.b16 %v1987
        %v2440 = vunpack.c.l.b16 %v1988
        %v2441 = vunpack.c.l.b16 %v1989
        %v2442 = vunpack.c.l.b16 %v1990
        %v2443 = vunpack.c.l.b16 %v1991
        %v2444 = vunpack.c.l.b16 %v1992
        %v2445 = vunpack.c.l.b16 %v1993
        %v2446 = vunpack.c.l.b16 %v1994
        %v2447 = vunpack.c.l.b16 %v1995
        %v2448 = vunpack.c.l.b16 %v1996
        %v2449 = vunpack.c.l.b16 %v1997
        %v2450 = vunpack.c.l.b16 %v1998
        %v2451 = vunpack.c.l.b16 %v1999
        %v2452 = vunpack.c.l.b16 %v2000
        %v2453 = vunpack.c.l.b16 %v2001
        %v2454 = vunpack.c.l.b16 %v2002
        %v2455 = vunpack.c.l.b16 %v2003
        %v2456 = vunpack.c.l.b16 %v2004
        %v2457 = vunpack.c.l.b16 %v2005
        %v2458 = vunpack.c.l.b16 %v2006
        %v2459 = vunpack.c.l.b16 %v2007
        %v2460 = vunpack.c.l.b16 %v2008
        %v2461 = vunpack.c.l.b16 %v2009
        %v2462 = vunpack.c.l.b16 %v2010
        %v2463 = vunpack.c.l.b16 %v2011
        %v2464 = vunpack.c.l.b16 %v2012
        %v2465 = vunpack.c.l.b16 %v2013
        %v2466 = vunpack.c.l.b16 %v2014
        %v2467 = vunpack.c.l.b16 %v2015
        %v2468 = vunpack.c.l.b16 %v2016
        %v2469 = vunpack.c.l.b16 %v2017
        %v2470 = vunpack.c.l.b16 %v2018
        %v2471 = vunpack.c.l.b16 %v2019
        %v2472 = vunpack.c.l.b16 %v2020
        %v2473 = vunpack.c.l.b16 %v2021
        %v2474 = vunpack.c.l.b16 %v2022
        %v2475 = vunpack.c.l.b16 %v2023
        %v2476 = vunpack.c.l.b16 %v2024
        %v2477 = vunpack.c.l.b16 %v2025
        %v2478 = vunpack.c.l.b16 %v2026
        %v2479 = vunpack.c.l.b16 %v2027
        %v2480 = vunpack.c.l.b16 %v2028
        %v2481 = vunpack.c.l.b16 %v2029
        %v2482 = vunpack.c.l.b16 %v2030
        %v2483 = vunpack.c.l.b16 %v2031
        %v2484 = vunpack.c.l.b16 %v2032
        %v2485 = vunpack.c.l.b16 %v2033
        %v2486 = vunpack.c.l.b16 %v2034
        %v2487 = vunpack.c.l.b16 %v2035
        %v2488 = vunpack.c.l.b16 %v2036
        %v2489 = vunpack.c.l.b16 %v2037
        %v2490 = vunpack.c.l.b16 %v2038
        %v2491 = vunpack.c.l.b16 %v2039
        %v2492 = vunpack.c.l.b16 %v2040
        %v2493 = vunpack.c.l.b16 %v2041
        %v2494 = vunpack.c.l.b16 %v2042
        %v2495 = vunpack.c.l.b16 %v2043
        %v2496 = vunpack.c.l.b16 %v2044
        %v2497 = vunpack.c.l.b16 %v2045
        %v2498 = vunpack.c.l.b16 %v2046
        %v2499 = vunpack.c.l.b16 %v2047
        %v2500 = vunpack.c.l.b16 %v2048
        %v2501 = vunpack.c.l.b16 %v2049
        %v2502 = vunpack.c.l.b16 %v2050
        %v2503 = vunpack.c.l.b16 %v2051
        %v2504 = vunpack.c.l.b16 %v2052
        %v2505 = vpack.c.b16 %v2282, %v2281
        %v2506 = vpack.c.b16 %v2284, %v2283
        %v2507 = vpack.c.b16 %v2286, %v2285
        %v2508 = vpack.c.b16 %v2288, %v2287
        %v2509 = vpack.c.b16 %v2290, %v2289
        %v2510 = vpack.c.b16 %v2292, %v2291
        %v2511 = vpack.c.b16 %v2294, %v2293
        %v2512 = vpack.c.b16 %v2296, %v2295
        %v2513 = vpack.c.b16 %v2298, %v2297
        %v2514 = vpack.c.b16 %v2300, %v2299
        %v2515 = vpack.c.b16 %v2302, %v2301
        %v2516 = vpack.c.b16 %v2304, %v2303
        %v2517 = vpack.c.b16 %v2306, %v2305
        %v2518 = vpack.c.b16 %v2308, %v2307
        %v2519 = vpack.c.b16 %v2310, %v2309
        %v2520 = vpack.c.b16 %v2312, %v2311
        %v2521 = vpack.c.b16 %v2314, %v2313
        %v2522 = vpack.c.b16 %v2316, %v2315
        %v2523 = vpack.c.b16 %v2318, %v2317
        %v2524 = vpack.c.b16 %v2320, %v2319
        %v2525 = vpack.c.b16 %v2322, %v2321
        %v2526 = vpack.c.b16 %v2324, %v2323
        %v2527 = vpack.c.b16 %v2326, %v2325
        %v2528 = vpack.c.b16 %v2328, %v2327
        %v2529 = vpack.c.b16 %v2330, %v2329
        %v2530 = vpack.c.b16 %v2332, %v2331
        %v2531 = vpack.c.b16 %v2334, %v2333
        %v2532 = vpack.c.b16 %v2336, %v2335
        %v2533 = vpack.c.b16 %v2338, %v2337
        %v2534 = vpack.c.b16 %v2340, %v2339
        %v2535 = vpack.c.b16 %v2342, %v2341
        %v2536 = vpack.c.b16 %v2344, %v2343
        %v2537 = vpack.c.b16 %v2346, %v2345
        %v2538 = vpack.c.b16 %v2348, %v2347
        %v2539 = vpack.c.b16 %v2350, %v2349
        %v2540 = vpack.c.b16 %v2352, %v2351
        %v2541 = vpack.c.b16 %v2354, %v2353
        %v2542 = vpack.c.b16 %v2356, %v2355
        %v2543 = vpack.c.b16 %v2358, %v2357
        %v2544 = vpack.c.b16 %v2360, %v2359
        %v2545 = vpack.c.b16 %v2362, %v2361
        %v2546 = vpack.c.b16 %v2364, %v2363
        %v2547 = vpack.c.b16 %v2366, %v2365
        %v2548 = vpack.c.b16 %v2368, %v2367
        %v2549 = vpack.c.b16 %v2370, %v2369
        %v2550 = vpack.c.b16 %v2372, %v2371
        %v2551 = vpack.c.b16 %v2374, %v2373
        %v2552 = vpack.c.b16 %v2376, %v2375
        %v2553 = vpack.c.b16 %v2378, %v2377
        %v2554 = vpack.c.b16 %v2380, %v2379
        %v2555 = vpack.c.b16 %v2382, %v2381
        %v2556 = vpack.c.b16 %v2384, %v2383
        %v2557 = vpack.c.b16 %v2386, %v2385
        %v2558 = vpack.c.b16 %v2388, %v2387
        %v2559 = vpack.c.b16 %v2390, %v2389
        %v2560 = vpack.c.b16 %v2392, %v2391
        %v2561 = vpack.c.b16 %v2394, %v2393
        %v2562 = vpack.c.b16 %v2396, %v2395
        %v2563 = vpack.c.b16 %v2398, %v2397
        %v2564 = vpack.c.b16 %v2400, %v2399
        %v2565 = vpack.c.b16 %v2402, %v2401
        %v2566 = vpack.c.b16 %v2404, %v2403
        %v2567 = vpack.c.b16 %v2406, %v2405
        %v2568 = vpack.c.b16 %v2408, %v2407
        %v2569 = vpack.c.b16 %v2410, %v2409
        %v2570 = vpack.c.b16 %v2412, %v2411
        %v2571 = vpack.c.b16 %v2414, %v2413
        %v2572 = vpack.c.b16 %v2416, %v2415
        %v2573 = vpack.c.b16 %v2418, %v2417
        %v2574 = vpack.c.b16 %v2420, %v2419
        %v2575 = vpack.c.b16 %v2422, %v2421
        %v2576 = vpack.c.b16 %v2424, %v2423
        %v2577 = vpack.c.b16 %v2426, %v2425
        %v2578 = vpack.c.b16 %v2428, %v2427
        %v2579 = vpack.c.b16 %v2430, %v2429
        %v2580 = vpack.c.b16 %v2432, %v2431
        %v2581 = vpack.c.b16 %v2434, %v2433
        %v2582 = vpack.c.b16 %v2436, %v2435
        %v2583 = vpack.c.b16 %v2438, %v2437
        %v2584 = vpack.c.b16 %v2440, %v2439
        %v2585 = vpack.c.b16 %v2442, %v2441
        %v2586 = vpack.c.b16 %v2444, %v2443
        %v2587 = vpack.c.b16 %v2446, %v2445
        %v2588 = vpack.c.b16 %v2448, %v2447
        %v2589 = vpack.c.b16 %v2450, %v2449
        %v2590 = vpack.c.b16 %v2452, %v2451
        %v2591 = vpack.c.b16 %v2454, %v2453
        %v2592 = vpack.c.b16 %v2456, %v2455
        %v2593 = vpack.c.b16 %v2458, %v2457
        %v2594 = vpack.c.b16 %v2460, %v2459
        %v2595 = vpack.c.b16 %v2462, %v2461
        %v2596 = vpack.c.b16 %v2464, %v2463
        %v2597 = vpack.c.b16 %v2466, %v2465
        %v2598 = vpack.c.b16 %v2468, %v2467
        %v2599 = vpack.c.b16 %v2470, %v2469
        %v2600 = vpack.c.b16 %v2472, %v2471
        %v2601 = vpack.c.b16 %v2474, %v2473
        %v2602 = vpack.c.b16 %v2476, %v2475
        %v2603 = vpack.c.b16 %v2478, %v2477
        %v2604 = vpack.c.b16 %v2480, %v2479
        %v2605 = vpack.c.b16 %v2482, %v2481
        %v2606 = vpack.c.b16 %v2484, %v2483
        %v2607 = vpack.c.b16 %v2486, %v2485
        %v2608 = vpack.c.b16 %v2488, %v2487
        %v2609 = vpack.c.b16 %v2490, %v2489
        %v2610 = vpack.c.b16 %v2492, %v2491
        %v2611 = vpack.c.b16 %v2494, %v2493
        %v2612 = vpack.c.b16 %v2496, %v2495
        %v2613 = vpack.c.b16 %v2498, %v2497
        %v2614 = vpack.c.b16 %v2500, %v2499
        %v2615 = vpack.c.b16 %v2502, %v2501
        %v2616 = vpack.c.b16 %v2504, %v2503
        %2729 = vmatpush.bf16.msra.mxu0 %v2512
        %2730 = vmatpush.bf16.msra.mxu0 %v2511
        %2731 = vmatpush.bf16.msra.mxu0 %v2510
        %2732 = vmatpush.bf16.msra.mxu0 %v2509
        %2733 = vmatpush.bf16.msra.mxu0 %v2508
        %2734 = vmatpush.bf16.msra.mxu0 %v2507
        %2735 = vmatpush.bf16.msra.mxu0 %v2506
        %2736 = vmatpush.bf16.msra.mxu0 %v2505
        %2737 = vmatmul.bf16.gmra.mxu0 %v1815
        %v2738 = vpop.f32.mrf.mxu0
        %v2739 = vadd.f32 %v2055, %v2738
        %v2740 = vpop.f32.mrf.mxu0
        %2741 = vdwg.mxu0
        %2742 = vmatpush.bf16.msra.mxu0 %v2520
        %2743 = vmatpush.bf16.msra.mxu0 %v2519
        %2744 = vmatpush.bf16.msra.mxu0 %v2518
        %2745 = vmatpush.bf16.msra.mxu0 %v2517
        %2746 = vmatpush.bf16.msra.mxu0 %v2516
        %2747 = vmatpush.bf16.msra.mxu0 %v2515
        %2748 = vmatpush.bf16.msra.mxu0 %v2514
        %2749 = vmatpush.bf16.msra.mxu0 %v2513
        %2750 = vmatmul.bf16.gmra.mxu0 %v1816
        %v2751 = vpop.f32.mrf.mxu0
        %v2752 = vadd.f32 %v2739, %v2751
        %v2753 = vpop.f32.mrf.mxu0
        %2754 = vdwg.mxu0
        %2755 = vmatpush.bf16.msra.mxu0 %v2528
        %2756 = vmatpush.bf16.msra.mxu0 %v2527
        %2757 = vmatpush.bf16.msra.mxu0 %v2526
        %2758 = vmatpush.bf16.msra.mxu0 %v2525
        %2759 = vmatpush.bf16.msra.mxu0 %v2524
        %2760 = vmatpush.bf16.msra.mxu0 %v2523
        %2761 = vmatpush.bf16.msra.mxu0 %v2522
        %2762 = vmatpush.bf16.msra.mxu0 %v2521
        %2763 = vmatmul.bf16.gmra.mxu0 %v1817
        %v2764 = vpop.f32.mrf.mxu0
        %v2765 = vadd.f32 %v2752, %v2764
        %v2766 = vpop.f32.mrf.mxu0
        %2767 = vdwg.mxu0
        %2768 = vmatpush.bf16.msra.mxu0 %v2536
        %2769 = vmatpush.bf16.msra.mxu0 %v2535
        %2770 = vmatpush.bf16.msra.mxu0 %v2534
        %2771 = vmatpush.bf16.msra.mxu0 %v2533
        %2772 = vmatpush.bf16.msra.mxu0 %v2532
        %2773 = vmatpush.bf16.msra.mxu0 %v2531
        %2774 = vmatpush.bf16.msra.mxu0 %v2530
        %2775 = vmatpush.bf16.msra.mxu0 %v2529
        %2776 = vmatmul.bf16.gmra.mxu0 %v1818
        %v2777 = vpop.f32.mrf.mxu0
        %v2778 = vadd.f32 %v2765, %v2777
        %v2779 = vpop.f32.mrf.mxu0
        %2780 = vdwg.mxu0
        %2781 = vmatpush.bf16.msra.mxu0 %v2544
        %2782 = vmatpush.bf16.msra.mxu0 %v2543
        %2783 = vmatpush.bf16.msra.mxu0 %v2542
        %2784 = vmatpush.bf16.msra.mxu0 %v2541
        %2785 = vmatpush.bf16.msra.mxu0 %v2540
        %2786 = vmatpush.bf16.msra.mxu0 %v2539
        %2787 = vmatpush.bf16.msra.mxu0 %v2538
        %2788 = vmatpush.bf16.msra.mxu0 %v2537
        %2789 = vmatmul.bf16.gmra.mxu0 %v1819
        %v2790 = vpop.f32.mrf.mxu0
        %v2791 = vadd.f32 %v2778, %v2790
        %v2792 = vpop.f32.mrf.mxu0
        %2793 = vdwg.mxu0
        %2794 = vmatpush.bf16.msra.mxu0 %v2552
        %2795 = vmatpush.bf16.msra.mxu0 %v2551
        %2796 = vmatpush.bf16.msra.mxu0 %v2550
        %2797 = vmatpush.bf16.msra.mxu0 %v2549
        %2798 = vmatpush.bf16.msra.mxu0 %v2548
        %2799 = vmatpush.bf16.msra.mxu0 %v2547
        %2800 = vmatpush.bf16.msra.mxu0 %v2546
        %2801 = vmatpush.bf16.msra.mxu0 %v2545
        %2802 = vmatmul.bf16.gmra.mxu0 %v1820
        %v2803 = vpop.f32.mrf.mxu0
        %v2804 = vadd.f32 %v2791, %v2803
        %v2805 = vpop.f32.mrf.mxu0
        %2806 = vdwg.mxu0
        %2807 = vmatpush.bf16.msra.mxu0 %v2560
        %2808 = vmatpush.bf16.msra.mxu0 %v2559
        %2809 = vmatpush.bf16.msra.mxu0 %v2558
        %2810 = vmatpush.bf16.msra.mxu0 %v2557
        %2811 = vmatpush.bf16.msra.mxu0 %v2556
        %2812 = vmatpush.bf16.msra.mxu0 %v2555
        %2813 = vmatpush.bf16.msra.mxu0 %v2554
        %2814 = vmatpush.bf16.msra.mxu0 %v2553
        %2815 = vmatmul.bf16.gmra.mxu0 %v1821
        %v2816 = vpop.f32.mrf.mxu0
        %v2817 = vadd.f32 %v2804, %v2816
        %v2818 = vpop.f32.mrf.mxu0
        %2819 = vdwg.mxu0
        %2820 = vmatpush.bf16.msra.mxu0 %v2568
        %2821 = vmatpush.bf16.msra.mxu0 %v2567
        %2822 = vmatpush.bf16.msra.mxu0 %v2566
        %2823 = vmatpush.bf16.msra.mxu0 %v2565
        %2824 = vmatpush.bf16.msra.mxu0 %v2564
        %2825 = vmatpush.bf16.msra.mxu0 %v2563
        %2826 = vmatpush.bf16.msra.mxu0 %v2562
        %2827 = vmatpush.bf16.msra.mxu0 %v2561
        %2828 = vmatmul.bf16.gmra.mxu0 %v1822
        %v2829 = vpop.f32.mrf.mxu0
        %v2830 = vadd.f32 %v2817, %v2829
        %v2831 = vpop.f32.mrf.mxu0
        %2832 = vdwg.mxu0
        %2833 = vmatpush.bf16.msra.mxu0 %v2576
        %2834 = vmatpush.bf16.msra.mxu0 %v2575
        %2835 = vmatpush.bf16.msra.mxu0 %v2574
        %2836 = vmatpush.bf16.msra.mxu0 %v2573
        %2837 = vmatpush.bf16.msra.mxu0 %v2572
        %2838 = vmatpush.bf16.msra.mxu0 %v2571
        %2839 = vmatpush.bf16.msra.mxu0 %v2570
        %2840 = vmatpush.bf16.msra.mxu0 %v2569
        %2841 = vmatmul.bf16.gmra.mxu0 %v1823
        %v2842 = vpop.f32.mrf.mxu0
        %v2843 = vadd.f32 %v2830, %v2842
        %v2844 = vpop.f32.mrf.mxu0
        %2845 = vdwg.mxu0
        %2846 = vmatpush.bf16.msra.mxu0 %v2584
        %2847 = vmatpush.bf16.msra.mxu0 %v2583
        %2848 = vmatpush.bf16.msra.mxu0 %v2582
        %2849 = vmatpush.bf16.msra.mxu0 %v2581
        %2850 = vmatpush.bf16.msra.mxu0 %v2580
        %2851 = vmatpush.bf16.msra.mxu0 %v2579
        %2852 = vmatpush.bf16.msra.mxu0 %v2578
        %2853 = vmatpush.bf16.msra.mxu0 %v2577
        %2854 = vmatmul.bf16.gmra.mxu0 %v1824
        %v2855 = vpop.f32.mrf.mxu0
        %v2856 = vadd.f32 %v2843, %v2855
        %v2857 = vpop.f32.mrf.mxu0
        %2858 = vdwg.mxu0
        %2859 = vmatpush.bf16.msra.mxu0 %v2592
        %2860 = vmatpush.bf16.msra.mxu0 %v2591
        %2861 = vmatpush.bf16.msra.mxu0 %v2590
        %2862 = vmatpush.bf16.msra.mxu0 %v2589
        %2863 = vmatpush.bf16.msra.mxu0 %v2588
        %2864 = vmatpush.bf16.msra.mxu0 %v2587
        %2865 = vmatpush.bf16.msra.mxu0 %v2586
        %2866 = vmatpush.bf16.msra.mxu0 %v2585
        %2867 = vmatmul.bf16.gmra.mxu0 %v1825
        %v2868 = vpop.f32.mrf.mxu0
        %v2869 = vadd.f32 %v2856, %v2868
        %v2870 = vpop.f32.mrf.mxu0
        %2871 = vdwg.mxu0
        %2872 = vmatpush.bf16.msra.mxu0 %v2600
        %2873 = vmatpush.bf16.msra.mxu0 %v2599
        %2874 = vmatpush.bf16.msra.mxu0 %v2598
        %2875 = vmatpush.bf16.msra.mxu0 %v2597
        %2876 = vmatpush.bf16.msra.mxu0 %v2596
        %2877 = vmatpush.bf16.msra.mxu0 %v2595
        %2878 = vmatpush.bf16.msra.mxu0 %v2594
        %2879 = vmatpush.bf16.msra.mxu0 %v2593
        %2880 = vmatmul.bf16.gmra.mxu0 %v1826
        %v2881 = vpop.f32.mrf.mxu0
        %v2882 = vadd.f32 %v2869, %v2881
        %v2883 = vpop.f32.mrf.mxu0
        %2884 = vdwg.mxu0
        %2885 = vmatpush.bf16.msra.mxu0 %v2608
        %2886 = vmatpush.bf16.msra.mxu0 %v2607
        %2887 = vmatpush.bf16.msra.mxu0 %v2606
        %2888 = vmatpush.bf16.msra.mxu0 %v2605
        %2889 = vmatpush.bf16.msra.mxu0 %v2604
        %2890 = vmatpush.bf16.msra.mxu0 %v2603
        %2891 = vmatpush.bf16.msra.mxu0 %v2602
        %2892 = vmatpush.bf16.msra.mxu0 %v2601
        %2893 = vmatmul.bf16.gmra.mxu0 %v1827
        %v2894 = vpop.f32.mrf.mxu0
        %v2895 = vadd.f32 %v2882, %v2894
        %v2896 = vpop.f32.mrf.mxu0
        %2897 = vdwg.mxu0
        %2898 = vmatpush.bf16.msra.mxu0 %v2616
        %2899 = vmatpush.bf16.msra.mxu0 %v2615
        %2900 = vmatpush.bf16.msra.mxu0 %v2614
        %2901 = vmatpush.bf16.msra.mxu0 %v2613
        %2902 = vmatpush.bf16.msra.mxu0 %v2612
        %2903 = vmatpush.bf16.msra.mxu0 %v2611
        %2904 = vmatpush.bf16.msra.mxu0 %v2610
        %2905 = vmatpush.bf16.msra.mxu0 %v2609
        %2906 = vmatmul.bf16.gmra.mxu0 %v1828
        %v2907 = vpop.f32.mrf.mxu0
        %v2908 = vadd.f32 %v2895, %v2907
        %v2909 = vpop.f32.mrf.mxu0
        %2910 = vdwg.mxu0
        %v2911 = vmax.f32 %v2908, 0.0
        %v2912 = vpack.c.bf16 %v2911, %v2911
        %v2913 = vld [vmem:[%s8] sm:$0xf]
        %v2914 = vld [vmem:[%s8 + $0x4] sm:$0xf]
        %v2915 = vld [vmem:[%s8 + $0x8] sm:$0xf]
        %v2916 = vld [vmem:[%s8 + $0xc] sm:$0xf]
        %v2917 = vld [vmem:[%s8 + $0x10] sm:$0xf]
        %v2918 = vld [vmem:[%s8 + $0x14] sm:$0xf]
        %v2919 = vld [vmem:[%s8 + $0x18] sm:$0xf]
        %v2920 = vld [vmem:[%s8 + $0x1c] sm:$0xf]
        %v2921 = vld [vmem:[%s9] sm:$0x1]
        %v2923 = vperm.slane %v2921, 0
        %v2933 = vunpack.c.l.b16 %v2913
        %v2934 = vunpack.c.l.b16 %v2914
        %v2935 = vunpack.c.l.b16 %v2915
        %v2936 = vunpack.c.l.b16 %v2916
        %v2937 = vunpack.c.l.b16 %v2917
        %v2938 = vunpack.c.l.b16 %v2918
        %v2939 = vunpack.c.l.b16 %v2919
        %v2940 = vunpack.c.l.b16 %v2920
        %v2941 = vpack.c.b16 %v2934, %v2933
        %v2942 = vpack.c.b16 %v2936, %v2935
        %v2943 = vpack.c.b16 %v2938, %v2937
        %v2944 = vpack.c.b16 %v2940, %v2939
        %vm2949 = vcmask 523264
        %v2951 = vsel %vm2949, %v2912, 0
        %2953 = vmatpush.bf16.msra.mxu0 0
        %2954 = vmatpush.bf16.msra.mxu0 0
        %2955 = vmatpush.bf16.msra.mxu0 0
        %2956 = vmatpush.bf16.msra.mxu0 0
        %2957 = vmatpush.bf16.msra.mxu0 %v2944
        %2958 = vmatpush.bf16.msra.mxu0 %v2943
        %2959 = vmatpush.bf16.msra.mxu0 %v2942
        %2960 = vmatpush.bf16.msra.mxu0 %v2941
        %2961 = vmatmul.bf16.gmra.mxu0 %v2951
        %v2962 = vpop.f32.mrf.mxu0
        %v2963 = vadd.f32 %v2923, %v2962
        %v2964 = vpop.f32.mrf.mxu0
        %2965 = vdwg.mxu0
        %v2966 = vmax.f32 %v2963, 0.0
        %v2967 = vpack.c.bf16 %v2966, %v2966
        %v2968 = vld [vmem:[%s10] sm:$0xf]
        %v2969 = vld [vmem:[%s10 + $0x4] sm:$0xf]
        %v2970 = vld [vmem:[%s10 + $0x8] sm:$0xf]
        %v2971 = vld [vmem:[%s10 + $0xc] sm:$0xf]
        %v2972 = vld [vmem:[%s11] sm:$0x1]
        %v2974 = vperm.slane %v2972, 0
        %v2980 = vunpack.c.l.b16 %v2968
        %v2981 = vunpack.c.l.b16 %v2969
        %v2982 = vunpack.c.l.b16 %v2970
        %v2983 = vunpack.c.l.b16 %v2971
        %v2984 = vpack.c.b16 %v2981, %v2980
        %v2985 = vpack.c.b16 %v2983, %v2982
        %vm2988 = vcmask 261120
        %v2990 = vsel %vm2988, %v2967, 0
        %2992 = vmatpush.bf16.msra.mxu0 0
        %2993 = vmatpush.bf16.msra.mxu0 0
        %2994 = vmatpush.bf16.msra.mxu0 0
        %2995 = vmatpush.bf16.msra.mxu0 0
        %2996 = vmatpush.bf16.msra.mxu0 0
        %2997 = vmatpush.bf16.msra.mxu0 0
        %2998 = vmatpush.bf16.msra.mxu0 %v2985
        %2999 = vmatpush.bf16.msra.mxu0 %v2984
        %3000 = vmatmul.bf16.gmra.mxu0 %v2990
        %v3001 = vpop.f32.mrf.mxu0
        %v3002 = vadd.f32 %v2974, %v3001
        %v3003 = vpop.f32.mrf.mxu0
        %3004 = vdwg.mxu0
        %v3005 = vld [vmem:[%s841] sm:$0x3]
        %v3006 = vmul.f32 %v3002, 0.5
        %v3007 = vmul.f32 %v3006, 1.442695
        %v3008 = vpow.pop %v3007
        %3010 = vrot.lane.b32.xlu0 %v3008, 120
        %v3011 = vpop.permute.xlu0 %3010
        %v3013 = vmul.f32 %v3005, %v3011
        %v3014 = vadd.f32 %v3002, %v3013
        %v3015 = vpack.c.bf16 %v3014, %v3014
        %v3016 = vld [vmem:[%s12] sm:$0xf]
        %v3017 = vld [vmem:[%s13] sm:$0x1]
        %v3019 = vperm.slane %v3017, 0
        %vm3021 = vcmask 64512
        %v3023 = vsel %vm3021, %v3015, 0
        %v3026 = vsel %vm1000, %v3016, 0
        %3028 = vmatpush.bf16.msra.mxu0 0
        %3029 = vmatpush.bf16.msra.mxu0 0
        %3030 = vmatpush.bf16.msra.mxu0 0
        %3031 = vmatpush.bf16.msra.mxu0 0
        %3032 = vmatpush.bf16.msra.mxu0 0
        %3033 = vmatpush.bf16.msra.mxu0 0
        %3034 = vmatpush.bf16.msra.mxu0 0
        %3035 = vmatpush.bf16.msra.mxu0 %v3026
        %3036 = vmatmul.bf16.gmra.mxu0 %v3023
        %v3037 = vpop.f32.mrf.mxu0
        %v3038 = vadd.f32 %v3019, %v3037
        %v3039 = vpop.f32.mrf.mxu0
        %3040 = vdwg.mxu0
        %v3041 = vmax.f32 %v3038, 0.0
        %v3042 = vpack.c.bf16 %v3041, %v3041
        %v3043 = vld [vmem:[%s14] sm:$0xf]
        %v3044 = vld [vmem:[%s14 + $0x4] sm:$0xf]
        %v3045 = vld [vmem:[%s14 + $0x8] sm:$0xf]
        %v3046 = vld [vmem:[%s14 + $0xc] sm:$0xf]
        %v3047 = vld [vmem:[%s15] sm:$0x1]
        %v3049 = vperm.slane %v3047, 0
        %v3055 = vunpack.c.l.b16 %v3043
        %v3056 = vunpack.c.l.b16 %v3044
        %v3057 = vunpack.c.l.b16 %v3045
        %v3058 = vunpack.c.l.b16 %v3046
        %v3059 = vpack.c.b16 %v3056, %v3055
        %v3060 = vpack.c.b16 %v3058, %v3057
        %v3064 = vsel %vm2988, %v3042, 0
        %3066 = vmatpush.bf16.msra.mxu0 0
        %3067 = vmatpush.bf16.msra.mxu0 0
        %3068 = vmatpush.bf16.msra.mxu0 0
        %3069 = vmatpush.bf16.msra.mxu0 0
        %3070 = vmatpush.bf16.msra.mxu0 0
        %3071 = vmatpush.bf16.msra.mxu0 0
        %3072 = vmatpush.bf16.msra.mxu0 %v3060
        %3073 = vmatpush.bf16.msra.mxu0 %v3059
        %3074 = vmatmul.bf16.gmra.mxu0 %v3064
        %v3075 = vpop.f32.mrf.mxu0
        %v3076 = vadd.f32 %v3049, %v3075
        %v3077 = vpop.f32.mrf.mxu0
        %3078 = vdwg.mxu0
        %v3079 = vmax.f32 %v3076, 0.0
        %v3080 = vpack.c.bf16 %v3079, %v3079
        %v3081 = vld [vmem:[#allocation2] sm:$0xff]
        %v3082 = vld [vmem:[#allocation2 + $0x8] sm:$0xff]
        %v3083 = vld [vmem:[#allocation2 + $0x10] sm:$0xff]
        %v3084 = vld [vmem:[#allocation2 + $0x18] sm:$0xff]
        %v3085 = vld [vmem:[#allocation2 + $0x20] sm:$0xff]
        %v3086 = vld [vmem:[#allocation2 + $0x28] sm:$0xff]
        %v3087 = vld [vmem:[#allocation2 + $0x30] sm:$0xff]
        %v3088 = vld [vmem:[#allocation2 + $0x38] sm:$0xff]
        %v3089 = vld [vmem:[#allocation2 + $0x40] sm:$0xff]
        %v3090 = vld [vmem:[#allocation2 + $0x48] sm:$0xff]
        %v3091 = vld [vmem:[#allocation2 + $0x50] sm:$0xff]
        %v3092 = vld [vmem:[#allocation2 + $0x58] sm:$0xff]
        %v3093 = vld [vmem:[#allocation2 + $0x60] sm:$0xff]
        %v3094 = vld [vmem:[#allocation2 + $0x68] sm:$0xff]
        %v3095 = vld [vmem:[#allocation2 + $0x70] sm:$0xff]
        %v3096 = vld [vmem:[#allocation2 + $0x78] sm:$0xff]
        %v3097 = vld [vmem:[#allocation2 + $0x80] sm:$0xff]
        %v3098 = vld [vmem:[#allocation2 + $0x88] sm:$0xff]
        %v3099 = vld [vmem:[#allocation2 + $0x90] sm:$0xff]
        %v3100 = vld [vmem:[#allocation2 + $0x98] sm:$0xff]
        %v3101 = vld [vmem:[#allocation2 + $0xa0] sm:$0xff]
        %v3102 = vld [vmem:[#allocation2 + $0xa8] sm:$0xff]
        %v3103 = vld [vmem:[#allocation2 + $0xb0] sm:$0xff]
        %v3104 = vld [vmem:[#allocation2 + $0xb8] sm:$0xff]
        %v3105 = vld [vmem:[#allocation2 + $0xc0] sm:$0xff]
        %v3106 = vld [vmem:[#allocation2 + $0xc8] sm:$0xff]
        %v3107 = vld [vmem:[#allocation2 + $0xd0] sm:$0xff]
        %v3108 = vld [vmem:[#allocation2 + $0xd8] sm:$0xff]
        %v3109 = vld [vmem:[#allocation2 + $0xe0] sm:$0xff]
        %v3110 = vld [vmem:[#allocation2 + $0xe8] sm:$0xff]
        %v3111 = vld [vmem:[#allocation2 + $0xf0] sm:$0xff]
        %v3112 = vld [vmem:[#allocation2 + $0xf8] sm:$0xff]
        %v3113 = vld [vmem:[#allocation2 + $0x100] sm:$0xff]
        %v3114 = vld [vmem:[#allocation2 + $0x108] sm:$0xff]
        %v3115 = vld [vmem:[#allocation2 + $0x110] sm:$0xff]
        %v3116 = vld [vmem:[#allocation2 + $0x118] sm:$0xff]
        %v3117 = vld [vmem:[#allocation2 + $0x120] sm:$0xff]
        %v3118 = vld [vmem:[#allocation2 + $0x128] sm:$0xff]
        %v3119 = vld [vmem:[#allocation2 + $0x130] sm:$0xff]
        %v3120 = vld [vmem:[#allocation2 + $0x138] sm:$0xff]
        %v3121 = vld [vmem:[#allocation2 + $0x140] sm:$0xff]
        %v3122 = vld [vmem:[#allocation2 + $0x148] sm:$0xff]
        %v3123 = vld [vmem:[#allocation2 + $0x150] sm:$0xff]
        %v3124 = vld [vmem:[#allocation2 + $0x158] sm:$0xff]
        %v3125 = vld [vmem:[#allocation2 + $0x160] sm:$0xff]
        %v3126 = vld [vmem:[#allocation2 + $0x168] sm:$0xff]
        %v3127 = vld [vmem:[#allocation2 + $0x170] sm:$0xff]
        %v3128 = vld [vmem:[#allocation2 + $0x178] sm:$0xff]
        %v3129 = vld [vmem:[#allocation2 + $0x180] sm:$0xff]
        %v3130 = vld [vmem:[#allocation2 + $0x188] sm:$0xff]
        %v3131 = vld [vmem:[#allocation2 + $0x190] sm:$0xff]
        %v3132 = vld [vmem:[#allocation2 + $0x198] sm:$0xff]
        %v3133 = vld [vmem:[#allocation2 + $0x1a0] sm:$0xff]
        %v3134 = vld [vmem:[#allocation2 + $0x1a8] sm:$0xff]
        %v3135 = vld [vmem:[#allocation2 + $0x1b0] sm:$0xff]
        %v3136 = vld [vmem:[#allocation2 + $0x1b8] sm:$0xff]
        %v3137 = vld [vmem:[%s17] sm:$0xff]
        %v3138 = vld [vmem:[%s17 + $0x8] sm:$0x3f]
        %v3141 = vperm.slane %v3137, 0
        %v3142 = vperm.slane %v3137, 1
        %v3143 = vperm.slane %v3137, 2
        %v3144 = vperm.slane %v3137, 3
        %v3145 = vperm.slane %v3137, 4
        %v3146 = vperm.slane %v3137, 5
        %v3147 = vperm.slane %v3137, 6
        %v3148 = vperm.slane %v3137, 7
        %v3149 = vperm.slane %v3138, 0
        %v3150 = vperm.slane %v3138, 1
        %v3151 = vperm.slane %v3138, 2
        %v3152 = vperm.slane %v3138, 3
        %v3153 = vperm.slane %v3138, 4
        %v3154 = vperm.slane %v3138, 5
        %v3225 = vunpack.c.l.b16 %v3081
        %v3226 = vunpack.c.h.b16 %v3081
        %v3227 = vunpack.c.l.b16 %v3082
        %v3228 = vunpack.c.h.b16 %v3082
        %v3229 = vunpack.c.l.b16 %v3083
        %v3230 = vunpack.c.h.b16 %v3083
        %v3231 = vunpack.c.l.b16 %v3084
        %v3232 = vunpack.c.h.b16 %v3084
        %v3233 = vunpack.c.l.b16 %v3085
        %v3234 = vunpack.c.h.b16 %v3085
        %v3235 = vunpack.c.l.b16 %v3086
        %v3236 = vunpack.c.h.b16 %v3086
        %v3237 = vunpack.c.l.b16 %v3087
        %v3238 = vunpack.c.h.b16 %v3087
        %v3239 = vunpack.c.l.b16 %v3088
        %v3240 = vunpack.c.h.b16 %v3088
        %v3241 = vunpack.c.l.b16 %v3089
        %v3242 = vunpack.c.h.b16 %v3089
        %v3243 = vunpack.c.l.b16 %v3090
        %v3244 = vunpack.c.h.b16 %v3090
        %v3245 = vunpack.c.l.b16 %v3091
        %v3246 = vunpack.c.h.b16 %v3091
        %v3247 = vunpack.c.l.b16 %v3092
        %v3248 = vunpack.c.h.b16 %v3092
        %v3249 = vunpack.c.l.b16 %v3093
        %v3250 = vunpack.c.h.b16 %v3093
        %v3251 = vunpack.c.l.b16 %v3094
        %v3252 = vunpack.c.h.b16 %v3094
        %v3253 = vunpack.c.l.b16 %v3095
        %v3254 = vunpack.c.h.b16 %v3095
        %v3255 = vunpack.c.l.b16 %v3096
        %v3256 = vunpack.c.h.b16 %v3096
        %v3257 = vunpack.c.l.b16 %v3097
        %v3258 = vunpack.c.h.b16 %v3097
        %v3259 = vunpack.c.l.b16 %v3098
        %v3260 = vunpack.c.h.b16 %v3098
        %v3261 = vunpack.c.l.b16 %v3099
        %v3262 = vunpack.c.h.b16 %v3099
        %v3263 = vunpack.c.l.b16 %v3100
        %v3264 = vunpack.c.h.b16 %v3100
        %v3265 = vunpack.c.l.b16 %v3101
        %v3266 = vunpack.c.h.b16 %v3101
        %v3267 = vunpack.c.l.b16 %v3102
        %v3268 = vunpack.c.h.b16 %v3102
        %v3269 = vunpack.c.l.b16 %v3103
        %v3270 = vunpack.c.h.b16 %v3103
        %v3271 = vunpack.c.l.b16 %v3104
        %v3272 = vunpack.c.h.b16 %v3104
        %v3273 = vunpack.c.l.b16 %v3105
        %v3274 = vunpack.c.h.b16 %v3105
        %v3275 = vunpack.c.l.b16 %v3106
        %v3276 = vunpack.c.h.b16 %v3106
        %v3277 = vunpack.c.l.b16 %v3107
        %v3278 = vunpack.c.h.b16 %v3107
        %v3279 = vunpack.c.l.b16 %v3108
        %v3280 = vunpack.c.h.b16 %v3108
        %v3281 = vunpack.c.l.b16 %v3109
        %v3282 = vunpack.c.h.b16 %v3109
        %v3283 = vunpack.c.l.b16 %v3110
        %v3284 = vunpack.c.h.b16 %v3110
        %v3285 = vunpack.c.l.b16 %v3111
        %v3286 = vunpack.c.h.b16 %v3111
        %v3287 = vunpack.c.l.b16 %v3112
        %v3288 = vunpack.c.h.b16 %v3112
        %v3289 = vunpack.c.l.b16 %v3113
        %v3290 = vunpack.c.h.b16 %v3113
        %v3291 = vunpack.c.l.b16 %v3114
        %v3292 = vunpack.c.h.b16 %v3114
        %v3293 = vunpack.c.l.b16 %v3115
        %v3294 = vunpack.c.h.b16 %v3115
        %v3295 = vunpack.c.l.b16 %v3116
        %v3296 = vunpack.c.h.b16 %v3116
        %v3297 = vunpack.c.l.b16 %v3117
        %v3298 = vunpack.c.h.b16 %v3117
        %v3299 = vunpack.c.l.b16 %v3118
        %v3300 = vunpack.c.h.b16 %v3118
        %v3301 = vunpack.c.l.b16 %v3119
        %v3302 = vunpack.c.h.b16 %v3119
        %v3303 = vunpack.c.l.b16 %v3120
        %v3304 = vunpack.c.h.b16 %v3120
        %v3305 = vunpack.c.l.b16 %v3121
        %v3306 = vunpack.c.h.b16 %v3121
        %v3307 = vunpack.c.l.b16 %v3122
        %v3308 = vunpack.c.h.b16 %v3122
        %v3309 = vunpack.c.l.b16 %v3123
        %v3310 = vunpack.c.h.b16 %v3123
        %v3311 = vunpack.c.l.b16 %v3124
        %v3312 = vunpack.c.h.b16 %v3124
        %v3313 = vunpack.c.l.b16 %v3125
        %v3314 = vunpack.c.h.b16 %v3125
        %v3315 = vunpack.c.l.b16 %v3126
        %v3316 = vunpack.c.h.b16 %v3126
        %v3317 = vunpack.c.l.b16 %v3127
        %v3318 = vunpack.c.h.b16 %v3127
        %v3319 = vunpack.c.l.b16 %v3128
        %v3320 = vunpack.c.h.b16 %v3128
        %v3321 = vunpack.c.l.b16 %v3129
        %v3322 = vunpack.c.h.b16 %v3129
        %v3323 = vunpack.c.l.b16 %v3130
        %v3324 = vunpack.c.h.b16 %v3130
        %v3325 = vunpack.c.l.b16 %v3131
        %v3326 = vunpack.c.h.b16 %v3131
        %v3327 = vunpack.c.l.b16 %v3132
        %v3328 = vunpack.c.h.b16 %v3132
        %v3329 = vunpack.c.l.b16 %v3133
        %v3330 = vunpack.c.h.b16 %v3133
        %v3331 = vunpack.c.l.b16 %v3134
        %v3332 = vunpack.c.h.b16 %v3134
        %v3333 = vunpack.c.l.b16 %v3135
        %v3334 = vunpack.c.h.b16 %v3135
        %v3335 = vunpack.c.l.b16 %v3136
        %v3336 = vunpack.c.h.b16 %v3136
        %v3337 = vpack.c.b16 %v3239, %v3225
        %v3338 = vpack.c.b16 %v3240, %v3226
        %v3339 = vpack.c.b16 %v3241, %v3227
        %v3340 = vpack.c.b16 %v3242, %v3228
        %v3341 = vpack.c.b16 %v3243, %v3229
        %v3342 = vpack.c.b16 %v3244, %v3230
        %v3343 = vpack.c.b16 %v3245, %v3231
        %v3344 = vpack.c.b16 %v3246, %v3232
        %v3345 = vpack.c.b16 %v3247, %v3233
        %v3346 = vpack.c.b16 %v3248, %v3234
        %v3347 = vpack.c.b16 %v3249, %v3235
        %v3348 = vpack.c.b16 %v3250, %v3236
        %v3349 = vpack.c.b16 %v3251, %v3237
        %v3350 = vpack.c.b16 %v3252, %v3238
        %v3351 = vpack.c.b16 %v3267, %v3253
        %v3352 = vpack.c.b16 %v3268, %v3254
        %v3353 = vpack.c.b16 %v3269, %v3255
        %v3354 = vpack.c.b16 %v3270, %v3256
        %v3355 = vpack.c.b16 %v3271, %v3257
        %v3356 = vpack.c.b16 %v3272, %v3258
        %v3357 = vpack.c.b16 %v3273, %v3259
        %v3358 = vpack.c.b16 %v3274, %v3260
        %v3359 = vpack.c.b16 %v3275, %v3261
        %v3360 = vpack.c.b16 %v3276, %v3262
        %v3361 = vpack.c.b16 %v3277, %v3263
        %v3362 = vpack.c.b16 %v3278, %v3264
        %v3363 = vpack.c.b16 %v3279, %v3265
        %v3364 = vpack.c.b16 %v3280, %v3266
        %v3365 = vpack.c.b16 %v3295, %v3281
        %v3366 = vpack.c.b16 %v3296, %v3282
        %v3367 = vpack.c.b16 %v3297, %v3283
        %v3368 = vpack.c.b16 %v3298, %v3284
        %v3369 = vpack.c.b16 %v3299, %v3285
        %v3370 = vpack.c.b16 %v3300, %v3286
        %v3371 = vpack.c.b16 %v3301, %v3287
        %v3372 = vpack.c.b16 %v3302, %v3288
        %v3373 = vpack.c.b16 %v3303, %v3289
        %v3374 = vpack.c.b16 %v3304, %v3290
        %v3375 = vpack.c.b16 %v3305, %v3291
        %v3376 = vpack.c.b16 %v3306, %v3292
        %v3377 = vpack.c.b16 %v3307, %v3293
        %v3378 = vpack.c.b16 %v3308, %v3294
        %v3379 = vpack.c.b16 %v3323, %v3309
        %v3380 = vpack.c.b16 %v3324, %v3310
        %v3381 = vpack.c.b16 %v3325, %v3311
        %v3382 = vpack.c.b16 %v3326, %v3312
        %v3383 = vpack.c.b16 %v3327, %v3313
        %v3384 = vpack.c.b16 %v3328, %v3314
        %v3385 = vpack.c.b16 %v3329, %v3315
        %v3386 = vpack.c.b16 %v3330, %v3316
        %v3387 = vpack.c.b16 %v3331, %v3317
        %v3388 = vpack.c.b16 %v3332, %v3318
        %v3389 = vpack.c.b16 %v3333, %v3319
        %v3390 = vpack.c.b16 %v3334, %v3320
        %v3391 = vpack.c.b16 %v3335, %v3321
        %v3392 = vpack.c.b16 %v3336, %v3322
        %v3450 = vsel %vm2949, %v3080, 0
        %3452 = vmatpush.bf16.msra.mxu0 0
        %3453 = vmatpush.bf16.msra.mxu0 0
        %3454 = vmatpush.bf16.msra.mxu0 0
        %3455 = vmatpush.bf16.msra.mxu0 0
        %3456 = vmatpush.bf16.msra.mxu0 %v3379
        %3457 = vmatpush.bf16.msra.mxu0 %v3365
        %3458 = vmatpush.bf16.msra.mxu0 %v3351
        %3459 = vmatpush.bf16.msra.mxu0 %v3337
        %3460 = vmatmul.bf16.gmra.mxu0 %v3450
        %v3461 = vpop.f32.mrf.mxu0
        %v3462 = vadd.f32 %v3141, %v3461
        %v3463 = vpop.f32.mrf.mxu0
        %3464 = vdwg.mxu0
        %3465 = vmatpush.bf16.msra.mxu0 0
        %3466 = vmatpush.bf16.msra.mxu0 0
        %3467 = vmatpush.bf16.msra.mxu0 0
        %3468 = vmatpush.bf16.msra.mxu0 0
        %3469 = vmatpush.bf16.msra.mxu0 %v3380
        %3470 = vmatpush.bf16.msra.mxu0 %v3366
        %3471 = vmatpush.bf16.msra.mxu0 %v3352
        %3472 = vmatpush.bf16.msra.mxu0 %v3338
        %3473 = vmatmul.bf16.gmra.mxu0 %v3450
        %v3474 = vpop.f32.mrf.mxu0
        %v3475 = vadd.f32 %v3142, %v3474
        %v3476 = vpop.f32.mrf.mxu0
        %3477 = vdwg.mxu0
        %3478 = vmatpush.bf16.msra.mxu0 0
        %3479 = vmatpush.bf16.msra.mxu0 0
        %3480 = vmatpush.bf16.msra.mxu0 0
        %3481 = vmatpush.bf16.msra.mxu0 0
        %3482 = vmatpush.bf16.msra.mxu0 %v3381
        %3483 = vmatpush.bf16.msra.mxu0 %v3367
        %3484 = vmatpush.bf16.msra.mxu0 %v3353
        %3485 = vmatpush.bf16.msra.mxu0 %v3339
        %3486 = vmatmul.bf16.gmra.mxu0 %v3450
        %v3487 = vpop.f32.mrf.mxu0
        %v3488 = vadd.f32 %v3143, %v3487
        %v3489 = vpop.f32.mrf.mxu0
        %3490 = vdwg.mxu0
        %3491 = vmatpush.bf16.msra.mxu0 0
        %3492 = vmatpush.bf16.msra.mxu0 0
        %3493 = vmatpush.bf16.msra.mxu0 0
        %3494 = vmatpush.bf16.msra.mxu0 0
        %3495 = vmatpush.bf16.msra.mxu0 %v3382
        %3496 = vmatpush.bf16.msra.mxu0 %v3368
        %3497 = vmatpush.bf16.msra.mxu0 %v3354
        %3498 = vmatpush.bf16.msra.mxu0 %v3340
        %3499 = vmatmul.bf16.gmra.mxu0 %v3450
        %v3500 = vpop.f32.mrf.mxu0
        %v3501 = vadd.f32 %v3144, %v3500
        %v3502 = vpop.f32.mrf.mxu0
        %3503 = vdwg.mxu0
        %3504 = vmatpush.bf16.msra.mxu0 0
        %3505 = vmatpush.bf16.msra.mxu0 0
        %3506 = vmatpush.bf16.msra.mxu0 0
        %3507 = vmatpush.bf16.msra.mxu0 0
        %3508 = vmatpush.bf16.msra.mxu0 %v3383
        %3509 = vmatpush.bf16.msra.mxu0 %v3369
        %3510 = vmatpush.bf16.msra.mxu0 %v3355
        %3511 = vmatpush.bf16.msra.mxu0 %v3341
        %3512 = vmatmul.bf16.gmra.mxu0 %v3450
        %v3513 = vpop.f32.mrf.mxu0
        %v3514 = vadd.f32 %v3145, %v3513
        %v3515 = vpop.f32.mrf.mxu0
        %3516 = vdwg.mxu0
        %3517 = vmatpush.bf16.msra.mxu0 0
        %3518 = vmatpush.bf16.msra.mxu0 0
        %3519 = vmatpush.bf16.msra.mxu0 0
        %3520 = vmatpush.bf16.msra.mxu0 0
        %3521 = vmatpush.bf16.msra.mxu0 %v3384
        %3522 = vmatpush.bf16.msra.mxu0 %v3370
        %3523 = vmatpush.bf16.msra.mxu0 %v3356
        %3524 = vmatpush.bf16.msra.mxu0 %v3342
        %3525 = vmatmul.bf16.gmra.mxu0 %v3450
        %v3526 = vpop.f32.mrf.mxu0
        %v3527 = vadd.f32 %v3146, %v3526
        %v3528 = vpop.f32.mrf.mxu0
        %3529 = vdwg.mxu0
        %3530 = vmatpush.bf16.msra.mxu0 0
        %3531 = vmatpush.bf16.msra.mxu0 0
        %3532 = vmatpush.bf16.msra.mxu0 0
        %3533 = vmatpush.bf16.msra.mxu0 0
        %3534 = vmatpush.bf16.msra.mxu0 %v3385
        %3535 = vmatpush.bf16.msra.mxu0 %v3371
        %3536 = vmatpush.bf16.msra.mxu0 %v3357
        %3537 = vmatpush.bf16.msra.mxu0 %v3343
        %3538 = vmatmul.bf16.gmra.mxu0 %v3450
        %v3539 = vpop.f32.mrf.mxu0
        %v3540 = vadd.f32 %v3147, %v3539
        %v3541 = vpop.f32.mrf.mxu0
        %3542 = vdwg.mxu0
        %3543 = vmatpush.bf16.msra.mxu0 0
        %3544 = vmatpush.bf16.msra.mxu0 0
        %3545 = vmatpush.bf16.msra.mxu0 0
        %3546 = vmatpush.bf16.msra.mxu0 0
        %3547 = vmatpush.bf16.msra.mxu0 %v3386
        %3548 = vmatpush.bf16.msra.mxu0 %v3372
        %3549 = vmatpush.bf16.msra.mxu0 %v3358
        %3550 = vmatpush.bf16.msra.mxu0 %v3344
        %3551 = vmatmul.bf16.gmra.mxu0 %v3450
        %v3552 = vpop.f32.mrf.mxu0
        %v3553 = vadd.f32 %v3148, %v3552
        %v3554 = vpop.f32.mrf.mxu0
        %3555 = vdwg.mxu0
        %3556 = vmatpush.bf16.msra.mxu0 0
        %3557 = vmatpush.bf16.msra.mxu0 0
        %3558 = vmatpush.bf16.msra.mxu0 0
        %3559 = vmatpush.bf16.msra.mxu0 0
        %3560 = vmatpush.bf16.msra.mxu0 %v3387
        %3561 = vmatpush.bf16.msra.mxu0 %v3373
        %3562 = vmatpush.bf16.msra.mxu0 %v3359
        %3563 = vmatpush.bf16.msra.mxu0 %v3345
        %3564 = vmatmul.bf16.gmra.mxu0 %v3450
        %v3565 = vpop.f32.mrf.mxu0
        %v3566 = vadd.f32 %v3149, %v3565
        %v3567 = vpop.f32.mrf.mxu0
        %3568 = vdwg.mxu0
        %3569 = vmatpush.bf16.msra.mxu0 0
        %3570 = vmatpush.bf16.msra.mxu0 0
        %3571 = vmatpush.bf16.msra.mxu0 0
        %3572 = vmatpush.bf16.msra.mxu0 0
        %3573 = vmatpush.bf16.msra.mxu0 %v3388
        %3574 = vmatpush.bf16.msra.mxu0 %v3374
        %3575 = vmatpush.bf16.msra.mxu0 %v3360
        %3576 = vmatpush.bf16.msra.mxu0 %v3346
        %3577 = vmatmul.bf16.gmra.mxu0 %v3450
        %v3578 = vpop.f32.mrf.mxu0
        %v3579 = vadd.f32 %v3150, %v3578
        %v3580 = vpop.f32.mrf.mxu0
        %3581 = vdwg.mxu0
        %3582 = vmatpush.bf16.msra.mxu0 0
        %3583 = vmatpush.bf16.msra.mxu0 0
        %3584 = vmatpush.bf16.msra.mxu0 0
        %3585 = vmatpush.bf16.msra.mxu0 0
        %3586 = vmatpush.bf16.msra.mxu0 %v3389
        %3587 = vmatpush.bf16.msra.mxu0 %v3375
        %3588 = vmatpush.bf16.msra.mxu0 %v3361
        %3589 = vmatpush.bf16.msra.mxu0 %v3347
        %3590 = vmatmul.bf16.gmra.mxu0 %v3450
        %v3591 = vpop.f32.mrf.mxu0
        %v3592 = vadd.f32 %v3151, %v3591
        %v3593 = vpop.f32.mrf.mxu0
        %3594 = vdwg.mxu0
        %3595 = vmatpush.bf16.msra.mxu0 0
        %3596 = vmatpush.bf16.msra.mxu0 0
        %3597 = vmatpush.bf16.msra.mxu0 0
        %3598 = vmatpush.bf16.msra.mxu0 0
        %3599 = vmatpush.bf16.msra.mxu0 %v3390
        %3600 = vmatpush.bf16.msra.mxu0 %v3376
        %3601 = vmatpush.bf16.msra.mxu0 %v3362
        %3602 = vmatpush.bf16.msra.mxu0 %v3348
        %3603 = vmatmul.bf16.gmra.mxu0 %v3450
        %v3604 = vpop.f32.mrf.mxu0
        %v3605 = vadd.f32 %v3152, %v3604
        %v3606 = vpop.f32.mrf.mxu0
        %3607 = vdwg.mxu0
        %3608 = vmatpush.bf16.msra.mxu0 0
        %3609 = vmatpush.bf16.msra.mxu0 0
        %3610 = vmatpush.bf16.msra.mxu0 0
        %3611 = vmatpush.bf16.msra.mxu0 0
        %3612 = vmatpush.bf16.msra.mxu0 %v3391
        %3613 = vmatpush.bf16.msra.mxu0 %v3377
        %3614 = vmatpush.bf16.msra.mxu0 %v3363
        %3615 = vmatpush.bf16.msra.mxu0 %v3349
        %3616 = vmatmul.bf16.gmra.mxu0 %v3450
        %v3617 = vpop.f32.mrf.mxu0
        %v3618 = vadd.f32 %v3153, %v3617
        %v3619 = vpop.f32.mrf.mxu0
        %3620 = vdwg.mxu0
        %3621 = vmatpush.bf16.msra.mxu0 0
        %3622 = vmatpush.bf16.msra.mxu0 0
        %3623 = vmatpush.bf16.msra.mxu0 0
        %3624 = vmatpush.bf16.msra.mxu0 0
        %3625 = vmatpush.bf16.msra.mxu0 %v3392
        %3626 = vmatpush.bf16.msra.mxu0 %v3378
        %3627 = vmatpush.bf16.msra.mxu0 %v3364
        %3628 = vmatpush.bf16.msra.mxu0 %v3350
        %3629 = vmatmul.bf16.gmra.mxu0 %v3450
        %v3630 = vpop.f32.mrf.mxu0
        %v3631 = vadd.f32 %v3154, %v3630
        %v3632 = vpop.f32.mrf.mxu0
        %3633 = vdwg.mxu0
        %v3634 = vmax.f32 %v3462, 0.0
        %v3635 = vmax.f32 %v3475, 0.0
        %v3636 = vmax.f32 %v3488, 0.0
        %v3637 = vmax.f32 %v3501, 0.0
        %v3638 = vmax.f32 %v3514, 0.0
        %v3639 = vmax.f32 %v3527, 0.0
        %v3640 = vmax.f32 %v3540, 0.0
        %v3641 = vmax.f32 %v3553, 0.0
        %v3642 = vmax.f32 %v3566, 0.0
        %v3643 = vmax.f32 %v3579, 0.0
        %v3644 = vmax.f32 %v3592, 0.0
        %v3645 = vmax.f32 %v3605, 0.0
        %v3646 = vmax.f32 %v3618, 0.0
        %v3647 = vmax.f32 %v3631, 0.0
        %v3650 = vrot.slane %v3636, 6
        %v3651 = vrot.slane %v3637, 6
        %v3656 = vrot.slane %v3638, 4
        %v3657 = vrot.slane %v3639, 4
        %v3662 = vrot.slane %v3640, 2
        %v3663 = vrot.slane %v3641, 2
        %v3668 = vrot.slane %v3644, 6
        %v3669 = vrot.slane %v3645, 6
        %v3674 = vrot.slane %v3646, 4
        %v3675 = vrot.slane %v3647, 4
        %v3678 = vsel %vm941, %v3634, %v3650
        %v3679 = vsel %vm941, %v3635, %v3651
        %v3680 = vsel %vm1000, %v3678, %v3656
        %v3681 = vsel %vm1000, %v3679, %v3657
        %vm3682 = vcmask 1045504
        %v3683 = vsel %vm3682, %v3680, %v3662
        %v3684 = vsel %vm3682, %v3681, %v3663
        %v3685 = vsel %vm941, %v3642, %v3668
        %v3686 = vsel %vm941, %v3643, %v3669
        %v3687 = vsel %vm1000, %v3685, %v3674
        %v3688 = vsel %vm1000, %v3686, %v3675
        %v3693 = vrot.slane %v3683, 2
        %v3694 = vrot.slane %v3687, 2
        %v3695 = vsel %vm3682, %v3693, %v3694
        %v3696 = vrot.slane %v3684, 2
        %v3697 = vrot.slane %v3688, 2
        %v3698 = vsel %vm3682, %v3696, %v3697
        %v3703 = vsel %vm1000, %v3694, 0.0
        %v3704 = vsel %vm1000, %v3697, 0.0
        %v3705 = vpack.c.bf16 %v3687, %v3683
        %v3706 = vpack.c.bf16 %v3688, %v3684
        %v3707 = vld [vmem:[%s18] sm:$0xff]
        %v3708 = vld [vmem:[%s18 + $0x8] sm:$0xff]
        %v3709 = vld [vmem:[%s18 + $0x10] sm:$0xff]
        %v3710 = vld [vmem:[%s18 + $0x18] sm:$0xff]
        %v3711 = vld [vmem:[%s18 + $0x20] sm:$0xff]
        %v3712 = vld [vmem:[%s18 + $0x28] sm:$0xff]
        %v3713 = vld [vmem:[%s18 + $0x30] sm:$0xff]
        %v3714 = vld [vmem:[%s18 + $0x38] sm:$0xff]
        %v3715 = vld [vmem:[%s18 + $0x40] sm:$0xff]
        %v3716 = vld [vmem:[%s18 + $0x48] sm:$0xff]
        %v3717 = vld [vmem:[%s18 + $0x50] sm:$0xff]
        %v3718 = vld [vmem:[%s18 + $0x58] sm:$0xff]
        %v3719 = vld [vmem:[%s18 + $0x60] sm:$0xff]
        %v3720 = vld [vmem:[%s18 + $0x68] sm:$0xff]
        %v3721 = vld [vmem:[%s18 + $0x70] sm:$0xff]
        %v3722 = vld [vmem:[%s18 + $0x78] sm:$0xff]
        %v3723 = vld [vmem:[%s18 + $0x80] sm:$0xff]
        %v3724 = vld [vmem:[%s18 + $0x88] sm:$0xff]
        %v3725 = vld [vmem:[%s18 + $0x90] sm:$0xff]
        %v3726 = vld [vmem:[%s18 + $0x98] sm:$0xff]
        %v3727 = vld [vmem:[%s18 + $0xa0] sm:$0xff]
        %v3728 = vld [vmem:[%s18 + $0xa8] sm:$0xff]
        %v3729 = vld [vmem:[%s18 + $0xb0] sm:$0xff]
        %v3730 = vld [vmem:[%s18 + $0xb8] sm:$0xff]
        %v3731 = vld [vmem:[%s18 + $0xc0] sm:$0xff]
        %v3732 = vld [vmem:[%s18 + $0xc8] sm:$0xff]
        %v3733 = vld [vmem:[%s18 + $0xd0] sm:$0xff]
        %v3734 = vld [vmem:[%s18 + $0xd8] sm:$0xff]
        %v3735 = vld [vmem:[%s18 + $0xe0] sm:$0xff]
        %v3736 = vld [vmem:[%s18 + $0xe8] sm:$0xff]
        %v3737 = vld [vmem:[%s18 + $0xf0] sm:$0xff]
        %v3738 = vld [vmem:[%s18 + $0xf8] sm:$0xff]
        %v3739 = vld [vmem:[%s20] sm:$0x3]
        %v3741 = vperm.slane %v3739, 0
        %v3742 = vperm.slane %v3739, 1
        %v3777 = vunpack.c.l.b16 %v3707
        %v3778 = vunpack.c.h.b16 %v3707
        %v3779 = vunpack.c.l.b16 %v3708
        %v3780 = vunpack.c.h.b16 %v3708
        %v3781 = vunpack.c.l.b16 %v3709
        %v3782 = vunpack.c.h.b16 %v3709
        %v3783 = vunpack.c.l.b16 %v3710
        %v3784 = vunpack.c.h.b16 %v3710
        %v3785 = vunpack.c.l.b16 %v3711
        %v3786 = vunpack.c.h.b16 %v3711
        %v3787 = vunpack.c.l.b16 %v3712
        %v3788 = vunpack.c.h.b16 %v3712
        %v3789 = vunpack.c.l.b16 %v3713
        %v3790 = vunpack.c.h.b16 %v3713
        %v3791 = vunpack.c.l.b16 %v3714
        %v3792 = vunpack.c.h.b16 %v3714
        %v3793 = vunpack.c.l.b16 %v3715
        %v3794 = vunpack.c.h.b16 %v3715
        %v3795 = vunpack.c.l.b16 %v3716
        %v3796 = vunpack.c.h.b16 %v3716
        %v3797 = vunpack.c.l.b16 %v3717
        %v3798 = vunpack.c.h.b16 %v3717
        %v3799 = vunpack.c.l.b16 %v3718
        %v3800 = vunpack.c.h.b16 %v3718
        %v3801 = vunpack.c.l.b16 %v3719
        %v3802 = vunpack.c.h.b16 %v3719
        %v3803 = vunpack.c.l.b16 %v3720
        %v3804 = vunpack.c.h.b16 %v3720
        %v3805 = vunpack.c.l.b16 %v3721
        %v3806 = vunpack.c.h.b16 %v3721
        %v3807 = vunpack.c.l.b16 %v3722
        %v3808 = vunpack.c.h.b16 %v3722
        %v3809 = vunpack.c.l.b16 %v3723
        %v3810 = vunpack.c.h.b16 %v3723
        %v3811 = vunpack.c.l.b16 %v3724
        %v3812 = vunpack.c.h.b16 %v3724
        %v3813 = vunpack.c.l.b16 %v3725
        %v3814 = vunpack.c.h.b16 %v3725
        %v3815 = vunpack.c.l.b16 %v3726
        %v3816 = vunpack.c.h.b16 %v3726
        %v3817 = vunpack.c.l.b16 %v3727
        %v3818 = vunpack.c.h.b16 %v3727
        %v3819 = vunpack.c.l.b16 %v3728
        %v3820 = vunpack.c.h.b16 %v3728
        %v3821 = vunpack.c.l.b16 %v3729
        %v3822 = vunpack.c.h.b16 %v3729
        %v3823 = vunpack.c.l.b16 %v3730
        %v3824 = vunpack.c.h.b16 %v3730
        %v3825 = vunpack.c.l.b16 %v3731
        %v3826 = vunpack.c.h.b16 %v3731
        %v3827 = vunpack.c.l.b16 %v3732
        %v3828 = vunpack.c.h.b16 %v3732
        %v3829 = vunpack.c.l.b16 %v3733
        %v3830 = vunpack.c.h.b16 %v3733
        %v3831 = vunpack.c.l.b16 %v3734
        %v3832 = vunpack.c.h.b16 %v3734
        %v3833 = vunpack.c.l.b16 %v3735
        %v3834 = vunpack.c.h.b16 %v3735
        %v3835 = vunpack.c.l.b16 %v3736
        %v3836 = vunpack.c.h.b16 %v3736
        %v3837 = vunpack.c.l.b16 %v3737
        %v3838 = vunpack.c.h.b16 %v3737
        %v3839 = vunpack.c.l.b16 %v3738
        %v3840 = vunpack.c.h.b16 %v3738
        %v3841 = vpack.c.b16 %v3779, %v3777
        %v3842 = vpack.c.b16 %v3780, %v3778
        %v3843 = vpack.c.b16 %v3783, %v3781
        %v3844 = vpack.c.b16 %v3784, %v3782
        %v3845 = vpack.c.b16 %v3787, %v3785
        %v3846 = vpack.c.b16 %v3788, %v3786
        %v3847 = vpack.c.b16 %v3791, %v3789
        %v3848 = vpack.c.b16 %v3792, %v3790
        %v3849 = vpack.c.b16 %v3795, %v3793
        %v3850 = vpack.c.b16 %v3796, %v3794
        %v3851 = vpack.c.b16 %v3799, %v3797
        %v3852 = vpack.c.b16 %v3800, %v3798
        %v3853 = vpack.c.b16 %v3803, %v3801
        %v3854 = vpack.c.b16 %v3804, %v3802
        %v3855 = vpack.c.b16 %v3807, %v3805
        %v3856 = vpack.c.b16 %v3808, %v3806
        %v3857 = vpack.c.b16 %v3811, %v3809
        %v3858 = vpack.c.b16 %v3812, %v3810
        %v3859 = vpack.c.b16 %v3815, %v3813
        %v3860 = vpack.c.b16 %v3816, %v3814
        %v3861 = vpack.c.b16 %v3819, %v3817
        %v3862 = vpack.c.b16 %v3820, %v3818
        %v3863 = vpack.c.b16 %v3823, %v3821
        %v3864 = vpack.c.b16 %v3824, %v3822
        %v3865 = vpack.c.b16 %v3827, %v3825
        %v3866 = vpack.c.b16 %v3828, %v3826
        %v3867 = vpack.c.b16 %v3831, %v3829
        %v3868 = vpack.c.b16 %v3832, %v3830
        %v3869 = vpack.c.b16 %v3835, %v3833
        %v3870 = vpack.c.b16 %v3836, %v3834
        %v3871 = vpack.c.b16 %v3839, %v3837
        %v3872 = vpack.c.b16 %v3840, %v3838
        %3905 = vmatpush.bf16.msra.mxu0 %v3855
        %3906 = vmatpush.bf16.msra.mxu0 %v3853
        %3907 = vmatpush.bf16.msra.mxu0 %v3851
        %3908 = vmatpush.bf16.msra.mxu0 %v3849
        %3909 = vmatpush.bf16.msra.mxu0 %v3847
        %3910 = vmatpush.bf16.msra.mxu0 %v3845
        %3911 = vmatpush.bf16.msra.mxu0 %v3843
        %3912 = vmatpush.bf16.msra.mxu0 %v3841
        %3913 = vmatmul.bf16.gmra.mxu0 %v3705
        %v3914 = vpop.f32.mrf.mxu0
        %v3915 = vadd.f32 %v3741, %v3914
        %v3916 = vpop.f32.mrf.mxu0
        %v3917 = vadd.f32 %v3741, %v3916
        %3918 = vdwg.mxu0
        %3919 = vmatpush.bf16.msra.mxu0 %v3871
        %3920 = vmatpush.bf16.msra.mxu0 %v3869
        %3921 = vmatpush.bf16.msra.mxu0 %v3867
        %3922 = vmatpush.bf16.msra.mxu0 %v3865
        %3923 = vmatpush.bf16.msra.mxu0 %v3863
        %3924 = vmatpush.bf16.msra.mxu0 %v3861
        %3925 = vmatpush.bf16.msra.mxu0 %v3859
        %3926 = vmatpush.bf16.msra.mxu0 %v3857
        %3927 = vmatmul.bf16.gmra.mxu0 %v3706
        %v3928 = vpop.f32.mrf.mxu0
        %v3929 = vadd.f32 %v3915, %v3928
        %v3930 = vpop.f32.mrf.mxu0
        %v3931 = vadd.f32 %v3917, %v3930
        %3932 = vdwg.mxu0
        %3933 = vmatpush.bf16.msra.mxu0 %v3856
        %3934 = vmatpush.bf16.msra.mxu0 %v3854
        %3935 = vmatpush.bf16.msra.mxu0 %v3852
        %3936 = vmatpush.bf16.msra.mxu0 %v3850
        %3937 = vmatpush.bf16.msra.mxu0 %v3848
        %3938 = vmatpush.bf16.msra.mxu0 %v3846
        %3939 = vmatpush.bf16.msra.mxu0 %v3844
        %3940 = vmatpush.bf16.msra.mxu0 %v3842
        %3941 = vmatmul.bf16.gmra.mxu0 %v3705
        %v3942 = vpop.f32.mrf.mxu0
        %v3943 = vadd.f32 %v3742, %v3942
        %v3944 = vpop.f32.mrf.mxu0
        %v3945 = vadd.f32 %v3742, %v3944
        %3946 = vdwg.mxu0
        %3947 = vmatpush.bf16.msra.mxu0 %v3872
        %3948 = vmatpush.bf16.msra.mxu0 %v3870
        %3949 = vmatpush.bf16.msra.mxu0 %v3868
        %3950 = vmatpush.bf16.msra.mxu0 %v3866
        %3951 = vmatpush.bf16.msra.mxu0 %v3864
        %3952 = vmatpush.bf16.msra.mxu0 %v3862
        %3953 = vmatpush.bf16.msra.mxu0 %v3860
        %3954 = vmatpush.bf16.msra.mxu0 %v3858
        %3955 = vmatmul.bf16.gmra.mxu0 %v3706
        %v3956 = vpop.f32.mrf.mxu0
        %v3957 = vadd.f32 %v3943, %v3956
        %v3958 = vpop.f32.mrf.mxu0
        %v3959 = vadd.f32 %v3945, %v3958
        %3960 = vdwg.mxu0
        %v3961 = vmax.f32 %v3929, 0.0
        %v3962 = vmax.f32 %v3957, 0.0
        %v3963 = vmax.f32 %v3931, 0.0
        %v3964 = vmax.f32 %v3959, 0.0
        %v3965 = vpack.c.bf16 %v3703, %v3695
        %v3966 = vpack.c.bf16 %v3704, %v3698
        %v3967 = vld [vmem:[%s19] sm:$0xff]
        %v3968 = vld [vmem:[%s19 + $0x8] sm:$0xff]
        %v3969 = vld [vmem:[%s19 + $0x10] sm:$0xff]
        %v3970 = vld [vmem:[%s19 + $0x18] sm:$0xff]
        %v3971 = vld [vmem:[%s19 + $0x20] sm:$0xff]
        %v3972 = vld [vmem:[%s19 + $0x28] sm:$0xff]
        %v3973 = vld [vmem:[%s19 + $0x30] sm:$0xff]
        %v3974 = vld [vmem:[%s19 + $0x38] sm:$0xff]
        %v3975 = vld [vmem:[%s19 + $0x40] sm:$0xff]
        %v3976 = vld [vmem:[%s19 + $0x48] sm:$0xff]
        %v3977 = vld [vmem:[%s19 + $0x50] sm:$0xff]
        %v3978 = vld [vmem:[%s19 + $0x58] sm:$0xff]
        %v3979 = vld [vmem:[%s19 + $0x60] sm:$0xff]
        %v3980 = vld [vmem:[%s19 + $0x68] sm:$0xff]
        %v3981 = vld [vmem:[%s19 + $0x70] sm:$0xff]
        %v3982 = vld [vmem:[%s19 + $0x78] sm:$0xff]
        %v3983 = vld [vmem:[%s19 + $0x80] sm:$0xff]
        %v3984 = vld [vmem:[%s19 + $0x88] sm:$0xff]
        %v3985 = vld [vmem:[%s19 + $0x90] sm:$0xff]
        %v3986 = vld [vmem:[%s19 + $0x98] sm:$0xff]
        %v3987 = vld [vmem:[%s19 + $0xa0] sm:$0xff]
        %v3988 = vld [vmem:[%s19 + $0xa8] sm:$0xff]
        %v3989 = vld [vmem:[%s19 + $0xb0] sm:$0xff]
        %v3990 = vld [vmem:[%s19 + $0xb8] sm:$0xff]
        %v3991 = vld [vmem:[%s19 + $0xc0] sm:$0xff]
        %v3992 = vld [vmem:[%s19 + $0xc8] sm:$0xff]
        %v3993 = vld [vmem:[%s19 + $0xd0] sm:$0xff]
        %v3994 = vld [vmem:[%s19 + $0xd8] sm:$0xff]
        %v3995 = vld [vmem:[%s19 + $0xe0] sm:$0xff]
        %v3996 = vld [vmem:[%s19 + $0xe8] sm:$0xff]
        %v3997 = vld [vmem:[%s19 + $0xf0] sm:$0xff]
        %v3998 = vld [vmem:[%s19 + $0xf8] sm:$0xff]
        %v3999 = vld [vmem:[%s19 + $0x100] sm:$0xff]
        %v4000 = vld [vmem:[%s19 + $0x108] sm:$0xff]
        %v4001 = vld [vmem:[%s19 + $0x110] sm:$0xff]
        %v4002 = vld [vmem:[%s19 + $0x118] sm:$0xff]
        %v4003 = vld [vmem:[%s19 + $0x120] sm:$0xff]
        %v4004 = vld [vmem:[%s19 + $0x128] sm:$0xff]
        %v4005 = vld [vmem:[%s19 + $0x130] sm:$0xff]
        %v4006 = vld [vmem:[%s19 + $0x138] sm:$0xff]
        %v4007 = vld [vmem:[%s19 + $0x140] sm:$0xff]
        %v4008 = vld [vmem:[%s19 + $0x148] sm:$0xff]
        %v4009 = vld [vmem:[%s19 + $0x150] sm:$0xff]
        %v4010 = vld [vmem:[%s19 + $0x158] sm:$0xff]
        %v4011 = vld [vmem:[%s19 + $0x160] sm:$0xff]
        %v4012 = vld [vmem:[%s19 + $0x168] sm:$0xff]
        %v4013 = vld [vmem:[%s19 + $0x170] sm:$0xff]
        %v4014 = vld [vmem:[%s19 + $0x178] sm:$0xff]
        %v4015 = vld [vmem:[%s19 + $0x180] sm:$0xff]
        %v4016 = vld [vmem:[%s19 + $0x188] sm:$0xff]
        %v4017 = vld [vmem:[%s19 + $0x190] sm:$0xff]
        %v4018 = vld [vmem:[%s19 + $0x198] sm:$0xff]
        %v4019 = vld [vmem:[%s19 + $0x1a0] sm:$0xff]
        %v4020 = vld [vmem:[%s19 + $0x1a8] sm:$0xff]
        %v4021 = vld [vmem:[%s19 + $0x1b0] sm:$0xff]
        %v4022 = vld [vmem:[%s19 + $0x1b8] sm:$0xff]
        %v4023 = vld [vmem:[%s19 + $0x1c0] sm:$0xff]
        %v4024 = vld [vmem:[%s19 + $0x1c8] sm:$0xff]
        %v4025 = vld [vmem:[%s19 + $0x1d0] sm:$0xff]
        %v4026 = vld [vmem:[%s19 + $0x1d8] sm:$0xff]
        %v4027 = vld [vmem:[%s19 + $0x1e0] sm:$0xff]
        %v4028 = vld [vmem:[%s19 + $0x1e8] sm:$0xff]
        %v4029 = vld [vmem:[%s19 + $0x1f0] sm:$0xff]
        %v4030 = vld [vmem:[%s19 + $0x1f8] sm:$0xff]
        %v4095 = vunpack.c.l.b16 %v3967
        %v4096 = vunpack.c.h.b16 %v3967
        %v4097 = vunpack.c.l.b16 %v3968
        %v4098 = vunpack.c.h.b16 %v3968
        %v4099 = vunpack.c.l.b16 %v3969
        %v4100 = vunpack.c.h.b16 %v3969
        %v4101 = vunpack.c.l.b16 %v3970
        %v4102 = vunpack.c.h.b16 %v3970
        %v4103 = vunpack.c.l.b16 %v3971
        %v4104 = vunpack.c.h.b16 %v3971
        %v4105 = vunpack.c.l.b16 %v3972
        %v4106 = vunpack.c.h.b16 %v3972
        %v4107 = vunpack.c.l.b16 %v3973
        %v4108 = vunpack.c.h.b16 %v3973
        %v4109 = vunpack.c.l.b16 %v3974
        %v4110 = vunpack.c.h.b16 %v3974
        %v4111 = vunpack.c.l.b16 %v3975
        %v4112 = vunpack.c.h.b16 %v3975
        %v4113 = vunpack.c.l.b16 %v3976
        %v4114 = vunpack.c.h.b16 %v3976
        %v4115 = vunpack.c.l.b16 %v3977
        %v4116 = vunpack.c.h.b16 %v3977
        %v4117 = vunpack.c.l.b16 %v3978
        %v4118 = vunpack.c.h.b16 %v3978
        %v4119 = vunpack.c.l.b16 %v3979
        %v4120 = vunpack.c.h.b16 %v3979
        %v4121 = vunpack.c.l.b16 %v3980
        %v4122 = vunpack.c.h.b16 %v3980
        %v4123 = vunpack.c.l.b16 %v3981
        %v4124 = vunpack.c.h.b16 %v3981
        %v4125 = vunpack.c.l.b16 %v3982
        %v4126 = vunpack.c.h.b16 %v3982
        %v4127 = vunpack.c.l.b16 %v3983
        %v4128 = vunpack.c.h.b16 %v3983
        %v4129 = vunpack.c.l.b16 %v3984
        %v4130 = vunpack.c.h.b16 %v3984
        %v4131 = vunpack.c.l.b16 %v3985
        %v4132 = vunpack.c.h.b16 %v3985
        %v4133 = vunpack.c.l.b16 %v3986
        %v4134 = vunpack.c.h.b16 %v3986
        %v4135 = vunpack.c.l.b16 %v3987
        %v4136 = vunpack.c.h.b16 %v3987
        %v4137 = vunpack.c.l.b16 %v3988
        %v4138 = vunpack.c.h.b16 %v3988
        %v4139 = vunpack.c.l.b16 %v3989
        %v4140 = vunpack.c.h.b16 %v3989
        %v4141 = vunpack.c.l.b16 %v3990
        %v4142 = vunpack.c.h.b16 %v3990
        %v4143 = vunpack.c.l.b16 %v3991
        %v4144 = vunpack.c.h.b16 %v3991
        %v4145 = vunpack.c.l.b16 %v3992
        %v4146 = vunpack.c.h.b16 %v3992
        %v4147 = vunpack.c.l.b16 %v3993
        %v4148 = vunpack.c.h.b16 %v3993
        %v4149 = vunpack.c.l.b16 %v3994
        %v4150 = vunpack.c.h.b16 %v3994
        %v4151 = vunpack.c.l.b16 %v3995
        %v4152 = vunpack.c.h.b16 %v3995
        %v4153 = vunpack.c.l.b16 %v3996
        %v4154 = vunpack.c.h.b16 %v3996
        %v4155 = vunpack.c.l.b16 %v3997
        %v4156 = vunpack.c.h.b16 %v3997
        %v4157 = vunpack.c.l.b16 %v3998
        %v4158 = vunpack.c.h.b16 %v3998
        %v4159 = vunpack.c.l.b16 %v3999
        %v4160 = vunpack.c.h.b16 %v3999
        %v4161 = vunpack.c.l.b16 %v4000
        %v4162 = vunpack.c.h.b16 %v4000
        %v4163 = vunpack.c.l.b16 %v4001
        %v4164 = vunpack.c.h.b16 %v4001
        %v4165 = vunpack.c.l.b16 %v4002
        %v4166 = vunpack.c.h.b16 %v4002
        %v4167 = vunpack.c.l.b16 %v4003
        %v4168 = vunpack.c.h.b16 %v4003
        %v4169 = vunpack.c.l.b16 %v4004
        %v4170 = vunpack.c.h.b16 %v4004
        %v4171 = vunpack.c.l.b16 %v4005
        %v4172 = vunpack.c.h.b16 %v4005
        %v4173 = vunpack.c.l.b16 %v4006
        %v4174 = vunpack.c.h.b16 %v4006
        %v4175 = vunpack.c.l.b16 %v4007
        %v4176 = vunpack.c.h.b16 %v4007
        %v4177 = vunpack.c.l.b16 %v4008
        %v4178 = vunpack.c.h.b16 %v4008
        %v4179 = vunpack.c.l.b16 %v4009
        %v4180 = vunpack.c.h.b16 %v4009
        %v4181 = vunpack.c.l.b16 %v4010
        %v4182 = vunpack.c.h.b16 %v4010
        %v4183 = vunpack.c.l.b16 %v4011
        %v4184 = vunpack.c.h.b16 %v4011
        %v4185 = vunpack.c.l.b16 %v4012
        %v4186 = vunpack.c.h.b16 %v4012
        %v4187 = vunpack.c.l.b16 %v4013
        %v4188 = vunpack.c.h.b16 %v4013
        %v4189 = vunpack.c.l.b16 %v4014
        %v4190 = vunpack.c.h.b16 %v4014
        %v4191 = vunpack.c.l.b16 %v4015
        %v4192 = vunpack.c.h.b16 %v4015
        %v4193 = vunpack.c.l.b16 %v4016
        %v4194 = vunpack.c.h.b16 %v4016
        %v4195 = vunpack.c.l.b16 %v4017
        %v4196 = vunpack.c.h.b16 %v4017
        %v4197 = vunpack.c.l.b16 %v4018
        %v4198 = vunpack.c.h.b16 %v4018
        %v4199 = vunpack.c.l.b16 %v4019
        %v4200 = vunpack.c.h.b16 %v4019
        %v4201 = vunpack.c.l.b16 %v4020
        %v4202 = vunpack.c.h.b16 %v4020
        %v4203 = vunpack.c.l.b16 %v4021
        %v4204 = vunpack.c.h.b16 %v4021
        %v4205 = vunpack.c.l.b16 %v4022
        %v4206 = vunpack.c.h.b16 %v4022
        %v4207 = vunpack.c.l.b16 %v4023
        %v4208 = vunpack.c.h.b16 %v4023
        %v4209 = vunpack.c.l.b16 %v4024
        %v4210 = vunpack.c.h.b16 %v4024
        %v4211 = vunpack.c.l.b16 %v4025
        %v4212 = vunpack.c.h.b16 %v4025
        %v4213 = vunpack.c.l.b16 %v4026
        %v4214 = vunpack.c.h.b16 %v4026
        %v4215 = vunpack.c.l.b16 %v4027
        %v4216 = vunpack.c.h.b16 %v4027
        %v4217 = vunpack.c.l.b16 %v4028
        %v4218 = vunpack.c.h.b16 %v4028
        %v4219 = vunpack.c.l.b16 %v4029
        %v4220 = vunpack.c.h.b16 %v4029
        %v4221 = vunpack.c.l.b16 %v4030
        %v4222 = vunpack.c.h.b16 %v4030
        %v4223 = vpack.c.b16 %v4097, %v4095
        %v4224 = vpack.c.b16 %v4098, %v4096
        %v4225 = vpack.c.b16 %v4101, %v4099
        %v4226 = vpack.c.b16 %v4102, %v4100
        %v4227 = vpack.c.b16 %v4105, %v4103
        %v4228 = vpack.c.b16 %v4106, %v4104
        %v4229 = vpack.c.b16 %v4109, %v4107
        %v4230 = vpack.c.b16 %v4110, %v4108
        %v4231 = vpack.c.b16 %v4113, %v4111
        %v4232 = vpack.c.b16 %v4114, %v4112
        %v4233 = vpack.c.b16 %v4117, %v4115
        %v4234 = vpack.c.b16 %v4118, %v4116
        %v4235 = vpack.c.b16 %v4121, %v4119
        %v4236 = vpack.c.b16 %v4122, %v4120
        %v4237 = vpack.c.b16 %v4125, %v4123
        %v4238 = vpack.c.b16 %v4126, %v4124
        %v4239 = vpack.c.b16 %v4129, %v4127
        %v4240 = vpack.c.b16 %v4130, %v4128
        %v4241 = vpack.c.b16 %v4133, %v4131
        %v4242 = vpack.c.b16 %v4134, %v4132
        %v4243 = vpack.c.b16 %v4137, %v4135
        %v4244 = vpack.c.b16 %v4138, %v4136
        %v4245 = vpack.c.b16 %v4141, %v4139
        %v4246 = vpack.c.b16 %v4142, %v4140
        %v4247 = vpack.c.b16 %v4145, %v4143
        %v4248 = vpack.c.b16 %v4146, %v4144
        %v4249 = vpack.c.b16 %v4149, %v4147
        %v4250 = vpack.c.b16 %v4150, %v4148
        %v4251 = vpack.c.b16 %v4153, %v4151
        %v4252 = vpack.c.b16 %v4154, %v4152
        %v4253 = vpack.c.b16 %v4157, %v4155
        %v4254 = vpack.c.b16 %v4158, %v4156
        %v4255 = vpack.c.b16 %v4161, %v4159
        %v4256 = vpack.c.b16 %v4162, %v4160
        %v4257 = vpack.c.b16 %v4165, %v4163
        %v4258 = vpack.c.b16 %v4166, %v4164
        %v4259 = vpack.c.b16 %v4169, %v4167
        %v4260 = vpack.c.b16 %v4170, %v4168
        %v4261 = vpack.c.b16 %v4173, %v4171
        %v4262 = vpack.c.b16 %v4174, %v4172
        %v4263 = vpack.c.b16 %v4177, %v4175
        %v4264 = vpack.c.b16 %v4178, %v4176
        %v4265 = vpack.c.b16 %v4181, %v4179
        %v4266 = vpack.c.b16 %v4182, %v4180
        %v4267 = vpack.c.b16 %v4185, %v4183
        %v4268 = vpack.c.b16 %v4186, %v4184
        %v4269 = vpack.c.b16 %v4189, %v4187
        %v4270 = vpack.c.b16 %v4190, %v4188
        %v4271 = vpack.c.b16 %v4193, %v4191
        %v4272 = vpack.c.b16 %v4194, %v4192
        %v4273 = vpack.c.b16 %v4197, %v4195
        %v4274 = vpack.c.b16 %v4198, %v4196
        %v4275 = vpack.c.b16 %v4201, %v4199
        %v4276 = vpack.c.b16 %v4202, %v4200
        %v4277 = vpack.c.b16 %v4205, %v4203
        %v4278 = vpack.c.b16 %v4206, %v4204
        %v4279 = vpack.c.b16 %v4209, %v4207
        %v4280 = vpack.c.b16 %v4210, %v4208
        %v4281 = vpack.c.b16 %v4213, %v4211
        %v4282 = vpack.c.b16 %v4214, %v4212
        %v4283 = vpack.c.b16 %v4217, %v4215
        %v4284 = vpack.c.b16 %v4218, %v4216
        %v4285 = vpack.c.b16 %v4221, %v4219
        %v4286 = vpack.c.b16 %v4222, %v4220
        %4351 = vmatpush.bf16.msra.mxu0 %v4237
        %4352 = vmatpush.bf16.msra.mxu0 %v4235
        %4353 = vmatpush.bf16.msra.mxu0 %v4233
        %4354 = vmatpush.bf16.msra.mxu0 %v4231
        %4355 = vmatpush.bf16.msra.mxu0 %v4229
        %4356 = vmatpush.bf16.msra.mxu0 %v4227
        %4357 = vmatpush.bf16.msra.mxu0 %v4225
        %4358 = vmatpush.bf16.msra.mxu0 %v4223
        %4359 = vmatmul.bf16.gmra.mxu0 %v3705
        %v4360 = vpop.f32.mrf.mxu0
        %v4361 = vadd.f32 %v3741, %v4360
        %v4362 = vpop.f32.mrf.mxu0
        %v4363 = vadd.f32 %v3741, %v4362
        %4364 = vdwg.mxu0
        %4365 = vmatpush.bf16.msra.mxu0 %v4253
        %4366 = vmatpush.bf16.msra.mxu0 %v4251
        %4367 = vmatpush.bf16.msra.mxu0 %v4249
        %4368 = vmatpush.bf16.msra.mxu0 %v4247
        %4369 = vmatpush.bf16.msra.mxu0 %v4245
        %4370 = vmatpush.bf16.msra.mxu0 %v4243
        %4371 = vmatpush.bf16.msra.mxu0 %v4241
        %4372 = vmatpush.bf16.msra.mxu0 %v4239
        %4373 = vmatmul.bf16.gmra.mxu0 %v3706
        %v4374 = vpop.f32.mrf.mxu0
        %v4375 = vadd.f32 %v4361, %v4374
        %v4376 = vpop.f32.mrf.mxu0
        %v4377 = vadd.f32 %v4363, %v4376
        %4378 = vdwg.mxu0
        %4379 = vmatpush.bf16.msra.mxu0 %v4269
        %4380 = vmatpush.bf16.msra.mxu0 %v4267
        %4381 = vmatpush.bf16.msra.mxu0 %v4265
        %4382 = vmatpush.bf16.msra.mxu0 %v4263
        %4383 = vmatpush.bf16.msra.mxu0 %v4261
        %4384 = vmatpush.bf16.msra.mxu0 %v4259
        %4385 = vmatpush.bf16.msra.mxu0 %v4257
        %4386 = vmatpush.bf16.msra.mxu0 %v4255
        %4387 = vmatmul.bf16.gmra.mxu0 %v3965
        %v4388 = vpop.f32.mrf.mxu0
        %v4389 = vadd.f32 %v4375, %v4388
        %v4390 = vpop.f32.mrf.mxu0
        %v4391 = vadd.f32 %v4377, %v4390
        %4392 = vdwg.mxu0
        %4393 = vmatpush.bf16.msra.mxu0 %v4285
        %4394 = vmatpush.bf16.msra.mxu0 %v4283
        %4395 = vmatpush.bf16.msra.mxu0 %v4281
        %4396 = vmatpush.bf16.msra.mxu0 %v4279
        %4397 = vmatpush.bf16.msra.mxu0 %v4277
        %4398 = vmatpush.bf16.msra.mxu0 %v4275
        %4399 = vmatpush.bf16.msra.mxu0 %v4273
        %4400 = vmatpush.bf16.msra.mxu0 %v4271
        %4401 = vmatmul.bf16.gmra.mxu0 %v3966
        %v4402 = vpop.f32.mrf.mxu0
        %v4403 = vadd.f32 %v4389, %v4402
        %v4404 = vpop.f32.mrf.mxu0
        %v4405 = vadd.f32 %v4391, %v4404
        %4406 = vdwg.mxu0
        %4407 = vmatpush.bf16.msra.mxu0 %v4238
        %4408 = vmatpush.bf16.msra.mxu0 %v4236
        %4409 = vmatpush.bf16.msra.mxu0 %v4234
        %4410 = vmatpush.bf16.msra.mxu0 %v4232
        %4411 = vmatpush.bf16.msra.mxu0 %v4230
        %4412 = vmatpush.bf16.msra.mxu0 %v4228
        %4413 = vmatpush.bf16.msra.mxu0 %v4226
        %4414 = vmatpush.bf16.msra.mxu0 %v4224
        %4415 = vmatmul.bf16.gmra.mxu0 %v3705
        %v4416 = vpop.f32.mrf.mxu0
        %v4417 = vadd.f32 %v3742, %v4416
        %v4418 = vpop.f32.mrf.mxu0
        %v4419 = vadd.f32 %v3742, %v4418
        %4420 = vdwg.mxu0
        %4421 = vmatpush.bf16.msra.mxu0 %v4254
        %4422 = vmatpush.bf16.msra.mxu0 %v4252
        %4423 = vmatpush.bf16.msra.mxu0 %v4250
        %4424 = vmatpush.bf16.msra.mxu0 %v4248
        %4425 = vmatpush.bf16.msra.mxu0 %v4246
        %4426 = vmatpush.bf16.msra.mxu0 %v4244
        %4427 = vmatpush.bf16.msra.mxu0 %v4242
        %4428 = vmatpush.bf16.msra.mxu0 %v4240
        %4429 = vmatmul.bf16.gmra.mxu0 %v3706
        %v4430 = vpop.f32.mrf.mxu0
        %v4431 = vadd.f32 %v4417, %v4430
        %v4432 = vpop.f32.mrf.mxu0
        %v4433 = vadd.f32 %v4419, %v4432
        %4434 = vdwg.mxu0
        %4435 = vmatpush.bf16.msra.mxu0 %v4270
        %4436 = vmatpush.bf16.msra.mxu0 %v4268
        %4437 = vmatpush.bf16.msra.mxu0 %v4266
        %4438 = vmatpush.bf16.msra.mxu0 %v4264
        %4439 = vmatpush.bf16.msra.mxu0 %v4262
        %4440 = vmatpush.bf16.msra.mxu0 %v4260
        %4441 = vmatpush.bf16.msra.mxu0 %v4258
        %4442 = vmatpush.bf16.msra.mxu0 %v4256
        %4443 = vmatmul.bf16.gmra.mxu0 %v3965
        %v4444 = vpop.f32.mrf.mxu0
        %v4445 = vadd.f32 %v4431, %v4444
        %v4446 = vpop.f32.mrf.mxu0
        %v4447 = vadd.f32 %v4433, %v4446
        %4448 = vdwg.mxu0
        %4449 = vmatpush.bf16.msra.mxu0 %v4286
        %4450 = vmatpush.bf16.msra.mxu0 %v4284
        %4451 = vmatpush.bf16.msra.mxu0 %v4282
        %4452 = vmatpush.bf16.msra.mxu0 %v4280
        %4453 = vmatpush.bf16.msra.mxu0 %v4278
        %4454 = vmatpush.bf16.msra.mxu0 %v4276
        %4455 = vmatpush.bf16.msra.mxu0 %v4274
        %4456 = vmatpush.bf16.msra.mxu0 %v4272
        %4457 = vmatmul.bf16.gmra.mxu0 %v3966
        %v4458 = vpop.f32.mrf.mxu0
        %v4459 = vadd.f32 %v4445, %v4458
        %v4460 = vpop.f32.mrf.mxu0
        %v4461 = vadd.f32 %v4447, %v4460
        %4462 = vdwg.mxu0
        %v4463 = vmax.f32 %v4403, 0.0
        %v4464 = vmax.f32 %v4459, 0.0
        %v4465 = vmax.f32 %v4405, 0.0
        %v4466 = vmax.f32 %v4461, 0.0
        %v4471 = vrot.slane %v3961, 2
        %v4472 = vrot.slane %v3963, 2
        %v4473 = vsel %vm3682, %v4471, %v4472
        %v4474 = vrot.slane %v3962, 2
        %v4475 = vrot.slane %v3964, 2
        %v4476 = vsel %vm3682, %v4474, %v4475
        %v4481 = vsel %vm1000, %v4472, 0.0
        %v4482 = vsel %vm1000, %v4475, 0.0
        %v4483 = vpack.c.bf16 %v3963, %v3961
        %v4484 = vpack.c.bf16 %v3964, %v3962
        %v4485 = vld [vmem:[%s21] sm:$0xf]
        %v4486 = vld [vmem:[%s21 + $0x4] sm:$0xf]
        %v4487 = vld [vmem:[%s21 + $0x8] sm:$0xf]
        %v4488 = vld [vmem:[%s21 + $0xc] sm:$0xf]
        %v4489 = vld [vmem:[%s21 + $0x10] sm:$0xf]
        %v4490 = vld [vmem:[%s21 + $0x14] sm:$0xf]
        %v4491 = vld [vmem:[%s21 + $0x18] sm:$0xf]
        %v4492 = vld [vmem:[%s21 + $0x1c] sm:$0xf]
        %v4493 = vld [vmem:[%s21 + $0x20] sm:$0xf]
        %v4494 = vld [vmem:[%s21 + $0x24] sm:$0xf]
        %v4495 = vld [vmem:[%s21 + $0x28] sm:$0xf]
        %v4496 = vld [vmem:[%s21 + $0x2c] sm:$0xf]
        %v4497 = vld [vmem:[%s21 + $0x30] sm:$0xf]
        %v4498 = vld [vmem:[%s21 + $0x34] sm:$0xf]
        %v4499 = vld [vmem:[%s21 + $0x38] sm:$0xf]
        %v4500 = vld [vmem:[%s21 + $0x3c] sm:$0xf]
        %v4501 = vld [vmem:[%s21 + $0x40] sm:$0xf]
        %v4502 = vld [vmem:[%s21 + $0x44] sm:$0xf]
        %v4503 = vld [vmem:[%s21 + $0x48] sm:$0xf]
        %v4504 = vld [vmem:[%s21 + $0x4c] sm:$0xf]
        %v4505 = vld [vmem:[%s21 + $0x50] sm:$0xf]
        %v4506 = vld [vmem:[%s21 + $0x54] sm:$0xf]
        %v4507 = vld [vmem:[%s21 + $0x58] sm:$0xf]
        %v4508 = vld [vmem:[%s21 + $0x5c] sm:$0xf]
        %v4509 = vld [vmem:[%s21 + $0x60] sm:$0xf]
        %v4510 = vld [vmem:[%s21 + $0x64] sm:$0xf]
        %v4511 = vld [vmem:[%s21 + $0x68] sm:$0xf]
        %v4512 = vld [vmem:[%s21 + $0x6c] sm:$0xf]
        %v4513 = vld [vmem:[%s21 + $0x70] sm:$0xf]
        %v4514 = vld [vmem:[%s21 + $0x74] sm:$0xf]
        %v4515 = vld [vmem:[%s21 + $0x78] sm:$0xf]
        %v4516 = vld [vmem:[%s21 + $0x7c] sm:$0xf]
        %v4517 = vld [vmem:[%s23] sm:$0x1]
        %v4519 = vperm.slane %v4517, 0
        %v4553 = vunpack.c.l.b16 %v4485
        %v4554 = vunpack.c.l.b16 %v4486
        %v4555 = vunpack.c.l.b16 %v4487
        %v4556 = vunpack.c.l.b16 %v4488
        %v4557 = vunpack.c.l.b16 %v4489
        %v4558 = vunpack.c.l.b16 %v4490
        %v4559 = vunpack.c.l.b16 %v4491
        %v4560 = vunpack.c.l.b16 %v4492
        %v4561 = vunpack.c.l.b16 %v4493
        %v4562 = vunpack.c.l.b16 %v4494
        %v4563 = vunpack.c.l.b16 %v4495
        %v4564 = vunpack.c.l.b16 %v4496
        %v4565 = vunpack.c.l.b16 %v4497
        %v4566 = vunpack.c.l.b16 %v4498
        %v4567 = vunpack.c.l.b16 %v4499
        %v4568 = vunpack.c.l.b16 %v4500
        %v4569 = vunpack.c.l.b16 %v4501
        %v4570 = vunpack.c.l.b16 %v4502
        %v4571 = vunpack.c.l.b16 %v4503
        %v4572 = vunpack.c.l.b16 %v4504
        %v4573 = vunpack.c.l.b16 %v4505
        %v4574 = vunpack.c.l.b16 %v4506
        %v4575 = vunpack.c.l.b16 %v4507
        %v4576 = vunpack.c.l.b16 %v4508
        %v4577 = vunpack.c.l.b16 %v4509
        %v4578 = vunpack.c.l.b16 %v4510
        %v4579 = vunpack.c.l.b16 %v4511
        %v4580 = vunpack.c.l.b16 %v4512
        %v4581 = vunpack.c.l.b16 %v4513
        %v4582 = vunpack.c.l.b16 %v4514
        %v4583 = vunpack.c.l.b16 %v4515
        %v4584 = vunpack.c.l.b16 %v4516
        %v4585 = vpack.c.b16 %v4554, %v4553
        %v4586 = vpack.c.b16 %v4556, %v4555
        %v4587 = vpack.c.b16 %v4558, %v4557
        %v4588 = vpack.c.b16 %v4560, %v4559
        %v4589 = vpack.c.b16 %v4562, %v4561
        %v4590 = vpack.c.b16 %v4564, %v4563
        %v4591 = vpack.c.b16 %v4566, %v4565
        %v4592 = vpack.c.b16 %v4568, %v4567
        %v4593 = vpack.c.b16 %v4570, %v4569
        %v4594 = vpack.c.b16 %v4572, %v4571
        %v4595 = vpack.c.b16 %v4574, %v4573
        %v4596 = vpack.c.b16 %v4576, %v4575
        %v4597 = vpack.c.b16 %v4578, %v4577
        %v4598 = vpack.c.b16 %v4580, %v4579
        %v4599 = vpack.c.b16 %v4582, %v4581
        %v4600 = vpack.c.b16 %v4584, %v4583
        %4617 = vmatpush.bf16.msra.mxu0 %v4592
        %4618 = vmatpush.bf16.msra.mxu0 %v4591
        %4619 = vmatpush.bf16.msra.mxu0 %v4590
        %4620 = vmatpush.bf16.msra.mxu0 %v4589
        %4621 = vmatpush.bf16.msra.mxu0 %v4588
        %4622 = vmatpush.bf16.msra.mxu0 %v4587
        %4623 = vmatpush.bf16.msra.mxu0 %v4586
        %4624 = vmatpush.bf16.msra.mxu0 %v4585
        %4625 = vmatmul.bf16.gmra.mxu0 %v4483
        %v4626 = vpop.f32.mrf.mxu0
        %v4627 = vadd.f32 %v4519, %v4626
        %v4628 = vpop.f32.mrf.mxu0
        %v4629 = vadd.f32 %v4519, %v4628
        %4630 = vdwg.mxu0
        %4631 = vmatpush.bf16.msra.mxu0 %v4600
        %4632 = vmatpush.bf16.msra.mxu0 %v4599
        %4633 = vmatpush.bf16.msra.mxu0 %v4598
        %4634 = vmatpush.bf16.msra.mxu0 %v4597
        %4635 = vmatpush.bf16.msra.mxu0 %v4596
        %4636 = vmatpush.bf16.msra.mxu0 %v4595
        %4637 = vmatpush.bf16.msra.mxu0 %v4594
        %4638 = vmatpush.bf16.msra.mxu0 %v4593
        %4639 = vmatmul.bf16.gmra.mxu0 %v4484
        %v4640 = vpop.f32.mrf.mxu0
        %v4641 = vadd.f32 %v4627, %v4640
        %v4642 = vpop.f32.mrf.mxu0
        %v4643 = vadd.f32 %v4629, %v4642
        %4644 = vdwg.mxu0
        %v4645 = vxor.u32 %v4641, 2147483648
        %v4646 = vxor.u32 %v4643, 2147483648
        %v4647 = vmul.f32 %v4645, 1.442695
        %v4648 = vpow.pop %v4647
        %v4649 = vmul.f32 %v4646, 1.442695
        %v4650 = vpow.pop %v4649
        %v4651 = vadd.f32 %v4648, 1.0
        %v4652 = vadd.f32 %v4650, 1.0
        %v4653 = vrcp.pop %v4651
        %v4654 = vmul.f32 %v4651, %v4653
        %v4655 = vsub.f32 1.0, %v4654
        %v4656 = vmul.f32 %v4653, %v4655
        %v4657 = vadd.f32 %v4653, %v4656
        %vm4658 = vweird.f32 %v4651
        %vm4659 = vweird.f32 %v4653
        %vm4660 = vmor %vm4658, %vm4659
        %v4661 = vsel %vm4660, %v4653, %v4657
        %v4662 = vand.u32 2147483647, %v4651
        %vm4663 = vcmp.eq.f32.partialorder %v4662, 8.507059e+37
        %v4664 = vand.u32 %v4651, 2147483648
        %v4665 = vor.u32 1.1754944e-38, %v4664
        %v4666 = vsel %vm4663, %v4665, %v4661
        %v4667 = vmul.f32 1.0, %v4666
        %v4668 = vrcp.pop %v4652
        %v4669 = vmul.f32 %v4652, %v4668
        %v4670 = vsub.f32 1.0, %v4669
        %v4671 = vmul.f32 %v4668, %v4670
        %v4672 = vadd.f32 %v4668, %v4671
        %vm4673 = vweird.f32 %v4652
        %vm4674 = vweird.f32 %v4668
        %vm4675 = vmor %vm4673, %vm4674
        %v4676 = vsel %vm4675, %v4668, %v4672
        %v4677 = vand.u32 2147483647, %v4652
        %vm4678 = vcmp.eq.f32.partialorder %v4677, 8.507059e+37
        %v4679 = vand.u32 %v4652, 2147483648
        %v4680 = vor.u32 1.1754944e-38, %v4679
        %v4681 = vsel %vm4678, %v4680, %v4676
        %v4682 = vmul.f32 1.0, %v4681
        %v4683 = vpack.c.bf16 %v4465, %v4463
        %v4684 = vpack.c.bf16 %v4466, %v4464
        %v4685 = vld [vmem:[%s22] sm:$0xf]
        %v4686 = vld [vmem:[%s22 + $0x4] sm:$0xf]
        %v4687 = vld [vmem:[%s22 + $0x8] sm:$0xf]
        %v4688 = vld [vmem:[%s22 + $0xc] sm:$0xf]
        %v4689 = vld [vmem:[%s22 + $0x10] sm:$0xf]
        %v4690 = vld [vmem:[%s22 + $0x14] sm:$0xf]
        %v4691 = vld [vmem:[%s22 + $0x18] sm:$0xf]
        %v4692 = vld [vmem:[%s22 + $0x1c] sm:$0xf]
        %v4693 = vld [vmem:[%s22 + $0x20] sm:$0xf]
        %v4694 = vld [vmem:[%s22 + $0x24] sm:$0xf]
        %v4695 = vld [vmem:[%s22 + $0x28] sm:$0xf]
        %v4696 = vld [vmem:[%s22 + $0x2c] sm:$0xf]
        %v4697 = vld [vmem:[%s22 + $0x30] sm:$0xf]
        %v4698 = vld [vmem:[%s22 + $0x34] sm:$0xf]
        %v4699 = vld [vmem:[%s22 + $0x38] sm:$0xf]
        %v4700 = vld [vmem:[%s22 + $0x3c] sm:$0xf]
        %v4701 = vld [vmem:[%s22 + $0x40] sm:$0xf]
        %v4702 = vld [vmem:[%s22 + $0x44] sm:$0xf]
        %v4703 = vld [vmem:[%s22 + $0x48] sm:$0xf]
        %v4704 = vld [vmem:[%s22 + $0x4c] sm:$0xf]
        %v4705 = vld [vmem:[%s22 + $0x50] sm:$0xf]
        %v4706 = vld [vmem:[%s22 + $0x54] sm:$0xf]
        %v4707 = vld [vmem:[%s22 + $0x58] sm:$0xf]
        %v4708 = vld [vmem:[%s22 + $0x5c] sm:$0xf]
        %v4709 = vld [vmem:[%s22 + $0x60] sm:$0xf]
        %v4710 = vld [vmem:[%s22 + $0x64] sm:$0xf]
        %v4711 = vld [vmem:[%s22 + $0x68] sm:$0xf]
        %v4712 = vld [vmem:[%s22 + $0x6c] sm:$0xf]
        %v4713 = vld [vmem:[%s22 + $0x70] sm:$0xf]
        %v4714 = vld [vmem:[%s22 + $0x74] sm:$0xf]
        %v4715 = vld [vmem:[%s22 + $0x78] sm:$0xf]
        %v4716 = vld [vmem:[%s22 + $0x7c] sm:$0xf]
        %v4717 = vld [vmem:[%s22 + $0x80] sm:$0xf]
        %v4718 = vld [vmem:[%s22 + $0x84] sm:$0xf]
        %v4719 = vld [vmem:[%s22 + $0x88] sm:$0xf]
        %v4720 = vld [vmem:[%s22 + $0x8c] sm:$0xf]
        %v4721 = vld [vmem:[%s22 + $0x90] sm:$0xf]
        %v4722 = vld [vmem:[%s22 + $0x94] sm:$0xf]
        %v4723 = vld [vmem:[%s22 + $0x98] sm:$0xf]
        %v4724 = vld [vmem:[%s22 + $0x9c] sm:$0xf]
        %v4725 = vld [vmem:[%s22 + $0xa0] sm:$0xf]
        %v4726 = vld [vmem:[%s22 + $0xa4] sm:$0xf]
        %v4727 = vld [vmem:[%s22 + $0xa8] sm:$0xf]
        %v4728 = vld [vmem:[%s22 + $0xac] sm:$0xf]
        %v4729 = vld [vmem:[%s22 + $0xb0] sm:$0xf]
        %v4730 = vld [vmem:[%s22 + $0xb4] sm:$0xf]
        %v4731 = vld [vmem:[%s22 + $0xb8] sm:$0xf]
        %v4732 = vld [vmem:[%s22 + $0xbc] sm:$0xf]
        %v4733 = vld [vmem:[%s22 + $0xc0] sm:$0xf]
        %v4734 = vld [vmem:[%s22 + $0xc4] sm:$0xf]
        %v4735 = vld [vmem:[%s22 + $0xc8] sm:$0xf]
        %v4736 = vld [vmem:[%s22 + $0xcc] sm:$0xf]
        %v4737 = vld [vmem:[%s22 + $0xd0] sm:$0xf]
        %v4738 = vld [vmem:[%s22 + $0xd4] sm:$0xf]
        %v4739 = vld [vmem:[%s22 + $0xd8] sm:$0xf]
        %v4740 = vld [vmem:[%s22 + $0xdc] sm:$0xf]
        %v4741 = vld [vmem:[%s22 + $0xe0] sm:$0xf]
        %v4742 = vld [vmem:[%s22 + $0xe4] sm:$0xf]
        %v4743 = vld [vmem:[%s22 + $0xe8] sm:$0xf]
        %v4744 = vld [vmem:[%s22 + $0xec] sm:$0xf]
        %v4745 = vld [vmem:[%s22 + $0xf0] sm:$0xf]
        %v4746 = vld [vmem:[%s22 + $0xf4] sm:$0xf]
        %v4747 = vld [vmem:[%s22 + $0xf8] sm:$0xf]
        %v4748 = vld [vmem:[%s22 + $0xfc] sm:$0xf]
        %v4813 = vunpack.c.l.b16 %v4685
        %v4814 = vunpack.c.l.b16 %v4686
        %v4815 = vunpack.c.l.b16 %v4687
        %v4816 = vunpack.c.l.b16 %v4688
        %v4817 = vunpack.c.l.b16 %v4689
        %v4818 = vunpack.c.l.b16 %v4690
        %v4819 = vunpack.c.l.b16 %v4691
        %v4820 = vunpack.c.l.b16 %v4692
        %v4821 = vunpack.c.l.b16 %v4693
        %v4822 = vunpack.c.l.b16 %v4694
        %v4823 = vunpack.c.l.b16 %v4695
        %v4824 = vunpack.c.l.b16 %v4696
        %v4825 = vunpack.c.l.b16 %v4697
        %v4826 = vunpack.c.l.b16 %v4698
        %v4827 = vunpack.c.l.b16 %v4699
        %v4828 = vunpack.c.l.b16 %v4700
        %v4829 = vunpack.c.l.b16 %v4701
        %v4830 = vunpack.c.l.b16 %v4702
        %v4831 = vunpack.c.l.b16 %v4703
        %v4832 = vunpack.c.l.b16 %v4704
        %v4833 = vunpack.c.l.b16 %v4705
        %v4834 = vunpack.c.l.b16 %v4706
        %v4835 = vunpack.c.l.b16 %v4707
        %v4836 = vunpack.c.l.b16 %v4708
        %v4837 = vunpack.c.l.b16 %v4709
        %v4838 = vunpack.c.l.b16 %v4710
        %v4839 = vunpack.c.l.b16 %v4711
        %v4840 = vunpack.c.l.b16 %v4712
        %v4841 = vunpack.c.l.b16 %v4713
        %v4842 = vunpack.c.l.b16 %v4714
        %v4843 = vunpack.c.l.b16 %v4715
        %v4844 = vunpack.c.l.b16 %v4716
        %v4845 = vunpack.c.l.b16 %v4717
        %v4846 = vunpack.c.l.b16 %v4718
        %v4847 = vunpack.c.l.b16 %v4719
        %v4848 = vunpack.c.l.b16 %v4720
        %v4849 = vunpack.c.l.b16 %v4721
        %v4850 = vunpack.c.l.b16 %v4722
        %v4851 = vunpack.c.l.b16 %v4723
        %v4852 = vunpack.c.l.b16 %v4724
        %v4853 = vunpack.c.l.b16 %v4725
        %v4854 = vunpack.c.l.b16 %v4726
        %v4855 = vunpack.c.l.b16 %v4727
        %v4856 = vunpack.c.l.b16 %v4728
        %v4857 = vunpack.c.l.b16 %v4729
        %v4858 = vunpack.c.l.b16 %v4730
        %v4859 = vunpack.c.l.b16 %v4731
        %v4860 = vunpack.c.l.b16 %v4732
        %v4861 = vunpack.c.l.b16 %v4733
        %v4862 = vunpack.c.l.b16 %v4734
        %v4863 = vunpack.c.l.b16 %v4735
        %v4864 = vunpack.c.l.b16 %v4736
        %v4865 = vunpack.c.l.b16 %v4737
        %v4866 = vunpack.c.l.b16 %v4738
        %v4867 = vunpack.c.l.b16 %v4739
        %v4868 = vunpack.c.l.b16 %v4740
        %v4869 = vunpack.c.l.b16 %v4741
        %v4870 = vunpack.c.l.b16 %v4742
        %v4871 = vunpack.c.l.b16 %v4743
        %v4872 = vunpack.c.l.b16 %v4744
        %v4873 = vunpack.c.l.b16 %v4745
        %v4874 = vunpack.c.l.b16 %v4746
        %v4875 = vunpack.c.l.b16 %v4747
        %v4876 = vunpack.c.l.b16 %v4748
        %v4877 = vpack.c.b16 %v4814, %v4813
        %v4878 = vpack.c.b16 %v4816, %v4815
        %v4879 = vpack.c.b16 %v4818, %v4817
        %v4880 = vpack.c.b16 %v4820, %v4819
        %v4881 = vpack.c.b16 %v4822, %v4821
        %v4882 = vpack.c.b16 %v4824, %v4823
        %v4883 = vpack.c.b16 %v4826, %v4825
        %v4884 = vpack.c.b16 %v4828, %v4827
        %v4885 = vpack.c.b16 %v4830, %v4829
        %v4886 = vpack.c.b16 %v4832, %v4831
        %v4887 = vpack.c.b16 %v4834, %v4833
        %v4888 = vpack.c.b16 %v4836, %v4835
        %v4889 = vpack.c.b16 %v4838, %v4837
        %v4890 = vpack.c.b16 %v4840, %v4839
        %v4891 = vpack.c.b16 %v4842, %v4841
        %v4892 = vpack.c.b16 %v4844, %v4843
        %v4893 = vpack.c.b16 %v4846, %v4845
        %v4894 = vpack.c.b16 %v4848, %v4847
        %v4895 = vpack.c.b16 %v4850, %v4849
        %v4896 = vpack.c.b16 %v4852, %v4851
        %v4897 = vpack.c.b16 %v4854, %v4853
        %v4898 = vpack.c.b16 %v4856, %v4855
        %v4899 = vpack.c.b16 %v4858, %v4857
        %v4900 = vpack.c.b16 %v4860, %v4859
        %v4901 = vpack.c.b16 %v4862, %v4861
        %v4902 = vpack.c.b16 %v4864, %v4863
        %v4903 = vpack.c.b16 %v4866, %v4865
        %v4904 = vpack.c.b16 %v4868, %v4867
        %v4905 = vpack.c.b16 %v4870, %v4869
        %v4906 = vpack.c.b16 %v4872, %v4871
        %v4907 = vpack.c.b16 %v4874, %v4873
        %v4908 = vpack.c.b16 %v4876, %v4875
        %4941 = vmatpush.bf16.msra.mxu0 %v4884
        %4942 = vmatpush.bf16.msra.mxu0 %v4883
        %4943 = vmatpush.bf16.msra.mxu0 %v4882
        %4944 = vmatpush.bf16.msra.mxu0 %v4881
        %4945 = vmatpush.bf16.msra.mxu0 %v4880
        %4946 = vmatpush.bf16.msra.mxu0 %v4879
        %4947 = vmatpush.bf16.msra.mxu0 %v4878
        %4948 = vmatpush.bf16.msra.mxu0 %v4877
        %4949 = vmatmul.bf16.gmra.mxu0 %v4483
        %v4950 = vpop.f32.mrf.mxu0
        %v4951 = vadd.f32 %v4519, %v4950
        %v4952 = vpop.f32.mrf.mxu0
        %v4953 = vadd.f32 %v4519, %v4952
        %4954 = vdwg.mxu0
        %4955 = vmatpush.bf16.msra.mxu0 %v4892
        %4956 = vmatpush.bf16.msra.mxu0 %v4891
        %4957 = vmatpush.bf16.msra.mxu0 %v4890
        %4958 = vmatpush.bf16.msra.mxu0 %v4889
        %4959 = vmatpush.bf16.msra.mxu0 %v4888
        %4960 = vmatpush.bf16.msra.mxu0 %v4887
        %4961 = vmatpush.bf16.msra.mxu0 %v4886
        %4962 = vmatpush.bf16.msra.mxu0 %v4885
        %4963 = vmatmul.bf16.gmra.mxu0 %v4484
        %v4964 = vpop.f32.mrf.mxu0
        %v4965 = vadd.f32 %v4951, %v4964
        %v4966 = vpop.f32.mrf.mxu0
        %v4967 = vadd.f32 %v4953, %v4966
        %4968 = vdwg.mxu0
        %4969 = vmatpush.bf16.msra.mxu0 %v4900
        %4970 = vmatpush.bf16.msra.mxu0 %v4899
        %4971 = vmatpush.bf16.msra.mxu0 %v4898
        %4972 = vmatpush.bf16.msra.mxu0 %v4897
        %4973 = vmatpush.bf16.msra.mxu0 %v4896
        %4974 = vmatpush.bf16.msra.mxu0 %v4895
        %4975 = vmatpush.bf16.msra.mxu0 %v4894
        %4976 = vmatpush.bf16.msra.mxu0 %v4893
        %4977 = vmatmul.bf16.gmra.mxu0 %v4683
        %v4978 = vpop.f32.mrf.mxu0
        %v4979 = vadd.f32 %v4965, %v4978
        %v4980 = vpop.f32.mrf.mxu0
        %v4981 = vadd.f32 %v4967, %v4980
        %4982 = vdwg.mxu0
        %4983 = vmatpush.bf16.msra.mxu0 %v4908
        %4984 = vmatpush.bf16.msra.mxu0 %v4907
        %4985 = vmatpush.bf16.msra.mxu0 %v4906
        %4986 = vmatpush.bf16.msra.mxu0 %v4905
        %4987 = vmatpush.bf16.msra.mxu0 %v4904
        %4988 = vmatpush.bf16.msra.mxu0 %v4903
        %4989 = vmatpush.bf16.msra.mxu0 %v4902
        %4990 = vmatpush.bf16.msra.mxu0 %v4901
        %4991 = vmatmul.bf16.gmra.mxu0 %v4684
        %v4992 = vpop.f32.mrf.mxu0
        %v4993 = vadd.f32 %v4979, %v4992
        %v4994 = vpop.f32.mrf.mxu0
        %v4995 = vadd.f32 %v4981, %v4994
        %4996 = vdwg.mxu0
        %v4997 = vxor.u32 %v4993, 2147483648
        %v4998 = vxor.u32 %v4995, 2147483648
        %v4999 = vmul.f32 %v4997, 1.442695
        %v5000 = vpow.pop %v4999
        %v5001 = vmul.f32 %v4998, 1.442695
        %v5002 = vpow.pop %v5001
        %v5003 = vadd.f32 %v5000, 1.0
        %v5004 = vadd.f32 %v5002, 1.0
        %v5005 = vrcp.pop %v5003
        %v5006 = vmul.f32 %v5003, %v5005
        %v5007 = vsub.f32 1.0, %v5006
        %v5008 = vmul.f32 %v5005, %v5007
        %v5009 = vadd.f32 %v5005, %v5008
        %vm5010 = vweird.f32 %v5003
        %vm5011 = vweird.f32 %v5005
        %vm5012 = vmor %vm5010, %vm5011
        %v5013 = vsel %vm5012, %v5005, %v5009
        %v5014 = vand.u32 2147483647, %v5003
        %vm5015 = vcmp.eq.f32.partialorder %v5014, 8.507059e+37
        %v5016 = vand.u32 %v5003, 2147483648
        %v5017 = vor.u32 1.1754944e-38, %v5016
        %v5018 = vsel %vm5015, %v5017, %v5013
        %v5019 = vmul.f32 1.0, %v5018
        %v5020 = vrcp.pop %v5004
        %v5021 = vmul.f32 %v5004, %v5020
        %v5022 = vsub.f32 1.0, %v5021
        %v5023 = vmul.f32 %v5020, %v5022
        %v5024 = vadd.f32 %v5020, %v5023
        %vm5025 = vweird.f32 %v5004
        %vm5026 = vweird.f32 %v5020
        %vm5027 = vmor %vm5025, %vm5026
        %v5028 = vsel %vm5027, %v5020, %v5024
        %v5029 = vand.u32 2147483647, %v5004
        %vm5030 = vcmp.eq.f32.partialorder %v5029, 8.507059e+37
        %v5031 = vand.u32 %v5004, 2147483648
        %v5032 = vor.u32 1.1754944e-38, %v5031
        %v5033 = vsel %vm5030, %v5032, %v5028
        %v5034 = vmul.f32 1.0, %v5033
        %5035 = vmatpush.bf16.msra.mxu0 %v4592
        %5036 = vmatpush.bf16.msra.mxu0 %v4591
        %5037 = vmatpush.bf16.msra.mxu0 %v4590
        %5038 = vmatpush.bf16.msra.mxu0 %v4589
        %5039 = vmatpush.bf16.msra.mxu0 %v4588
        %5040 = vmatpush.bf16.msra.mxu0 %v4587
        %5041 = vmatpush.bf16.msra.mxu0 %v4586
        %5042 = vmatpush.bf16.msra.mxu0 %v4585
        %5043 = vmatmul.bf16.gmra.mxu0 %v4683
        %v5044 = vpop.f32.mrf.mxu0
        %v5045 = vadd.f32 %v4519, %v5044
        %v5046 = vpop.f32.mrf.mxu0
        %v5047 = vadd.f32 %v4519, %v5046
        %5048 = vdwg.mxu0
        %5049 = vmatpush.bf16.msra.mxu0 %v4600
        %5050 = vmatpush.bf16.msra.mxu0 %v4599
        %5051 = vmatpush.bf16.msra.mxu0 %v4598
        %5052 = vmatpush.bf16.msra.mxu0 %v4597
        %5053 = vmatpush.bf16.msra.mxu0 %v4596
        %5054 = vmatpush.bf16.msra.mxu0 %v4595
        %5055 = vmatpush.bf16.msra.mxu0 %v4594
        %5056 = vmatpush.bf16.msra.mxu0 %v4593
        %5057 = vmatmul.bf16.gmra.mxu0 %v4684
        %v5058 = vpop.f32.mrf.mxu0
        %v5059 = vadd.f32 %v5045, %v5058
        %v5060 = vpop.f32.mrf.mxu0
        %v5061 = vadd.f32 %v5047, %v5060
        %5062 = vdwg.mxu0
        %v5063 = vxor.u32 %v5059, 2147483648
        %v5064 = vxor.u32 %v5061, 2147483648
        %v5065 = vmul.f32 %v5063, 1.442695
        %v5066 = vpow.pop %v5065
        %v5067 = vmul.f32 %v5064, 1.442695
        %v5068 = vpow.pop %v5067
        %v5069 = vadd.f32 %v5066, 1.0
        %v5070 = vadd.f32 %v5068, 1.0
        %v5071 = vrcp.pop %v5069
        %v5072 = vmul.f32 %v5069, %v5071
        %v5073 = vsub.f32 1.0, %v5072
        %v5074 = vmul.f32 %v5071, %v5073
        %v5075 = vadd.f32 %v5071, %v5074
        %vm5076 = vweird.f32 %v5069
        %vm5077 = vweird.f32 %v5071
        %vm5078 = vmor %vm5076, %vm5077
        %v5079 = vsel %vm5078, %v5071, %v5075
        %v5080 = vand.u32 2147483647, %v5069
        %vm5081 = vcmp.eq.f32.partialorder %v5080, 8.507059e+37
        %v5082 = vand.u32 %v5069, 2147483648
        %v5083 = vor.u32 1.1754944e-38, %v5082
        %v5084 = vsel %vm5081, %v5083, %v5079
        %v5085 = vmul.f32 1.0, %v5084
        %v5086 = vrcp.pop %v5070
        %v5087 = vmul.f32 %v5070, %v5086
        %v5088 = vsub.f32 1.0, %v5087
        %v5089 = vmul.f32 %v5086, %v5088
        %v5090 = vadd.f32 %v5086, %v5089
        %vm5091 = vweird.f32 %v5070
        %vm5092 = vweird.f32 %v5086
        %vm5093 = vmor %vm5091, %vm5092
        %v5094 = vsel %vm5093, %v5086, %v5090
        %v5095 = vand.u32 2147483647, %v5070
        %vm5096 = vcmp.eq.f32.partialorder %v5095, 8.507059e+37
        %v5097 = vand.u32 %v5070, 2147483648
        %v5098 = vor.u32 1.1754944e-38, %v5097
        %v5099 = vsel %vm5096, %v5098, %v5094
        %v5100 = vmul.f32 1.0, %v5099
        %v5101 = vpack.c.bf16 %v4481, %v4473
        %v5102 = vpack.c.bf16 %v4482, %v4476
        %5103 = vmatpush.bf16.msra.mxu0 %v4884
        %5104 = vmatpush.bf16.msra.mxu0 %v4883
        %5105 = vmatpush.bf16.msra.mxu0 %v4882
        %5106 = vmatpush.bf16.msra.mxu0 %v4881
        %5107 = vmatpush.bf16.msra.mxu0 %v4880
        %5108 = vmatpush.bf16.msra.mxu0 %v4879
        %5109 = vmatpush.bf16.msra.mxu0 %v4878
        %5110 = vmatpush.bf16.msra.mxu0 %v4877
        %5111 = vmatmul.bf16.gmra.mxu0 %v4683
        %v5112 = vpop.f32.mrf.mxu0
        %v5113 = vadd.f32 %v4519, %v5112
        %v5114 = vpop.f32.mrf.mxu0
        %v5115 = vadd.f32 %v4519, %v5114
        %5116 = vdwg.mxu0
        %5117 = vmatpush.bf16.msra.mxu0 %v4892
        %5118 = vmatpush.bf16.msra.mxu0 %v4891
        %5119 = vmatpush.bf16.msra.mxu0 %v4890
        %5120 = vmatpush.bf16.msra.mxu0 %v4889
        %5121 = vmatpush.bf16.msra.mxu0 %v4888
        %5122 = vmatpush.bf16.msra.mxu0 %v4887
        %5123 = vmatpush.bf16.msra.mxu0 %v4886
        %5124 = vmatpush.bf16.msra.mxu0 %v4885
        %5125 = vmatmul.bf16.gmra.mxu0 %v4684
        %v5126 = vpop.f32.mrf.mxu0
        %v5127 = vadd.f32 %v5113, %v5126
        %v5128 = vpop.f32.mrf.mxu0
        %v5129 = vadd.f32 %v5115, %v5128
        %5130 = vdwg.mxu0
        %5131 = vmatpush.bf16.msra.mxu0 %v4900
        %5132 = vmatpush.bf16.msra.mxu0 %v4899
        %5133 = vmatpush.bf16.msra.mxu0 %v4898
        %5134 = vmatpush.bf16.msra.mxu0 %v4897
        %5135 = vmatpush.bf16.msra.mxu0 %v4896
        %5136 = vmatpush.bf16.msra.mxu0 %v4895
        %5137 = vmatpush.bf16.msra.mxu0 %v4894
        %5138 = vmatpush.bf16.msra.mxu0 %v4893
        %5139 = vmatmul.bf16.gmra.mxu0 %v5101
        %v5140 = vpop.f32.mrf.mxu0
        %v5141 = vadd.f32 %v5127, %v5140
        %v5142 = vpop.f32.mrf.mxu0
        %v5143 = vadd.f32 %v5129, %v5142
        %5144 = vdwg.mxu0
        %5145 = vmatpush.bf16.msra.mxu0 %v4908
        %5146 = vmatpush.bf16.msra.mxu0 %v4907
        %5147 = vmatpush.bf16.msra.mxu0 %v4906
        %5148 = vmatpush.bf16.msra.mxu0 %v4905
        %5149 = vmatpush.bf16.msra.mxu0 %v4904
        %5150 = vmatpush.bf16.msra.mxu0 %v4903
        %5151 = vmatpush.bf16.msra.mxu0 %v4902
        %5152 = vmatpush.bf16.msra.mxu0 %v4901
        %5153 = vmatmul.bf16.gmra.mxu0 %v5102
        %v5154 = vpop.f32.mrf.mxu0
        %v5155 = vadd.f32 %v5141, %v5154
        %v5156 = vpop.f32.mrf.mxu0
        %v5157 = vadd.f32 %v5143, %v5156
        %5158 = vdwg.mxu0
        %v5159 = vxor.u32 %v5155, 2147483648
        %v5160 = vxor.u32 %v5157, 2147483648
        %v5161 = vmul.f32 %v5159, 1.442695
        %v5162 = vpow.pop %v5161
        %v5163 = vmul.f32 %v5160, 1.442695
        %v5164 = vpow.pop %v5163
        %v5165 = vadd.f32 %v5162, 1.0
        %v5166 = vadd.f32 %v5164, 1.0
        %v5167 = vrcp.pop %v5165
        %v5168 = vmul.f32 %v5165, %v5167
        %v5169 = vsub.f32 1.0, %v5168
        %v5170 = vmul.f32 %v5167, %v5169
        %v5171 = vadd.f32 %v5167, %v5170
        %vm5172 = vweird.f32 %v5165
        %vm5173 = vweird.f32 %v5167
        %vm5174 = vmor %vm5172, %vm5173
        %v5175 = vsel %vm5174, %v5167, %v5171
        %v5176 = vand.u32 2147483647, %v5165
        %vm5177 = vcmp.eq.f32.partialorder %v5176, 8.507059e+37
        %v5178 = vand.u32 %v5165, 2147483648
        %v5179 = vor.u32 1.1754944e-38, %v5178
        %v5180 = vsel %vm5177, %v5179, %v5175
        %v5181 = vmul.f32 1.0, %v5180
        %v5182 = vrcp.pop %v5166
        %v5183 = vmul.f32 %v5166, %v5182
        %v5184 = vsub.f32 1.0, %v5183
        %v5185 = vmul.f32 %v5182, %v5184
        %v5186 = vadd.f32 %v5182, %v5185
        %vm5187 = vweird.f32 %v5166
        %vm5188 = vweird.f32 %v5182
        %vm5189 = vmor %vm5187, %vm5188
        %v5190 = vsel %vm5189, %v5182, %v5186
        %v5191 = vand.u32 2147483647, %v5166
        %vm5192 = vcmp.eq.f32.partialorder %v5191, 8.507059e+37
        %v5193 = vand.u32 %v5166, 2147483648
        %v5194 = vor.u32 1.1754944e-38, %v5193
        %v5195 = vsel %vm5192, %v5194, %v5190
        %v5196 = vmul.f32 1.0, %v5195
        %vm5197 = vcmask 228352
        %5198 = vst.msk [vmem:[%s846] sm:$0xff] %vm5197, %v4667
        %vm5199 = vcmask 226304
        %5200 = vst.msk [vmem:[%s846 + $0x8] sm:$0x3f] %vm5199, %v4682
        %s5201 = scalar_lea.vmem %s846, 16
        %5202 = vst.msk [vmem:[%s5201] sm:$0xff] %vm5197, %v5019
        %5203 = vst.msk [vmem:[%s5201 + $0x8] sm:$0x3f] %vm5199, %v5034
        %s5204 = scalar_lea.vmem %s846, 32
        %5205 = vst.msk [vmem:[%s5204] sm:$0xff] %vm5197, %v5085
        %5206 = vst.msk [vmem:[%s5204 + $0x8] sm:$0x3f] %vm5199, %v5100
        %s5207 = scalar_lea.vmem %s846, 48
        %5208 = vst.msk [vmem:[%s5207] sm:$0xff] %vm5197, %v5181
        %5209 = vst.msk [vmem:[%s5207 + $0x8] sm:$0x3f] %vm5199, %v5196
        %vm5210 = vcmask 58368
        %5211 = vst.msk [vmem:[%s825] sm:$0x3] %vm5210, %v3002
        %5213 = vrot.lane.b32.xlu0 %v3002, 120
        %v5214 = vpop.permute.xlu0 %5213
        %5216 = vst.msk [vmem:[%s832] sm:$0x3] %vm5210, %v5214
        %p5217 = scmp.lt.s32.totalorder %s45, 1
        %s5218 = scalar_select %p5217, %s45, 1
        %s5219 = smul.addr %s5218, 8
        %s5220 = smul.addr %s5219, 8
        %s5221 = scalar_lea.vmem %s24, %s5220
        %s5222 = sand.u32 %s593, 1
        %s5223 = scalar_lea.sflag [#allocation4], %s5222
        %s5224 = sand.u32 %s593, 1
        %s5225 = smul.addr %s5224, 2
        %s5226 = scalar_lea.vmem [#allocation5], %s5225
        %s5227 = sand.u32 %s619, 1
        %s5228 = scalar_lea.sflag [#allocation7], %s5227
        %s5229 = sand.u32 %s619, 1
        %s5230 = smul.addr %s5229, 2
        %s5231 = scalar_lea.vmem [#allocation6], %s5230
        // Predicated region
        $region121: #{vae_cnn_forward.1} parent=115 // pred_check
          %p5232 = pneg %p577
        $region122: #{vae_cnn_forward.1} parent=115 // pred_check_branch
          %5234 = sbr.rel (%p5232) target = $region124
        $region123: #{vae_cnn_forward.1} parent=115 // pred_region
          _
        $region124: #{vae_cnn_forward.1} parent=115 // pred_fallthru
          _
        // Predicated region
        $region125: #{vae_cnn_forward.1} parent=115 // pred_check
          %p5235 = pneg %p603
        $region126: #{vae_cnn_forward.1} parent=115 // pred_check_branch
          %5237 = sbr.rel (%p5235) target = $region128
        $region127: #{vae_cnn_forward.1} parent=115 // pred_region
          %5239 = vsyncadd %s5223, 0
          %s5240 = smul.addr %s45, 2
          %s5241 = scalar_lea.hbm %s25, %s5240
          %s5243 = sshll.u32 %s5226, 4
          %s5244 = int_to_ptr.vmem [resolvable:$true] %s5243
          %s5245 = sshll.u32 %s5241, 4
          %s5246 = int_to_ptr.hbm [resolvable:$true] %s5245
          %5248 = dma.vmem_to_hbm [thread:$0]  %s5244, 32, %s5246, %s5223
        $region128: #{vae_cnn_forward.1} parent=115 // pred_fallthru
          _
        // Predicated region
        $region129: #{vae_cnn_forward.1} parent=115 // pred_check
          %p5249 = pneg %p629
        $region130: #{vae_cnn_forward.1} parent=115 // pred_check_branch
          %5251 = sbr.rel (%p5249) target = $region132
        $region131: #{vae_cnn_forward.1} parent=115 // pred_region
          %5253 = vsyncadd %s5228, 0
          %s5254 = smul.addr %s45, 2
          %s5255 = scalar_lea.hbm %s26, %s5254
          %s5257 = sshll.u32 %s5231, 4
          %s5258 = int_to_ptr.vmem [resolvable:$true] %s5257
          %s5259 = sshll.u32 %s5255, 4
          %s5260 = int_to_ptr.hbm [resolvable:$true] %s5259
          %5262 = dma.vmem_to_hbm [thread:$0]  %s5258, 32, %s5260, %s5228
        $region132: #{vae_cnn_forward.1} parent=115 // pred_fallthru
          _
      $region116: #{vae_cnn_forward.1} parent=5 // pred_fallthru
        _
      %p5263 = scmp.le.s32.totalorder 2, %s40
      // Predicated region
      $region133: #{vae_cnn_forward.1} parent=5 // pred_check
        %p5264 = pneg %p5263
      $region134: #{vae_cnn_forward.1} parent=5 // pred_check_branch
        %5266 = sbr.rel (%p5264) target = $region136
      $region135: #{vae_cnn_forward.1} parent=5 // pred_region
        %s5267 = ssub.s32 %s40, 2
        // Predicated region
        $region137: #{vae_cnn_forward.1} parent=135 // pred_check
          %p5268 = pneg %p583
        $region138: #{vae_cnn_forward.1} parent=135 // pred_check_branch
          %5270 = sbr.rel (%p5268) target = $region140
        $region139: #{vae_cnn_forward.1} parent=135 // pred_region
          %p5271 = scmp.lt.s32.totalorder %s46, 1
          %s5272 = scalar_select %p5271, %s46, 1
          %s5273 = smul.addr %s5272, 8
          %s5274 = smul.addr %s5273, 8
          %s5275 = scalar_lea.vmem %s24, %s5274
        $region140: #{vae_cnn_forward.1} parent=135 // pred_fallthru
          _
        // Predicated region
        $region141: #{vae_cnn_forward.1} parent=135 // pred_check
          %p5276 = pneg %p609
        $region142: #{vae_cnn_forward.1} parent=135 // pred_check_branch
          %5278 = sbr.rel (%p5276) target = $region144
        $region143: #{vae_cnn_forward.1} parent=135 // pred_region
          %s5279 = sand.u32 %s594, 1
          %s5280 = scalar_lea.sflag [#allocation4], %s5279
          %s5281 = sand.u32 %s594, 1
          %s5282 = smul.addr %s5281, 2
          %s5283 = scalar_lea.vmem [#allocation5], %s5282
          %5285 = dma.done %s5280, 32
        $region144: #{vae_cnn_forward.1} parent=135 // pred_fallthru
          _
        // Predicated region
        $region145: #{vae_cnn_forward.1} parent=135 // pred_check
          %p5286 = pneg %p635
        $region146: #{vae_cnn_forward.1} parent=135 // pred_check_branch
          %5288 = sbr.rel (%p5286) target = $region148
        $region147: #{vae_cnn_forward.1} parent=135 // pred_region
          %s5289 = sand.u32 %s620, 1
          %s5290 = scalar_lea.sflag [#allocation7], %s5289
          %s5291 = sand.u32 %s620, 1
          %s5292 = smul.addr %s5291, 2
          %s5293 = scalar_lea.vmem [#allocation6], %s5292
          %5295 = dma.done %s5290, 32
        $region148: #{vae_cnn_forward.1} parent=135 // pred_fallthru
          _
      $region136: #{vae_cnn_forward.1} parent=5 // pred_fallthru
        _
    $region6: #{vae_cnn_forward.1} parent=1 // loop_footer
      %s44 = sadd.s32 1, %s40
    $region7: #{vae_cnn_forward.1} parent=1 // loop_footer_branch
      %39 = sbr.rel target = $region3
    $region8: #{vae_cnn_forward.1} parent=1 // loop_exit
      _
    %5296 = vsyncpa [#allocation3], 1
    %s5297 = scalar_lea.sflag [#allocation3], 1
    %5298 = vsyncpa %s5297, 1
    %5299 = vsyncpa [#allocation4], 1
    %s5300 = scalar_lea.sflag [#allocation4], 1
    %5301 = vsyncpa %s5300, 1
    %5302 = vsyncpa [#allocation7], 1
    %s5303 = scalar_lea.sflag [#allocation7], 1
    %5304 = vsyncpa %s5303, 1

</llo_original>
